<compile_context>
chip_gen: v6e
topology: v6e:2x2x1
jax: 0.10.0
libtpu: 0.0.40
codegen_flags: <defaults>
</compile_context>

<pallas_src>
import jax
import jax.numpy as jnp
from jax.experimental import pallas as pl
from jax.experimental.pallas import tpu as pltpu

VMEM = pltpu.MemorySpace.VMEM
BN_EPS = 1e-5
N_DROPOUTS = 5  # SoftDropout(p=0.5, n=5)


# ----------------------------- Pallas kernels ------------------------------ #

def conv_relu_pool_kernel(a_ref, w_ref, b_ref, o_ref):
    """Fused Conv3x3(stride1,pad1) + bias + ReLU + MaxPool2d(2,2), one image.

    a_ref: (4, N, K)  tap-ordered im2col patches (N = pooled H*W, K = 9*Cin)
    w_ref: (K, Cout)  conv weight flattened in (kh, kw, cin) row order
    b_ref: (1, Cout)
    o_ref: (N, Cout)  pooled output, rows ordered ho*Wo + wo
    """
    def tap(t):
        y = jnp.dot(a_ref[t], w_ref[...], preferred_element_type=jnp.float32)
        return jnp.maximum(y + b_ref[...], 0.0)          # conv + bias + ReLU
    # MaxPool2d(k=2, s=2) == elementwise max over the four pooling taps.
    o_ref[...] = jnp.maximum(jnp.maximum(tap(0), tap(1)),
                             jnp.maximum(tap(2), tap(3)))


def fc_head_kernel(x_ref, wf_ref, bf_ref, wl_ref, bl_ref, o_ref):
    """Fused Linear(3136,128) + BN1d(eval, folded) + ReLU + SoftDropout(eval,
    folded into wl) + Linear(128,10 padded to 128 lanes)."""
    h = jnp.dot(x_ref[...], wf_ref[...], preferred_element_type=jnp.float32)
    h = jnp.maximum(h + bf_ref[...], 0.0)                 # BN folded; ReLU
    o_ref[...] = (jnp.dot(h, wl_ref[...], preferred_element_type=jnp.float32)
                  + bl_ref[...])


# ------------------------------ JAX glue ----------------------------------- #

def _tap_im2col_3x3_pool(x_nhwc):
    """(B, H, W, C) -> (B, 4, Ho*Wo, 9*C) tap-ordered 3x3/pad1 patches.

    A[b, 2*dh+dw, ho*Wo+wo, (kh*3+kw)*C+ci] = xpad[b, 2ho+dh+kh, 2wo+dw+kw, ci]
    so the kernel can fuse the 2x2/stride-2 maxpool as a max over the tap axis.
    """
    B, H, W, C = x_nhwc.shape
    Ho, Wo = H // 2, W // 2
    xp = jnp.pad(x_nhwc, ((0, 0), (1, 1), (1, 1), (0, 0)))
    taps = []
    for dh in (0, 1):
        for dw in (0, 1):
            cols = [xp[:, dh + kh: dh + kh + 2 * Ho: 2,
                       dw + kw: dw + kw + 2 * Wo: 2, :]
                    for kh in range(3) for kw in range(3)]   # each (B,Ho,Wo,C)
            patch = jnp.stack(cols, axis=3)                  # (B,Ho,Wo,9,C)
            taps.append(patch.reshape(B, Ho * Wo, 9 * C))
    return jnp.stack(taps, axis=1)                           # (B,4,Ho*Wo,9*C)


def conv_relu_pool(x_nhwc, w_flat, b_row):
    """One conv3x3+ReLU+maxpool2x2 stage as a single pallas_call (grid over B)."""
    B, H, W, C = x_nhwc.shape
    Ho, Wo = H // 2, W // 2
    n, K = Ho * Wo, 9 * C
    c_out = w_flat.shape[1]
    a = _tap_im2col_3x3_pool(x_nhwc)                         # (B, 4, n, K)
    flops = 2 * B * 4 * n * K * c_out
    bytes_acc = 4 * (a.size + w_flat.size + b_row.size + B * n * c_out)
    out = pl.pallas_call(
        conv_relu_pool_kernel,
        out_shape=jax.ShapeDtypeStruct((B, n, c_out), jnp.float32),
        grid=(B,),
        in_specs=[
            pl.BlockSpec((None, 4, n, K), lambda b: (b, 0, 0, 0)),
            pl.BlockSpec((K, c_out), lambda b: (0, 0)),
            pl.BlockSpec((1, c_out), lambda b: (0, 0)),
        ],
        out_specs=pl.BlockSpec((None, n, c_out), lambda b: (b, 0, 0)),
        compiler_params=pltpu.CompilerParams(
            dimension_semantics=("parallel",)),   # v7x: shard images over 2 TCs
        cost_estimate=pl.CostEstimate(flops=flops, transcendentals=0,
                                      bytes_accessed=bytes_acc),
    )(a, w_flat, b_row)
    return out.reshape(B, Ho, Wo, c_out)                     # NHWC, pooled


def fc_head(flat, params, batch):
    """FC1 + BN(eval, folded) + ReLU + SoftDropout(eval, folded) + FC2."""
    B, D = flat.shape
    # Fold eval-mode BatchNorm1d (running stats) into the FC1 weight/bias:
    #   y_bn = (x@wf + bf - mean) * gamma/sqrt(var+eps) + beta
    inv_std = jax.lax.rsqrt(params["bn_var"] + BN_EPS)       # (1, 128)
    scale = params["bn_gamma"] * inv_std                     # (1, 128)
    wf = params["wf"] * scale                                # (3136, 128)
    bf = (params["bf"] - params["bn_mean"]) * scale + params["bn_beta"]
    # SoftDropout(p, n=5) eval: stack of n identical copies -> sum/numel(stack)
    #   = (n*x)/(n*B*128) = x/(B*128); ReLU commutes with this positive scale,
    # so fold it into the final Linear weight.  Pad 10 -> 128 output lanes for
    # a lane-dense store (sliced back to 10 outside).
    drop_scale = 1.0 / (batch * 128.0)
    pad10 = ((0, 0), (0, 128 - 10))
    wl = jnp.pad(params["wl"] * drop_scale, pad10)           # (128, 128)
    bl = jnp.pad(params["bl"], pad10)                        # (1, 128)
    flops = 2 * B * D * 128 + 2 * B * 128 * 128
    bytes_acc = 4 * (flat.size + wf.size + bf.size + wl.size + bl.size + B * 128)
    vspec = pl.BlockSpec(memory_space=VMEM)
    out = pl.pallas_call(
        fc_head_kernel,
        out_shape=jax.ShapeDtypeStruct((B, 128), jnp.float32),
        in_specs=[vspec] * 5,
        out_specs=vspec,
        cost_estimate=pl.CostEstimate(flops=flops, transcendentals=0,
                                      bytes_accessed=bytes_acc),
    )(flat, wf, bf, wl, bl)
    return out[:, :10]


def init_params(key):
    ks = jax.random.split(key, 12)
    p = {}
    # Conv weights stored as (KH, KW, Cin, Cout) then flattened to (9*Cin, Cout)
    # to match the im2col (kh, kw, cin) patch ordering.
    p["w1"] = (0.3 * jax.random.normal(ks[0], (3, 3, 1, 32))).reshape(9 * 1, 32)
    p["b1"] = 0.1 * jax.random.normal(ks[1], (1, 32))
    p["w2"] = (0.05 * jax.random.normal(ks[2], (3, 3, 32, 64))).reshape(9 * 32, 64)
    p["b2"] = 0.1 * jax.random.normal(ks[3], (1, 64))
    # Linear(64*7*7 -> 128); input rows are CHW-flattened (PyTorch reshape order).
    p["wf"] = 0.02 * jax.random.normal(ks[4], (64 * 7 * 7, 128))
    p["bf"] = 0.1 * jax.random.normal(ks[5], (1, 128))
    # BatchNorm1d(128): affine params + running stats (eval path).
    p["bn_gamma"] = 1.0 + 0.1 * jax.random.normal(ks[6], (1, 128))
    p["bn_beta"] = 0.1 * jax.random.normal(ks[7], (1, 128))
    p["bn_mean"] = 0.1 * jax.random.normal(ks[8], (1, 128))
    p["bn_var"] = 0.5 + jnp.abs(0.5 * jax.random.normal(ks[9], (1, 128)))
    # Linear(128 -> 10)
    p["wl"] = 0.1 * jax.random.normal(ks[10], (128, 10))
    p["bl"] = 0.1 * jax.random.normal(ks[11], (1, 10))
    return {k: v.astype(jnp.float32) for k, v in p.items()}


def mnist_classifier_forward(x_nchw, params):
    B = x_nchw.shape[0]
    x = jnp.transpose(x_nchw, (0, 2, 3, 1))                  # NCHW -> NHWC
    # ConvFeatExtractor (conv+relu+pool fused per stage)
    x = conv_relu_pool(x, params["w1"], params["b1"])        # (B, 14, 14, 32)
    x = conv_relu_pool(x, params["w2"], params["b2"])        # (B,  7,  7, 64)
    # Flatten in (C, H, W) order to match PyTorch's x.reshape(B, -1) on NCHW.
    flat = jnp.transpose(x, (0, 3, 1, 2)).reshape(B, 64 * 7 * 7)
    # FC1 + BN + ClassifierHead, fused.
    return fc_head(flat, params, B)                          # (B, 10)


if __name__ == "__main__":
    key = jax.random.PRNGKey(0)
    k_x, k_p = jax.random.split(key)
    # MNIST-shaped input (the 64*7*7 Linear pins spatial size to 28x28).
    x = jax.random.normal(k_x, (2, 1, 28, 28), dtype=jnp.float32)
    params = init_params(k_p)

    fwd = jax.jit(mnist_classifier_forward)
    out = fwd(x, params)
    out = jax.block_until_ready(out)

    assert out.shape == (2, 10), out.shape
    assert out.dtype == jnp.float32, out.dtype
    assert bool(jnp.all(jnp.isfinite(out))), "non-finite output"
    print("KERNEL_OK")
</pallas_src>

<mosaic_0001>
module attributes {stable_mosaic.version = 11 : i64} {
  func.func @conv_relu_pool_kernel(%arg0: i32, %arg1: memref<1x4x196x9xf32, #tpu.memory_space<vmem>>, %arg2: memref<9x32xf32, #tpu.memory_space<vmem>>, %arg3: memref<1x32xf32, #tpu.memory_space<vmem>>, %arg4: memref<1x196x32xf32, #tpu.memory_space<vmem>>) attributes {dimension_semantics = [#tpu.dimension_semantics<parallel>], iteration_bounds = array<i64: 2>, scalar_prefetch = 0 : i64, scratch_operands = 0 : i64, tpu.core_type = #tpu.core_type<tc>, window_params = [{transform_indices = @transform_0, window_bounds = array<i64: 1, 4, 196, 9>}, {pipeline_mode = #tpu.pipeline_mode<synchronous>, transform_indices = @transform_1, window_bounds = array<i64: 9, 32>}, {pipeline_mode = #tpu.pipeline_mode<synchronous>, transform_indices = @transform_2, window_bounds = array<i64: 1, 32>}, {transform_indices = @transform_3, window_bounds = array<i64: 1, 196, 32>}]} {
    %c0 = arith.constant 0 : index
    %c0_0 = arith.constant 0 : index
    %c0_1 = arith.constant 0 : index
    %c0_2 = arith.constant 0 : index
    %0 = vector.load %arg1[%c0, %c0_0, %c0_1, %c0_2] : memref<1x4x196x9xf32, #tpu.memory_space<vmem>>, vector<1x1x196x9xf32>
    %1 = vector.shape_cast %0 : vector<1x1x196x9xf32> to vector<196x9xf32>
    %c0_3 = arith.constant 0 : index
    %c0_4 = arith.constant 0 : index
    %2 = vector.load %arg2[%c0_3, %c0_4] : memref<9x32xf32, #tpu.memory_space<vmem>>, vector<9x32xf32>
    %cst = arith.constant dense<0.000000e+00> : vector<196x32xf32>
    %3 = tpu.matmul %1, %2, %cst {dimension_numbers = #tpu.dot_dimension_numbers<[1], [0], [0], [1], [0, 0, 1, 1], [], []>} : vector<196x9xf32>, vector<9x32xf32>, vector<196x32xf32> -> vector<196x32xf32>
    %c0_5 = arith.constant 0 : index
    %c0_6 = arith.constant 0 : index
    %4 = vector.load %arg3[%c0_5, %c0_6] : memref<1x32xf32, #tpu.memory_space<vmem>>, vector<1x32xf32>
    %5 = vector.broadcast %4 : vector<1x32xf32> to vector<196x32xf32>
    %6 = arith.addf %3, %5 : vector<196x32xf32>
    %cst_7 = arith.constant 0.000000e+00 : f32
    %7 = vector.broadcast %cst_7 : f32 to vector<196x32xf32>
    %8 = arith.maximumf %6, %7 : vector<196x32xf32>
    %c0_8 = arith.constant 0 : index
    %c1 = arith.constant 1 : index
    %c0_9 = arith.constant 0 : index
    %c0_10 = arith.constant 0 : index
    %9 = vector.load %arg1[%c0_8, %c1, %c0_9, %c0_10] : memref<1x4x196x9xf32, #tpu.memory_space<vmem>>, vector<1x1x196x9xf32>
    %10 = vector.shape_cast %9 : vector<1x1x196x9xf32> to vector<196x9xf32>
    %c0_11 = arith.constant 0 : index
    %c0_12 = arith.constant 0 : index
    %11 = vector.load %arg2[%c0_11, %c0_12] : memref<9x32xf32, #tpu.memory_space<vmem>>, vector<9x32xf32>
    %cst_13 = arith.constant dense<0.000000e+00> : vector<196x32xf32>
    %12 = tpu.matmul %10, %11, %cst_13 {dimension_numbers = #tpu.dot_dimension_numbers<[1], [0], [0], [1], [0, 0, 1, 1], [], []>} : vector<196x9xf32>, vector<9x32xf32>, vector<196x32xf32> -> vector<196x32xf32>
    %c0_14 = arith.constant 0 : index
    %c0_15 = arith.constant 0 : index
    %13 = vector.load %arg3[%c0_14, %c0_15] : memref<1x32xf32, #tpu.memory_space<vmem>>, vector<1x32xf32>
    %14 = vector.broadcast %13 : vector<1x32xf32> to vector<196x32xf32>
    %15 = arith.addf %12, %14 : vector<196x32xf32>
    %cst_16 = arith.constant 0.000000e+00 : f32
    %16 = vector.broadcast %cst_16 : f32 to vector<196x32xf32>
    %17 = arith.maximumf %15, %16 : vector<196x32xf32>
    %18 = arith.maximumf %8, %17 : vector<196x32xf32>
    %c0_17 = arith.constant 0 : index
    %c2 = arith.constant 2 : index
    %c0_18 = arith.constant 0 : index
    %c0_19 = arith.constant 0 : index
    %19 = vector.load %arg1[%c0_17, %c2, %c0_18, %c0_19] : memref<1x4x196x9xf32, #tpu.memory_space<vmem>>, vector<1x1x196x9xf32>
    %20 = vector.shape_cast %19 : vector<1x1x196x9xf32> to vector<196x9xf32>
    %c0_20 = arith.constant 0 : index
    %c0_21 = arith.constant 0 : index
    %21 = vector.load %arg2[%c0_20, %c0_21] : memref<9x32xf32, #tpu.memory_space<vmem>>, vector<9x32xf32>
    %cst_22 = arith.constant dense<0.000000e+00> : vector<196x32xf32>
    %22 = tpu.matmul %20, %21, %cst_22 {dimension_numbers = #tpu.dot_dimension_numbers<[1], [0], [0], [1], [0, 0, 1, 1], [], []>} : vector<196x9xf32>, vector<9x32xf32>, vector<196x32xf32> -> vector<196x32xf32>
    %c0_23 = arith.constant 0 : index
    %c0_24 = arith.constant 0 : index
    %23 = vector.load %arg3[%c0_23, %c0_24] : memref<1x32xf32, #tpu.memory_space<vmem>>, vector<1x32xf32>
    %24 = vector.broadcast %23 : vector<1x32xf32> to vector<196x32xf32>
    %25 = arith.addf %22, %24 : vector<196x32xf32>
    %cst_25 = arith.constant 0.000000e+00 : f32
    %26 = vector.broadcast %cst_25 : f32 to vector<196x32xf32>
    %27 = arith.maximumf %25, %26 : vector<196x32xf32>
    %c0_26 = arith.constant 0 : index
    %c3 = arith.constant 3 : index
    %c0_27 = arith.constant 0 : index
    %c0_28 = arith.constant 0 : index
    %28 = vector.load %arg1[%c0_26, %c3, %c0_27, %c0_28] : memref<1x4x196x9xf32, #tpu.memory_space<vmem>>, vector<1x1x196x9xf32>
    %29 = vector.shape_cast %28 : vector<1x1x196x9xf32> to vector<196x9xf32>
    %c0_29 = arith.constant 0 : index
    %c0_30 = arith.constant 0 : index
    %30 = vector.load %arg2[%c0_29, %c0_30] : memref<9x32xf32, #tpu.memory_space<vmem>>, vector<9x32xf32>
    %cst_31 = arith.constant dense<0.000000e+00> : vector<196x32xf32>
    %31 = tpu.matmul %29, %30, %cst_31 {dimension_numbers = #tpu.dot_dimension_numbers<[1], [0], [0], [1], [0, 0, 1, 1], [], []>} : vector<196x9xf32>, vector<9x32xf32>, vector<196x32xf32> -> vector<196x32xf32>
    %c0_32 = arith.constant 0 : index
    %c0_33 = arith.constant 0 : index
    %32 = vector.load %arg3[%c0_32, %c0_33] : memref<1x32xf32, #tpu.memory_space<vmem>>, vector<1x32xf32>
    %33 = vector.broadcast %32 : vector<1x32xf32> to vector<196x32xf32>
    %34 = arith.addf %31, %33 : vector<196x32xf32>
    %cst_34 = arith.constant 0.000000e+00 : f32
    %35 = vector.broadcast %cst_34 : f32 to vector<196x32xf32>
    %36 = arith.maximumf %34, %35 : vector<196x32xf32>
    %37 = arith.maximumf %27, %36 : vector<196x32xf32>
    %38 = arith.maximumf %18, %37 : vector<196x32xf32>
    %c0_35 = arith.constant 0 : index
    %c0_36 = arith.constant 0 : index
    %c0_37 = arith.constant 0 : index
    %39 = vector.load %arg4[%c0_35, %c0_36, %c0_37] : memref<1x196x32xf32, #tpu.memory_space<vmem>>, vector<1x196x32xf32>
    %40 = vector.shape_cast %39 : vector<1x196x32xf32> to vector<196x32xf32>
    %41 = vector.shape_cast %38 : vector<196x32xf32> to vector<1x196x32xf32>
    tpu.vector_store %arg4[%c0_35, %c0_36, %c0_37], %41 {strides = array<i32>} : memref<1x196x32xf32, #tpu.memory_space<vmem>>, vector<1x196x32xf32>,
    return
  }
  func.func @transform_0(%arg0: i32) -> (i32, i32, i32, i32) {
    %c0_i32 = arith.constant 0 : i32
    %c0_i32_0 = arith.constant 0 : i32
    %c0_i32_1 = arith.constant 0 : i32
    %c0_i32_2 = arith.constant 0 : i32
    return %arg0, %c0_i32, %c0_i32_0, %c0_i32_1 : i32, i32, i32, i32
  }
  func.func @transform_1(%arg0: i32) -> (i32, i32) {
    %c0_i32 = arith.constant 0 : i32
    %c0_i32_0 = arith.constant 0 : i32
    %c0_i32_1 = arith.constant 0 : i32
    return %c0_i32, %c0_i32_0 : i32, i32
  }
  func.func @transform_2(%arg0: i32) -> (i32, i32) {
    %c0_i32 = arith.constant 0 : i32
    %c0_i32_0 = arith.constant 0 : i32
    %c0_i32_1 = arith.constant 0 : i32
    return %c0_i32, %c0_i32_0 : i32, i32
  }
  func.func @transform_3(%arg0: i32) -> (i32, i32, i32) {
    %c0_i32 = arith.constant 0 : i32
    %c0_i32_0 = arith.constant 0 : i32
    %c0_i32_1 = arith.constant 0 : i32
    return %arg0, %c0_i32, %c0_i32_0 : i32, i32, i32
  }
}

module attributes {stable_mosaic.version = 11 : i64} {
  func.func @conv_relu_pool_kernel(%arg0: i32, %arg1: memref<1x4x49x288xf32, #tpu.memory_space<vmem>>, %arg2: memref<288x64xf32, #tpu.memory_space<vmem>>, %arg3: memref<1x64xf32, #tpu.memory_space<vmem>>, %arg4: memref<1x49x64xf32, #tpu.memory_space<vmem>>) attributes {dimension_semantics = [#tpu.dimension_semantics<parallel>], iteration_bounds = array<i64: 2>, scalar_prefetch = 0 : i64, scratch_operands = 0 : i64, tpu.core_type = #tpu.core_type<tc>, window_params = [{transform_indices = @transform_0, window_bounds = array<i64: 1, 4, 49, 288>}, {pipeline_mode = #tpu.pipeline_mode<synchronous>, transform_indices = @transform_1, window_bounds = array<i64: 288, 64>}, {pipeline_mode = #tpu.pipeline_mode<synchronous>, transform_indices = @transform_2, window_bounds = array<i64: 1, 64>}, {transform_indices = @transform_3, window_bounds = array<i64: 1, 49, 64>}]} {
    %c0 = arith.constant 0 : index
    %c0_0 = arith.constant 0 : index
    %c0_1 = arith.constant 0 : index
    %c0_2 = arith.constant 0 : index
    %0 = vector.load %arg1[%c0, %c0_0, %c0_1, %c0_2] : memref<1x4x49x288xf32, #tpu.memory_space<vmem>>, vector<1x1x49x288xf32>
    %1 = vector.shape_cast %0 : vector<1x1x49x288xf32> to vector<49x288xf32>
    %c0_3 = arith.constant 0 : index
    %c0_4 = arith.constant 0 : index
    %2 = vector.load %arg2[%c0_3, %c0_4] : memref<288x64xf32, #tpu.memory_space<vmem>>, vector<288x64xf32>
    %cst = arith.constant dense<0.000000e+00> : vector<49x64xf32>
    %3 = tpu.matmul %1, %2, %cst {dimension_numbers = #tpu.dot_dimension_numbers<[1], [0], [0], [1], [0, 0, 1, 1], [], []>} : vector<49x288xf32>, vector<288x64xf32>, vector<49x64xf32> -> vector<49x64xf32>
    %c0_5 = arith.constant 0 : index
    %c0_6 = arith.constant 0 : index
    %4 = vector.load %arg3[%c0_5, %c0_6] : memref<1x64xf32, #tpu.memory_space<vmem>>, vector<1x64xf32>
    %5 = vector.broadcast %4 : vector<1x64xf32> to vector<49x64xf32>
    %6 = arith.addf %3, %5 : vector<49x64xf32>
    %cst_7 = arith.constant 0.000000e+00 : f32
    %7 = vector.broadcast %cst_7 : f32 to vector<49x64xf32>
    %8 = arith.maximumf %6, %7 : vector<49x64xf32>
    %c0_8 = arith.constant 0 : index
    %c1 = arith.constant 1 : index
    %c0_9 = arith.constant 0 : index
    %c0_10 = arith.constant 0 : index
    %9 = vector.load %arg1[%c0_8, %c1, %c0_9, %c0_10] : memref<1x4x49x288xf32, #tpu.memory_space<vmem>>, vector<1x1x49x288xf32>
    %10 = vector.shape_cast %9 : vector<1x1x49x288xf32> to vector<49x288xf32>
    %c0_11 = arith.constant 0 : index
    %c0_12 = arith.constant 0 : index
    %11 = vector.load %arg2[%c0_11, %c0_12] : memref<288x64xf32, #tpu.memory_space<vmem>>, vector<288x64xf32>
    %cst_13 = arith.constant dense<0.000000e+00> : vector<49x64xf32>
    %12 = tpu.matmul %10, %11, %cst_13 {dimension_numbers = #tpu.dot_dimension_numbers<[1], [0], [0], [1], [0, 0, 1, 1], [], []>} : vector<49x288xf32>, vector<288x64xf32>, vector<49x64xf32> -> vector<49x64xf32>
    %c0_14 = arith.constant 0 : index
    %c0_15 = arith.constant 0 : index
    %13 = vector.load %arg3[%c0_14, %c0_15] : memref<1x64xf32, #tpu.memory_space<vmem>>, vector<1x64xf32>
    %14 = vector.broadcast %13 : vector<1x64xf32> to vector<49x64xf32>
    %15 = arith.addf %12, %14 : vector<49x64xf32>
    %cst_16 = arith.constant 0.000000e+00 : f32
    %16 = vector.broadcast %cst_16 : f32 to vector<49x64xf32>
    %17 = arith.maximumf %15, %16 : vector<49x64xf32>
    %18 = arith.maximumf %8, %17 : vector<49x64xf32>
    %c0_17 = arith.constant 0 : index
    %c2 = arith.constant 2 : index
    %c0_18 = arith.constant 0 : index
    %c0_19 = arith.constant 0 : index
    %19 = vector.load %arg1[%c0_17, %c2, %c0_18, %c0_19] : memref<1x4x49x288xf32, #tpu.memory_space<vmem>>, vector<1x1x49x288xf32>
    %20 = vector.shape_cast %19 : vector<1x1x49x288xf32> to vector<49x288xf32>
    %c0_20 = arith.constant 0 : index
    %c0_21 = arith.constant 0 : index
    %21 = vector.load %arg2[%c0_20, %c0_21] : memref<288x64xf32, #tpu.memory_space<vmem>>, vector<288x64xf32>
    %cst_22 = arith.constant dense<0.000000e+00> : vector<49x64xf32>
    %22 = tpu.matmul %20, %21, %cst_22 {dimension_numbers = #tpu.dot_dimension_numbers<[1], [0], [0], [1], [0, 0, 1, 1], [], []>} : vector<49x288xf32>, vector<288x64xf32>, vector<49x64xf32> -> vector<49x64xf32>
    %c0_23 = arith.constant 0 : index
    %c0_24 = arith.constant 0 : index
    %23 = vector.load %arg3[%c0_23, %c0_24] : memref<1x64xf32, #tpu.memory_space<vmem>>, vector<1x64xf32>
    %24 = vector.broadcast %23 : vector<1x64xf32> to vector<49x64xf32>
    %25 = arith.addf %22, %24 : vector<49x64xf32>
    %cst_25 = arith.constant 0.000000e+00 : f32
    %26 = vector.broadcast %cst_25 : f32 to vector<49x64xf32>
    %27 = arith.maximumf %25, %26 : vector<49x64xf32>
    %c0_26 = arith.constant 0 : index
    %c3 = arith.constant 3 : index
    %c0_27 = arith.constant 0 : index
    %c0_28 = arith.constant 0 : index
    %28 = vector.load %arg1[%c0_26, %c3, %c0_27, %c0_28] : memref<1x4x49x288xf32, #tpu.memory_space<vmem>>, vector<1x1x49x288xf32>
    %29 = vector.shape_cast %28 : vector<1x1x49x288xf32> to vector<49x288xf32>
    %c0_29 = arith.constant 0 : index
    %c0_30 = arith.constant 0 : index
    %30 = vector.load %arg2[%c0_29, %c0_30] : memref<288x64xf32, #tpu.memory_space<vmem>>, vector<288x64xf32>
    %cst_31 = arith.constant dense<0.000000e+00> : vector<49x64xf32>
    %31 = tpu.matmul %29, %30, %cst_31 {dimension_numbers = #tpu.dot_dimension_numbers<[1], [0], [0], [1], [0, 0, 1, 1], [], []>} : vector<49x288xf32>, vector<288x64xf32>, vector<49x64xf32> -> vector<49x64xf32>
    %c0_32 = arith.constant 0 : index
    %c0_33 = arith.constant 0 : index
    %32 = vector.load %arg3[%c0_32, %c0_33] : memref<1x64xf32, #tpu.memory_space<vmem>>, vector<1x64xf32>
    %33 = vector.broadcast %32 : vector<1x64xf32> to vector<49x64xf32>
    %34 = arith.addf %31, %33 : vector<49x64xf32>
    %cst_34 = arith.constant 0.000000e+00 : f32
    %35 = vector.broadcast %cst_34 : f32 to vector<49x64xf32>
    %36 = arith.maximumf %34, %35 : vector<49x64xf32>
    %37 = arith.maximumf %27, %36 : vector<49x64xf32>
    %38 = arith.maximumf %18, %37 : vector<49x64xf32>
    %c0_35 = arith.constant 0 : index
    %c0_36 = arith.constant 0 : index
    %c0_37 = arith.constant 0 : index
    %39 = vector.load %arg4[%c0_35, %c0_36, %c0_37] : memref<1x49x64xf32, #tpu.memory_space<vmem>>, vector<1x49x64xf32>
    %40 = vector.shape_cast %39 : vector<1x49x64xf32> to vector<49x64xf32>
    %41 = vector.shape_cast %38 : vector<49x64xf32> to vector<1x49x64xf32>
    tpu.vector_store %arg4[%c0_35, %c0_36, %c0_37], %41 {strides = array<i32>} : memref<1x49x64xf32, #tpu.memory_space<vmem>>, vector<1x49x64xf32>,
    return
  }
  func.func @transform_0(%arg0: i32) -> (i32, i32, i32, i32) {
    %c0_i32 = arith.constant 0 : i32
    %c0_i32_0 = arith.constant 0 : i32
    %c0_i32_1 = arith.constant 0 : i32
    %c0_i32_2 = arith.constant 0 : i32
    return %arg0, %c0_i32, %c0_i32_0, %c0_i32_1 : i32, i32, i32, i32
  }
  func.func @transform_1(%arg0: i32) -> (i32, i32) {
    %c0_i32 = arith.constant 0 : i32
    %c0_i32_0 = arith.constant 0 : i32
    %c0_i32_1 = arith.constant 0 : i32
    return %c0_i32, %c0_i32_0 : i32, i32
  }
  func.func @transform_2(%arg0: i32) -> (i32, i32) {
    %c0_i32 = arith.constant 0 : i32
    %c0_i32_0 = arith.constant 0 : i32
    %c0_i32_1 = arith.constant 0 : i32
    return %c0_i32, %c0_i32_0 : i32, i32
  }
  func.func @transform_3(%arg0: i32) -> (i32, i32, i32) {
    %c0_i32 = arith.constant 0 : i32
    %c0_i32_0 = arith.constant 0 : i32
    %c0_i32_1 = arith.constant 0 : i32
    return %arg0, %c0_i32, %c0_i32_0 : i32, i32, i32
  }
}

module attributes {stable_mosaic.version = 11 : i64} {
  func.func @fc_head_kernel(%arg0: memref<2x3136xf32, #tpu.memory_space<vmem>>, %arg1: memref<3136x128xf32, #tpu.memory_space<vmem>>, %arg2: memref<1x128xf32, #tpu.memory_space<vmem>>, %arg3: memref<128x128xf32, #tpu.memory_space<vmem>>, %arg4: memref<1x128xf32, #tpu.memory_space<vmem>>, %arg5: memref<2x128xf32, #tpu.memory_space<vmem>>) attributes {dimension_semantics = [], scalar_prefetch = 0 : i64, scratch_operands = 0 : i64, tpu.core_type = #tpu.core_type<tc>} {
    %c0 = arith.constant 0 : index
    %c0_0 = arith.constant 0 : index
    %0 = vector.load %arg0[%c0, %c0_0] : memref<2x3136xf32, #tpu.memory_space<vmem>>, vector<2x3136xf32>
    %c0_1 = arith.constant 0 : index
    %c0_2 = arith.constant 0 : index
    %1 = vector.load %arg1[%c0_1, %c0_2] : memref<3136x128xf32, #tpu.memory_space<vmem>>, vector<3136x128xf32>
    %cst = arith.constant dense<0.000000e+00> : vector<2x128xf32>
    %2 = tpu.matmul %0, %1, %cst {dimension_numbers = #tpu.dot_dimension_numbers<[1], [0], [0], [1], [0, 0, 1, 1], [], []>} : vector<2x3136xf32>, vector<3136x128xf32>, vector<2x128xf32> -> vector<2x128xf32>
    %c0_3 = arith.constant 0 : index
    %c0_4 = arith.constant 0 : index
    %3 = vector.load %arg2[%c0_3, %c0_4] : memref<1x128xf32, #tpu.memory_space<vmem>>, vector<1x128xf32>
    %4 = vector.broadcast %3 : vector<1x128xf32> to vector<2x128xf32>
    %5 = arith.addf %2, %4 : vector<2x128xf32>
    %cst_5 = arith.constant 0.000000e+00 : f32
    %6 = vector.broadcast %cst_5 : f32 to vector<2x128xf32>
    %7 = arith.maximumf %5, %6 : vector<2x128xf32>
    %c0_6 = arith.constant 0 : index
    %c0_7 = arith.constant 0 : index
    %8 = vector.load %arg3[%c0_6, %c0_7] : memref<128x128xf32, #tpu.memory_space<vmem>>, vector<128x128xf32>
    %cst_8 = arith.constant dense<0.000000e+00> : vector<2x128xf32>
    %9 = tpu.matmul %7, %8, %cst_8 {dimension_numbers = #tpu.dot_dimension_numbers<[1], [0], [0], [1], [0, 0, 1, 1], [], []>} : vector<2x128xf32>, vector<128x128xf32>, vector<2x128xf32> -> vector<2x128xf32>
    %c0_9 = arith.constant 0 : index
    %c0_10 = arith.constant 0 : index
    %10 = vector.load %arg4[%c0_9, %c0_10] : memref<1x128xf32, #tpu.memory_space<vmem>>, vector<1x128xf32>
    %11 = vector.broadcast %10 : vector<1x128xf32> to vector<2x128xf32>
    %12 = arith.addf %9, %11 : vector<2x128xf32>
    %c0_11 = arith.constant 0 : index
    %c0_12 = arith.constant 0 : index
    %13 = vector.load %arg5[%c0_11, %c0_12] : memref<2x128xf32, #tpu.memory_space<vmem>>, vector<2x128xf32>
    tpu.vector_store %arg5[%c0_11, %c0_12], %12 {strides = array<i32>} : memref<2x128xf32, #tpu.memory_space<vmem>>, vector<2x128xf32>,
    return
  }
}

</mosaic_0001>

<llo_original>
// kernel: mnist_classifier_forward.3
$region0: #{mnist_classifier_forward.3}
  #allocation0 [shape = 'u32[]', space=smem, size = 0x4, offset = 0x4, fixed_abs, tag = 'smem constant byte address 0x4 - core index']
  #allocation1 [shape = 'u32[144,128]{1,0:T(1,128)}', space=vmem, size = 0x12000, scoped, tag = 'internal scratch']
  %s0 = inlined_call_operand.vmem [shape: f32[2,4,196,9], index: 0, kind: input, shape index: {}]
  %s1 = inlined_call_operand.vmem [shape: f32[9,32], index: 1, kind: input, shape index: {}]
  %s2 = inlined_call_operand.vmem [shape: f32[1,32], index: 2, kind: input, shape index: {}]
  %s3 = inlined_call_operand.vmem [shape: f32[2,196,32], index: 3, kind: output, shape index: {}]
  %s4 = sld [smem:[#allocation0]]
  $region45: #{mnist_classifier_forward.3} parent=0
    _
  %s6 = ssub.s32 1, %s4
  %s7 = scalar_select 0, %s6, %s4
  loop: start=0, step=1, limit=4
  $region2: #{mnist_classifier_forward.3} parent=0 // loop_pre_header
    _
  $region3: #{mnist_classifier_forward.3} parent=0 // loop_header
    %s9 = sphi 0, %s13
    %p10 = scmp.ge.s32.totalorder %s9, 4
    %s19 = sphi 0, %s21
    %s22 = sphi 0, %s19
    %s23 = sphi 0, %s22
    %s39 = sphi 0, %s23
    %s43 = sphi 0, %s43
    %s45 = sphi 0, %s43
    %s46 = sphi 0, %s45
    %s60 = sphi 0, %s46
    %s64 = sphi 0, %s64
    %s66 = sphi 0, %s64
    %s67 = sphi 0, %s66
    %s81 = sphi 0, %s67
    %s87 = sphi 0, %s89
    %s90 = sphi 0, %s87
    %s91 = sphi 0, %s90
    %s107 = sphi 0, %s91
  $region4: #{mnist_classifier_forward.3} parent=0 // loop_header_branch
    %12 = sbr.rel (%p10) target = $region8
  $region5: #{mnist_classifier_forward.3} parent=0 // loop_body
    %s14 = ssub.s32 %s9, 1
    %s15 = ssub.s32 %s9, 2
    %s16 = sadd.s32 %s9, 1
    %s17 = ssub.s32 %s9, %s16
    %p18 = scmp.eq.s32.totalorder %s17, 0
    %s20 = sadd.s32 %s19, 1
    %s21 = scalar_select %p18, %s19, %s20
    %p24 = pneg %p18
    %p25 = scmp.eq.s32.totalorder %s9, 1
    %p26 = por %p24, %p25
    %p27 = scmp.ne.s32.totalorder %s19, %s22
    %p28 = scmp.eq.s32.totalorder %s9, 0
    %p29 = por %p27, %p28
    %p30 = scmp.ne.s32.totalorder %s19, %s22
    %p31 = scmp.eq.s32.totalorder %s14, 1
    %p32 = por %p30, %p31
    %p33 = scmp.ne.s32.totalorder %s22, %s23
    %p34 = scmp.eq.s32.totalorder %s14, 0
    %p35 = por %p33, %p34
    %p36 = scmp.ne.s32.totalorder %s22, %s23
    %p37 = scmp.eq.s32.totalorder %s15, 1
    %p38 = por %p36, %p37
    %p40 = scmp.ne.s32.totalorder %s23, %s39
    %p41 = scmp.eq.s32.totalorder %s15, 0
    %p42 = por %p40, %p41
    %s44 = sadd.s32 %s43, 1
    %p47 = scmp.eq.s32.totalorder %s9, 1
    %p48 = scmp.ne.s32.totalorder %s43, %s45
    %p49 = scmp.eq.s32.totalorder %s9, 0
    %p50 = por %p48, %p49
    %p51 = scmp.ne.s32.totalorder %s43, %s45
    %p52 = scmp.eq.s32.totalorder %s14, 1
    %p53 = por %p51, %p52
    %p54 = scmp.ne.s32.totalorder %s45, %s46
    %p55 = scmp.eq.s32.totalorder %s14, 0
    %p56 = por %p54, %p55
    %p57 = scmp.ne.s32.totalorder %s45, %s46
    %p58 = scmp.eq.s32.totalorder %s15, 1
    %p59 = por %p57, %p58
    %p61 = scmp.ne.s32.totalorder %s46, %s60
    %p62 = scmp.eq.s32.totalorder %s15, 0
    %p63 = por %p61, %p62
    %s65 = sadd.s32 %s64, 1
    %p68 = scmp.eq.s32.totalorder %s9, 1
    %p69 = scmp.ne.s32.totalorder %s64, %s66
    %p70 = scmp.eq.s32.totalorder %s9, 0
    %p71 = por %p69, %p70
    %p72 = scmp.ne.s32.totalorder %s64, %s66
    %p73 = scmp.eq.s32.totalorder %s14, 1
    %p74 = por %p72, %p73
    %p75 = scmp.ne.s32.totalorder %s66, %s67
    %p76 = scmp.eq.s32.totalorder %s14, 0
    %p77 = por %p75, %p76
    %p78 = scmp.ne.s32.totalorder %s66, %s67
    %p79 = scmp.eq.s32.totalorder %s15, 1
    %p80 = por %p78, %p79
    %p82 = scmp.ne.s32.totalorder %s67, %s81
    %p83 = scmp.eq.s32.totalorder %s15, 0
    %p84 = por %p82, %p83
    %s85 = ssub.s32 %s9, %s16
    %p86 = scmp.eq.s32.totalorder %s85, 0
    %s88 = sadd.s32 %s87, 1
    %s89 = scalar_select %p86, %s87, %s88
    %p92 = pneg %p86
    %p93 = scmp.eq.s32.totalorder %s9, 1
    %p94 = por %p92, %p93
    %p95 = scmp.ne.s32.totalorder %s87, %s90
    %p96 = scmp.eq.s32.totalorder %s9, 0
    %p97 = por %p95, %p96
    %p98 = scmp.ne.s32.totalorder %s87, %s90
    %p99 = scmp.eq.s32.totalorder %s14, 1
    %p100 = por %p98, %p99
    %p101 = scmp.ne.s32.totalorder %s90, %s91
    %p102 = scmp.eq.s32.totalorder %s14, 0
    %p103 = por %p101, %p102
    %p104 = scmp.ne.s32.totalorder %s90, %s91
    %p105 = scmp.eq.s32.totalorder %s15, 1
    %p106 = por %p104, %p105
    %p108 = scmp.ne.s32.totalorder %s91, %s107
    %p109 = scmp.eq.s32.totalorder %s15, 0
    %p110 = por %p108, %p109
    %p111 = scmp.le.s32.totalorder 1, %s9
    %p112 = scmp.lt.s32.totalorder %s9, 3
    %p113 = pnand %p111, %p112
    %p114 = pneg %p113
    // Predicated region
    $region9: #{mnist_classifier_forward.3} parent=5 // pred_check
      _
    $region10: #{mnist_classifier_forward.3} parent=5 // pred_check_branch
      %116 = sbr.rel (%p113) target = $region12
    $region11: #{mnist_classifier_forward.3} parent=5 // pred_region
      %s117 = ssub.s32 %s9, 1
      // Predicated region
      $region13: #{mnist_classifier_forward.3} parent=11 // pred_check
        %p118 = pneg %p56
      $region14: #{mnist_classifier_forward.3} parent=11 // pred_check_branch
        %120 = sbr.rel (%p118) target = $region16
      $region15: #{mnist_classifier_forward.3} parent=11 // pred_region
        _
      $region16: #{mnist_classifier_forward.3} parent=11 // pred_fallthru
        _
      // Predicated region
      $region17: #{mnist_classifier_forward.3} parent=11 // pred_check
        %p121 = pneg %p77
      $region18: #{mnist_classifier_forward.3} parent=11 // pred_check_branch
        %123 = sbr.rel (%p121) target = $region20
      $region19: #{mnist_classifier_forward.3} parent=11 // pred_region
        _
      $region20: #{mnist_classifier_forward.3} parent=11 // pred_fallthru
        _
    $region12: #{mnist_classifier_forward.3} parent=5 // pred_fallthru
      _
    %p124 = scmp.lt.s32.totalorder %s9, 2
    // Predicated region
    $region21: #{mnist_classifier_forward.3} parent=5 // pred_check
      %p125 = pneg %p124
    $region22: #{mnist_classifier_forward.3} parent=5 // pred_check_branch
      %127 = sbr.rel (%p125) target = $region24
    $region23: #{mnist_classifier_forward.3} parent=5 // pred_region
      // Predicated region
      $region25: #{mnist_classifier_forward.3} parent=23 // pred_check
        %p128 = pneg %p29
      $region26: #{mnist_classifier_forward.3} parent=23 // pred_check_branch
        %130 = sbr.rel (%p128) target = $region28
      $region27: #{mnist_classifier_forward.3} parent=23 // pred_region
        %p131 = scmp.lt.s32.totalorder %s9, 1
        %s132 = scalar_select %p131, %s9, 1
        %s133 = smul.addr %s132, 100
        %s134 = smul.addr %s133, 8
        %s135 = scalar_lea.vmem %s0, %s134
      $region28: #{mnist_classifier_forward.3} parent=23 // pred_fallthru
        _
    $region24: #{mnist_classifier_forward.3} parent=5 // pred_fallthru
      _
    %p136 = scmp.le.s32.totalorder 1, %s9
    %p137 = scmp.lt.s32.totalorder %s9, 3
    %p138 = pnand %p136, %p137
    %p139 = pneg %p138
    // Predicated region
    $region29: #{mnist_classifier_forward.3} parent=5 // pred_check
      _
    $region30: #{mnist_classifier_forward.3} parent=5 // pred_check_branch
      %141 = sbr.rel (%p138) target = $region32
    $region31: #{mnist_classifier_forward.3} parent=5 // pred_region
      %s142 = ssub.s32 %s9, 1
      %p143 = scmp.lt.s32.totalorder %s14, 1
      %s144 = scalar_select %p143, %s14, 1
      %s145 = smul.addr %s144, 100
      %s146 = smul.addr %s145, 8
      %s147 = scalar_lea.vmem %s0, %s146
      %p148 = pneg %p35
      %p149 = pneg %p32
      %p150 = pneg %p56
      %p151 = pneg %p53
      %p152 = pneg %p77
      %p153 = pneg %p74
      %p154 = pneg %p103
      %p155 = pneg %p100
      %p156 = scmp.lt.s32.totalorder %s14, 1
      %s157 = scalar_select %p156, %s14, 1
      %s158 = smul.addr %s157, 25
      %s159 = smul.addr %s158, 8
      %s160 = scalar_lea.vmem %s3, %s159
      %p161 = scmp.lt.s32.totalorder %s14, 1
      %s162 = scalar_select %p161, %s14, 1
      %s163 = smul.addr %s162, 100
      %s164 = smul.addr %s163, 8
      %s165 = scalar_lea.vmem %s0, %s164
      %p166 = scmp.lt.s32.totalorder %s14, 1
      %s167 = scalar_select %p166, %s14, 1
      %s168 = smul.addr %s167, 25
      %s169 = smul.addr %s168, 8
      %s170 = scalar_lea.vmem %s3, %s169
      %v171 = vld [vmem:[%s165] sm:$0xff]
      %v172 = vld [vmem:[%s165 + $0x8] sm:$0xff]
      %v173 = vld [vmem:[%s165 + $0x10] sm:$0xff]
      %v174 = vld [vmem:[%s165 + $0x18] sm:$0xff]
      %v175 = vld [vmem:[%s165 + $0x20] sm:$0xff]
      %v176 = vld [vmem:[%s165 + $0x28] sm:$0xff]
      %v177 = vld [vmem:[%s165 + $0x30] sm:$0xff]
      %v178 = vld [vmem:[%s165 + $0x38] sm:$0xff]
      %v179 = vld [vmem:[%s165 + $0x40] sm:$0xff]
      %v180 = vld [vmem:[%s165 + $0x48] sm:$0xff]
      %v181 = vld [vmem:[%s165 + $0x50] sm:$0xff]
      %v182 = vld [vmem:[%s165 + $0x58] sm:$0xff]
      %v183 = vld [vmem:[%s165 + $0x60] sm:$0xff]
      %v184 = vld [vmem:[%s165 + $0x68] sm:$0xff]
      %v185 = vld [vmem:[%s165 + $0x70] sm:$0xff]
      %v186 = vld [vmem:[%s165 + $0x78] sm:$0xff]
      %v187 = vld [vmem:[%s165 + $0x80] sm:$0xff]
      %v188 = vld [vmem:[%s165 + $0x88] sm:$0xff]
      %v189 = vld [vmem:[%s165 + $0x90] sm:$0xff]
      %v190 = vld [vmem:[%s165 + $0x98] sm:$0xff]
      %v191 = vld [vmem:[%s165 + $0xa0] sm:$0xff]
      %v192 = vld [vmem:[%s165 + $0xa8] sm:$0xff]
      %v193 = vld [vmem:[%s165 + $0xb0] sm:$0xff]
      %v194 = vld [vmem:[%s165 + $0xb8] sm:$0xff]
      %v195 = vld [vmem:[%s165 + $0xc0] sm:$0xf]
      %v196 = vld [vmem:[%s1] sm:$0xff]
      %v197 = vld [vmem:[%s1 + $0x8] sm:$0x1]
      %v198 = vld [vmem:[%s2] sm:$0x1]
      %v200 = vlaneseq
      %v201 = vshrl.u32 %v200, 7
      %v202 = vsub.s32 0, %v201
      %v203 = vrot.slane %v198, %v202
      %vm205 = vcmask 72704
      %v207 = vsel %vm205, %v171, 0
      %v210 = vsel %vm205, %v172, 0
      %v213 = vsel %vm205, %v173, 0
      %v216 = vsel %vm205, %v174, 0
      %v219 = vsel %vm205, %v175, 0
      %v222 = vsel %vm205, %v176, 0
      %v225 = vsel %vm205, %v177, 0
      %v228 = vsel %vm205, %v178, 0
      %v231 = vsel %vm205, %v179, 0
      %v234 = vsel %vm205, %v180, 0
      %v237 = vsel %vm205, %v181, 0
      %v240 = vsel %vm205, %v182, 0
      %v243 = vsel %vm205, %v183, 0
      %v246 = vsel %vm205, %v184, 0
      %v249 = vsel %vm205, %v185, 0
      %v252 = vsel %vm205, %v186, 0
      %v255 = vsel %vm205, %v187, 0
      %v258 = vsel %vm205, %v188, 0
      %v261 = vsel %vm205, %v189, 0
      %v264 = vsel %vm205, %v190, 0
      %v267 = vsel %vm205, %v191, 0
      %v270 = vsel %vm205, %v192, 0
      %v273 = vsel %vm205, %v193, 0
      %v276 = vsel %vm205, %v194, 0
      %v279 = vsel %vm205, %v195, 0
      %vm281 = vcmask 1040384
      %v283 = vsel %vm281, %v197, 0
      %285 = vmatprep.subr.mxu0 0.0
      %286 = vmatpush1.msra.mxu0 0.0
      %287 = vmatprep.subr.mxu0 0.0
      %288 = vmatpush1.msra.mxu0 0.0
      %289 = vmatprep.subr.mxu0 0.0
      %290 = vmatpush1.msra.mxu0 0.0
      %291 = vmatprep.subr.mxu0 0.0
      %292 = vmatpush1.msra.mxu0 0.0
      %293 = vmatprep.subr.mxu0 0.0
      %294 = vmatpush1.msra.mxu0 0.0
      %295 = vmatprep.subr.mxu0 0.0
      %296 = vmatpush1.msra.mxu0 0.0
      %297 = vmatprep.subr.mxu0 0.0
      %298 = vmatpush1.msra.mxu0 0.0
      %299 = vmatprep.subr.mxu0 0.0
      %300 = vmatpush1.msra.mxu0 0.0
      %301 = vmatprep.subr.mxu0 0.0
      %302 = vmatpush1.msra.mxu0 0.0
      %303 = vmatprep.subr.mxu0 0.0
      %304 = vmatpush1.msra.mxu0 0.0
      %305 = vmatprep.subr.mxu0 0.0
      %306 = vmatpush1.msra.mxu0 0.0
      %307 = vmatprep.subr.mxu0 0.0
      %308 = vmatpush1.msra.mxu0 0.0
      %309 = vmatprep.subr.mxu0 0.0
      %310 = vmatpush1.msra.mxu0 0.0
      %311 = vmatprep.subr.mxu0 0.0
      %312 = vmatpush1.msra.mxu0 0.0
      %313 = vmatprep.subr.mxu0 0.0
      %314 = vmatpush1.msra.mxu0 %v283
      %315 = vmatprep.subr.mxu0 0.0
      %316 = vmatpush1.msra.mxu0 %v196
      %317 = vmatprep.subr.mxu0 0.0
      %318 = vmatpush2.msra.mxu0 0.0
      %319 = vmatprep.subr.mxu0 0.0
      %320 = vmatpush2.msra.mxu0 0.0
      %321 = vmatprep.subr.mxu0 0.0
      %322 = vmatpush2.msra.mxu0 0.0
      %323 = vmatprep.subr.mxu0 0.0
      %324 = vmatpush2.msra.mxu0 0.0
      %325 = vmatprep.subr.mxu0 0.0
      %326 = vmatpush2.msra.mxu0 0.0
      %327 = vmatprep.subr.mxu0 0.0
      %328 = vmatpush2.msra.mxu0 0.0
      %329 = vmatprep.subr.mxu0 0.0
      %330 = vmatpush2.msra.mxu0 0.0
      %331 = vmatprep.subr.mxu0 0.0
      %332 = vmatpush2.msra.mxu0 0.0
      %333 = vmatprep.subr.mxu0 0.0
      %334 = vmatpush2.msra.mxu0 0.0
      %335 = vmatprep.subr.mxu0 0.0
      %336 = vmatpush2.msra.mxu0 0.0
      %337 = vmatprep.subr.mxu0 0.0
      %338 = vmatpush2.msra.mxu0 0.0
      %339 = vmatprep.subr.mxu0 0.0
      %340 = vmatpush2.msra.mxu0 0.0
      %341 = vmatprep.subr.mxu0 0.0
      %342 = vmatpush2.msra.mxu0 0.0
      %343 = vmatprep.subr.mxu0 0.0
      %344 = vmatpush2.msra.mxu0 0.0
      %345 = vmatprep.subr.mxu0 0.0
      %346 = vmatpush2.msra.mxu0 0.0
      %347 = vmatprep.subr.mxu0 0.0
      %348 = vmatpush2.msra.mxu0 0.0
      %349 = vmatprep.mubr.f32.mxu0 0.0
      %350 = vmatmul.mubr.f32.gmra.mxu0 %v207
      %v351 = vpop.f32.mrf.mxu0
      %v352 = vadd.f32 %v203, %v351
      %v353 = vpop.f32.mrf.mxu0
      %354 = vmatprep.mubr.f32.mxu0 0.0
      %355 = vmatmul.mubr.f32.gmra.mxu0 %v210
      %v356 = vpop.f32.mrf.mxu0
      %v357 = vadd.f32 %v203, %v356
      %v358 = vpop.f32.mrf.mxu0
      %359 = vmatprep.mubr.f32.mxu0 0.0
      %360 = vmatmul.mubr.f32.gmra.mxu0 %v213
      %v361 = vpop.f32.mrf.mxu0
      %v362 = vadd.f32 %v203, %v361
      %v363 = vpop.f32.mrf.mxu0
      %364 = vmatprep.mubr.f32.mxu0 0.0
      %365 = vmatmul.mubr.f32.gmra.mxu0 %v216
      %v366 = vpop.f32.mrf.mxu0
      %v367 = vadd.f32 %v203, %v366
      %v368 = vpop.f32.mrf.mxu0
      %369 = vmatprep.mubr.f32.mxu0 0.0
      %370 = vmatmul.mubr.f32.gmra.mxu0 %v219
      %v371 = vpop.f32.mrf.mxu0
      %v372 = vadd.f32 %v203, %v371
      %v373 = vpop.f32.mrf.mxu0
      %374 = vmatprep.mubr.f32.mxu0 0.0
      %375 = vmatmul.mubr.f32.gmra.mxu0 %v222
      %v376 = vpop.f32.mrf.mxu0
      %v377 = vadd.f32 %v203, %v376
      %v378 = vpop.f32.mrf.mxu0
      %379 = vmatprep.mubr.f32.mxu0 0.0
      %380 = vmatmul.mubr.f32.gmra.mxu0 %v225
      %v381 = vpop.f32.mrf.mxu0
      %v382 = vadd.f32 %v203, %v381
      %v383 = vpop.f32.mrf.mxu0
      %384 = vmatprep.mubr.f32.mxu0 0.0
      %385 = vmatmul.mubr.f32.gmra.mxu0 %v228
      %v386 = vpop.f32.mrf.mxu0
      %v387 = vadd.f32 %v203, %v386
      %v388 = vpop.f32.mrf.mxu0
      %389 = vmatprep.mubr.f32.mxu0 0.0
      %390 = vmatmul.mubr.f32.gmra.mxu0 %v231
      %v391 = vpop.f32.mrf.mxu0
      %v392 = vadd.f32 %v203, %v391
      %v393 = vpop.f32.mrf.mxu0
      %394 = vmatprep.mubr.f32.mxu0 0.0
      %395 = vmatmul.mubr.f32.gmra.mxu0 %v234
      %v396 = vpop.f32.mrf.mxu0
      %v397 = vadd.f32 %v203, %v396
      %v398 = vpop.f32.mrf.mxu0
      %399 = vmatprep.mubr.f32.mxu0 0.0
      %400 = vmatmul.mubr.f32.gmra.mxu0 %v237
      %v401 = vpop.f32.mrf.mxu0
      %v402 = vadd.f32 %v203, %v401
      %v403 = vpop.f32.mrf.mxu0
      %404 = vmatprep.mubr.f32.mxu0 0.0
      %405 = vmatmul.mubr.f32.gmra.mxu0 %v240
      %v406 = vpop.f32.mrf.mxu0
      %v407 = vadd.f32 %v203, %v406
      %v408 = vpop.f32.mrf.mxu0
      %409 = vmatprep.mubr.f32.mxu0 0.0
      %410 = vmatmul.mubr.f32.gmra.mxu0 %v243
      %v411 = vpop.f32.mrf.mxu0
      %v412 = vadd.f32 %v203, %v411
      %v413 = vpop.f32.mrf.mxu0
      %414 = vmatprep.mubr.f32.mxu0 0.0
      %415 = vmatmul.mubr.f32.gmra.mxu0 %v246
      %v416 = vpop.f32.mrf.mxu0
      %v417 = vadd.f32 %v203, %v416
      %v418 = vpop.f32.mrf.mxu0
      %419 = vmatprep.mubr.f32.mxu0 0.0
      %420 = vmatmul.mubr.f32.gmra.mxu0 %v249
      %v421 = vpop.f32.mrf.mxu0
      %v422 = vadd.f32 %v203, %v421
      %v423 = vpop.f32.mrf.mxu0
      %424 = vmatprep.mubr.f32.mxu0 0.0
      %425 = vmatmul.mubr.f32.gmra.mxu0 %v252
      %v426 = vpop.f32.mrf.mxu0
      %v427 = vadd.f32 %v203, %v426
      %v428 = vpop.f32.mrf.mxu0
      %429 = vmatprep.mubr.f32.mxu0 0.0
      %430 = vmatmul.mubr.f32.gmra.mxu0 %v255
      %v431 = vpop.f32.mrf.mxu0
      %v432 = vadd.f32 %v203, %v431
      %v433 = vpop.f32.mrf.mxu0
      %434 = vmatprep.mubr.f32.mxu0 0.0
      %435 = vmatmul.mubr.f32.gmra.mxu0 %v258
      %v436 = vpop.f32.mrf.mxu0
      %v437 = vadd.f32 %v203, %v436
      %v438 = vpop.f32.mrf.mxu0
      %439 = vmatprep.mubr.f32.mxu0 0.0
      %440 = vmatmul.mubr.f32.gmra.mxu0 %v261
      %v441 = vpop.f32.mrf.mxu0
      %v442 = vadd.f32 %v203, %v441
      %v443 = vpop.f32.mrf.mxu0
      %444 = vmatprep.mubr.f32.mxu0 0.0
      %445 = vmatmul.mubr.f32.gmra.mxu0 %v264
      %v446 = vpop.f32.mrf.mxu0
      %v447 = vadd.f32 %v203, %v446
      %v448 = vpop.f32.mrf.mxu0
      %449 = vmatprep.mubr.f32.mxu0 0.0
      %450 = vmatmul.mubr.f32.gmra.mxu0 %v267
      %v451 = vpop.f32.mrf.mxu0
      %v452 = vadd.f32 %v203, %v451
      %v453 = vpop.f32.mrf.mxu0
      %454 = vmatprep.mubr.f32.mxu0 0.0
      %455 = vmatmul.mubr.f32.gmra.mxu0 %v270
      %v456 = vpop.f32.mrf.mxu0
      %v457 = vadd.f32 %v203, %v456
      %v458 = vpop.f32.mrf.mxu0
      %459 = vmatprep.mubr.f32.mxu0 0.0
      %460 = vmatmul.mubr.f32.gmra.mxu0 %v273
      %v461 = vpop.f32.mrf.mxu0
      %v462 = vadd.f32 %v203, %v461
      %v463 = vpop.f32.mrf.mxu0
      %464 = vmatprep.mubr.f32.mxu0 0.0
      %465 = vmatmul.mubr.f32.gmra.mxu0 %v276
      %v466 = vpop.f32.mrf.mxu0
      %v467 = vadd.f32 %v203, %v466
      %v468 = vpop.f32.mrf.mxu0
      %469 = vmatprep.mubr.f32.mxu0 0.0
      %470 = vmatmul.mubr.f32.gmra.mxu0 %v279
      %v471 = vpop.f32.mrf.mxu0
      %v472 = vadd.f32 %v203, %v471
      %v473 = vpop.f32.mrf.mxu0
      %474 = vdwg.mxu0
      %v475 = vmax.f32 %v352, 0.0
      %v476 = vmax.f32 %v357, 0.0
      %v477 = vmax.f32 %v362, 0.0
      %v478 = vmax.f32 %v367, 0.0
      %v479 = vmax.f32 %v372, 0.0
      %v480 = vmax.f32 %v377, 0.0
      %v481 = vmax.f32 %v382, 0.0
      %v482 = vmax.f32 %v387, 0.0
      %v483 = vmax.f32 %v392, 0.0
      %v484 = vmax.f32 %v397, 0.0
      %v485 = vmax.f32 %v402, 0.0
      %v486 = vmax.f32 %v407, 0.0
      %v487 = vmax.f32 %v412, 0.0
      %v488 = vmax.f32 %v417, 0.0
      %v489 = vmax.f32 %v422, 0.0
      %v490 = vmax.f32 %v427, 0.0
      %v491 = vmax.f32 %v432, 0.0
      %v492 = vmax.f32 %v437, 0.0
      %v493 = vmax.f32 %v442, 0.0
      %v494 = vmax.f32 %v447, 0.0
      %v495 = vmax.f32 %v452, 0.0
      %v496 = vmax.f32 %v457, 0.0
      %v497 = vmax.f32 %v462, 0.0
      %v498 = vmax.f32 %v467, 0.0
      %v499 = vmax.f32 %v472, 0.0
      %s500 = scalar_lea.vmem %s165, 200
      %v501 = vld [vmem:[%s500] sm:$0xff]
      %v502 = vld [vmem:[%s500 + $0x8] sm:$0xff]
      %v503 = vld [vmem:[%s500 + $0x10] sm:$0xff]
      %v504 = vld [vmem:[%s500 + $0x18] sm:$0xff]
      %v505 = vld [vmem:[%s500 + $0x20] sm:$0xff]
      %v506 = vld [vmem:[%s500 + $0x28] sm:$0xff]
      %v507 = vld [vmem:[%s500 + $0x30] sm:$0xff]
      %v508 = vld [vmem:[%s500 + $0x38] sm:$0xff]
      %v509 = vld [vmem:[%s500 + $0x40] sm:$0xff]
      %v510 = vld [vmem:[%s500 + $0x48] sm:$0xff]
      %v511 = vld [vmem:[%s500 + $0x50] sm:$0xff]
      %v512 = vld [vmem:[%s500 + $0x58] sm:$0xff]
      %v513 = vld [vmem:[%s500 + $0x60] sm:$0xff]
      %v514 = vld [vmem:[%s500 + $0x68] sm:$0xff]
      %v515 = vld [vmem:[%s500 + $0x70] sm:$0xff]
      %v516 = vld [vmem:[%s500 + $0x78] sm:$0xff]
      %v517 = vld [vmem:[%s500 + $0x80] sm:$0xff]
      %v518 = vld [vmem:[%s500 + $0x88] sm:$0xff]
      %v519 = vld [vmem:[%s500 + $0x90] sm:$0xff]
      %v520 = vld [vmem:[%s500 + $0x98] sm:$0xff]
      %v521 = vld [vmem:[%s500 + $0xa0] sm:$0xff]
      %v522 = vld [vmem:[%s500 + $0xa8] sm:$0xff]
      %v523 = vld [vmem:[%s500 + $0xb0] sm:$0xff]
      %v524 = vld [vmem:[%s500 + $0xb8] sm:$0xff]
      %v525 = vld [vmem:[%s500 + $0xc0] sm:$0xf]
      %v527 = vsel %vm205, %v501, 0
      %v530 = vsel %vm205, %v502, 0
      %v533 = vsel %vm205, %v503, 0
      %v536 = vsel %vm205, %v504, 0
      %v539 = vsel %vm205, %v505, 0
      %v542 = vsel %vm205, %v506, 0
      %v545 = vsel %vm205, %v507, 0
      %v548 = vsel %vm205, %v508, 0
      %v551 = vsel %vm205, %v509, 0
      %v554 = vsel %vm205, %v510, 0
      %v557 = vsel %vm205, %v511, 0
      %v560 = vsel %vm205, %v512, 0
      %v563 = vsel %vm205, %v513, 0
      %v566 = vsel %vm205, %v514, 0
      %v569 = vsel %vm205, %v515, 0
      %v572 = vsel %vm205, %v516, 0
      %v575 = vsel %vm205, %v517, 0
      %v578 = vsel %vm205, %v518, 0
      %v581 = vsel %vm205, %v519, 0
      %v584 = vsel %vm205, %v520, 0
      %v587 = vsel %vm205, %v521, 0
      %v590 = vsel %vm205, %v522, 0
      %v593 = vsel %vm205, %v523, 0
      %v596 = vsel %vm205, %v524, 0
      %v599 = vsel %vm205, %v525, 0
      %601 = vmatprep.subr.mxu0 0.0
      %602 = vmatpush1.msra.mxu0 0.0
      %603 = vmatprep.subr.mxu0 0.0
      %604 = vmatpush1.msra.mxu0 0.0
      %605 = vmatprep.subr.mxu0 0.0
      %606 = vmatpush1.msra.mxu0 0.0
      %607 = vmatprep.subr.mxu0 0.0
      %608 = vmatpush1.msra.mxu0 0.0
      %609 = vmatprep.subr.mxu0 0.0
      %610 = vmatpush1.msra.mxu0 0.0
      %611 = vmatprep.subr.mxu0 0.0
      %612 = vmatpush1.msra.mxu0 0.0
      %613 = vmatprep.subr.mxu0 0.0
      %614 = vmatpush1.msra.mxu0 0.0
      %615 = vmatprep.subr.mxu0 0.0
      %616 = vmatpush1.msra.mxu0 0.0
      %617 = vmatprep.subr.mxu0 0.0
      %618 = vmatpush1.msra.mxu0 0.0
      %619 = vmatprep.subr.mxu0 0.0
      %620 = vmatpush1.msra.mxu0 0.0
      %621 = vmatprep.subr.mxu0 0.0
      %622 = vmatpush1.msra.mxu0 0.0
      %623 = vmatprep.subr.mxu0 0.0
      %624 = vmatpush1.msra.mxu0 0.0
      %625 = vmatprep.subr.mxu0 0.0
      %626 = vmatpush1.msra.mxu0 0.0
      %627 = vmatprep.subr.mxu0 0.0
      %628 = vmatpush1.msra.mxu0 0.0
      %629 = vmatprep.subr.mxu0 0.0
      %630 = vmatpush1.msra.mxu0 %v283
      %631 = vmatprep.subr.mxu0 0.0
      %632 = vmatpush1.msra.mxu0 %v196
      %633 = vmatprep.subr.mxu0 0.0
      %634 = vmatpush2.msra.mxu0 0.0
      %635 = vmatprep.subr.mxu0 0.0
      %636 = vmatpush2.msra.mxu0 0.0
      %637 = vmatprep.subr.mxu0 0.0
      %638 = vmatpush2.msra.mxu0 0.0
      %639 = vmatprep.subr.mxu0 0.0
      %640 = vmatpush2.msra.mxu0 0.0
      %641 = vmatprep.subr.mxu0 0.0
      %642 = vmatpush2.msra.mxu0 0.0
      %643 = vmatprep.subr.mxu0 0.0
      %644 = vmatpush2.msra.mxu0 0.0
      %645 = vmatprep.subr.mxu0 0.0
      %646 = vmatpush2.msra.mxu0 0.0
      %647 = vmatprep.subr.mxu0 0.0
      %648 = vmatpush2.msra.mxu0 0.0
      %649 = vmatprep.subr.mxu0 0.0
      %650 = vmatpush2.msra.mxu0 0.0
      %651 = vmatprep.subr.mxu0 0.0
      %652 = vmatpush2.msra.mxu0 0.0
      %653 = vmatprep.subr.mxu0 0.0
      %654 = vmatpush2.msra.mxu0 0.0
      %655 = vmatprep.subr.mxu0 0.0
      %656 = vmatpush2.msra.mxu0 0.0
      %657 = vmatprep.subr.mxu0 0.0
      %658 = vmatpush2.msra.mxu0 0.0
      %659 = vmatprep.subr.mxu0 0.0
      %660 = vmatpush2.msra.mxu0 0.0
      %661 = vmatprep.subr.mxu0 0.0
      %662 = vmatpush2.msra.mxu0 0.0
      %663 = vmatprep.subr.mxu0 0.0
      %664 = vmatpush2.msra.mxu0 0.0
      %665 = vmatprep.mubr.f32.mxu0 0.0
      %666 = vmatmul.mubr.f32.gmra.mxu0 %v527
      %v667 = vpop.f32.mrf.mxu0
      %v668 = vadd.f32 %v203, %v667
      %v669 = vpop.f32.mrf.mxu0
      %670 = vmatprep.mubr.f32.mxu0 0.0
      %671 = vmatmul.mubr.f32.gmra.mxu0 %v530
      %v672 = vpop.f32.mrf.mxu0
      %v673 = vadd.f32 %v203, %v672
      %v674 = vpop.f32.mrf.mxu0
      %675 = vmatprep.mubr.f32.mxu0 0.0
      %676 = vmatmul.mubr.f32.gmra.mxu0 %v533
      %v677 = vpop.f32.mrf.mxu0
      %v678 = vadd.f32 %v203, %v677
      %v679 = vpop.f32.mrf.mxu0
      %680 = vmatprep.mubr.f32.mxu0 0.0
      %681 = vmatmul.mubr.f32.gmra.mxu0 %v536
      %v682 = vpop.f32.mrf.mxu0
      %v683 = vadd.f32 %v203, %v682
      %v684 = vpop.f32.mrf.mxu0
      %685 = vmatprep.mubr.f32.mxu0 0.0
      %686 = vmatmul.mubr.f32.gmra.mxu0 %v539
      %v687 = vpop.f32.mrf.mxu0
      %v688 = vadd.f32 %v203, %v687
      %v689 = vpop.f32.mrf.mxu0
      %690 = vmatprep.mubr.f32.mxu0 0.0
      %691 = vmatmul.mubr.f32.gmra.mxu0 %v542
      %v692 = vpop.f32.mrf.mxu0
      %v693 = vadd.f32 %v203, %v692
      %v694 = vpop.f32.mrf.mxu0
      %695 = vmatprep.mubr.f32.mxu0 0.0
      %696 = vmatmul.mubr.f32.gmra.mxu0 %v545
      %v697 = vpop.f32.mrf.mxu0
      %v698 = vadd.f32 %v203, %v697
      %v699 = vpop.f32.mrf.mxu0
      %700 = vmatprep.mubr.f32.mxu0 0.0
      %701 = vmatmul.mubr.f32.gmra.mxu0 %v548
      %v702 = vpop.f32.mrf.mxu0
      %v703 = vadd.f32 %v203, %v702
      %v704 = vpop.f32.mrf.mxu0
      %705 = vmatprep.mubr.f32.mxu0 0.0
      %706 = vmatmul.mubr.f32.gmra.mxu0 %v551
      %v707 = vpop.f32.mrf.mxu0
      %v708 = vadd.f32 %v203, %v707
      %v709 = vpop.f32.mrf.mxu0
      %710 = vmatprep.mubr.f32.mxu0 0.0
      %711 = vmatmul.mubr.f32.gmra.mxu0 %v554
      %v712 = vpop.f32.mrf.mxu0
      %v713 = vadd.f32 %v203, %v712
      %v714 = vpop.f32.mrf.mxu0
      %715 = vmatprep.mubr.f32.mxu0 0.0
      %716 = vmatmul.mubr.f32.gmra.mxu0 %v557
      %v717 = vpop.f32.mrf.mxu0
      %v718 = vadd.f32 %v203, %v717
      %v719 = vpop.f32.mrf.mxu0
      %720 = vmatprep.mubr.f32.mxu0 0.0
      %721 = vmatmul.mubr.f32.gmra.mxu0 %v560
      %v722 = vpop.f32.mrf.mxu0
      %v723 = vadd.f32 %v203, %v722
      %v724 = vpop.f32.mrf.mxu0
      %725 = vmatprep.mubr.f32.mxu0 0.0
      %726 = vmatmul.mubr.f32.gmra.mxu0 %v563
      %v727 = vpop.f32.mrf.mxu0
      %v728 = vadd.f32 %v203, %v727
      %v729 = vpop.f32.mrf.mxu0
      %730 = vmatprep.mubr.f32.mxu0 0.0
      %731 = vmatmul.mubr.f32.gmra.mxu0 %v566
      %v732 = vpop.f32.mrf.mxu0
      %v733 = vadd.f32 %v203, %v732
      %v734 = vpop.f32.mrf.mxu0
      %735 = vmatprep.mubr.f32.mxu0 0.0
      %736 = vmatmul.mubr.f32.gmra.mxu0 %v569
      %v737 = vpop.f32.mrf.mxu0
      %v738 = vadd.f32 %v203, %v737
      %v739 = vpop.f32.mrf.mxu0
      %740 = vmatprep.mubr.f32.mxu0 0.0
      %741 = vmatmul.mubr.f32.gmra.mxu0 %v572
      %v742 = vpop.f32.mrf.mxu0
      %v743 = vadd.f32 %v203, %v742
      %v744 = vpop.f32.mrf.mxu0
      %745 = vmatprep.mubr.f32.mxu0 0.0
      %746 = vmatmul.mubr.f32.gmra.mxu0 %v575
      %v747 = vpop.f32.mrf.mxu0
      %v748 = vadd.f32 %v203, %v747
      %v749 = vpop.f32.mrf.mxu0
      %750 = vmatprep.mubr.f32.mxu0 0.0
      %751 = vmatmul.mubr.f32.gmra.mxu0 %v578
      %v752 = vpop.f32.mrf.mxu0
      %v753 = vadd.f32 %v203, %v752
      %v754 = vpop.f32.mrf.mxu0
      %755 = vmatprep.mubr.f32.mxu0 0.0
      %756 = vmatmul.mubr.f32.gmra.mxu0 %v581
      %v757 = vpop.f32.mrf.mxu0
      %v758 = vadd.f32 %v203, %v757
      %v759 = vpop.f32.mrf.mxu0
      %760 = vmatprep.mubr.f32.mxu0 0.0
      %761 = vmatmul.mubr.f32.gmra.mxu0 %v584
      %v762 = vpop.f32.mrf.mxu0
      %v763 = vadd.f32 %v203, %v762
      %v764 = vpop.f32.mrf.mxu0
      %765 = vmatprep.mubr.f32.mxu0 0.0
      %766 = vmatmul.mubr.f32.gmra.mxu0 %v587
      %v767 = vpop.f32.mrf.mxu0
      %v768 = vadd.f32 %v203, %v767
      %v769 = vpop.f32.mrf.mxu0
      %770 = vmatprep.mubr.f32.mxu0 0.0
      %771 = vmatmul.mubr.f32.gmra.mxu0 %v590
      %v772 = vpop.f32.mrf.mxu0
      %v773 = vadd.f32 %v203, %v772
      %v774 = vpop.f32.mrf.mxu0
      %775 = vmatprep.mubr.f32.mxu0 0.0
      %776 = vmatmul.mubr.f32.gmra.mxu0 %v593
      %v777 = vpop.f32.mrf.mxu0
      %v778 = vadd.f32 %v203, %v777
      %v779 = vpop.f32.mrf.mxu0
      %780 = vmatprep.mubr.f32.mxu0 0.0
      %781 = vmatmul.mubr.f32.gmra.mxu0 %v596
      %v782 = vpop.f32.mrf.mxu0
      %v783 = vadd.f32 %v203, %v782
      %v784 = vpop.f32.mrf.mxu0
      %785 = vmatprep.mubr.f32.mxu0 0.0
      %786 = vmatmul.mubr.f32.gmra.mxu0 %v599
      %v787 = vpop.f32.mrf.mxu0
      %v788 = vadd.f32 %v203, %v787
      %v789 = vpop.f32.mrf.mxu0
      %790 = vdwg.mxu0
      %v791 = vmax.f32 %v668, 0.0
      %v792 = vmax.f32 %v673, 0.0
      %v793 = vmax.f32 %v678, 0.0
      %v794 = vmax.f32 %v683, 0.0
      %v795 = vmax.f32 %v688, 0.0
      %v796 = vmax.f32 %v693, 0.0
      %v797 = vmax.f32 %v698, 0.0
      %v798 = vmax.f32 %v703, 0.0
      %v799 = vmax.f32 %v708, 0.0
      %v800 = vmax.f32 %v713, 0.0
      %v801 = vmax.f32 %v718, 0.0
      %v802 = vmax.f32 %v723, 0.0
      %v803 = vmax.f32 %v728, 0.0
      %v804 = vmax.f32 %v733, 0.0
      %v805 = vmax.f32 %v738, 0.0
      %v806 = vmax.f32 %v743, 0.0
      %v807 = vmax.f32 %v748, 0.0
      %v808 = vmax.f32 %v753, 0.0
      %v809 = vmax.f32 %v758, 0.0
      %v810 = vmax.f32 %v763, 0.0
      %v811 = vmax.f32 %v768, 0.0
      %v812 = vmax.f32 %v773, 0.0
      %v813 = vmax.f32 %v778, 0.0
      %v814 = vmax.f32 %v783, 0.0
      %v815 = vmax.f32 %v788, 0.0
      %v816 = vmax.f32 %v475, %v791
      %v817 = vmax.f32 %v476, %v792
      %v818 = vmax.f32 %v477, %v793
      %v819 = vmax.f32 %v478, %v794
      %v820 = vmax.f32 %v479, %v795
      %v821 = vmax.f32 %v480, %v796
      %v822 = vmax.f32 %v481, %v797
      %v823 = vmax.f32 %v482, %v798
      %v824 = vmax.f32 %v483, %v799
      %v825 = vmax.f32 %v484, %v800
      %v826 = vmax.f32 %v485, %v801
      %v827 = vmax.f32 %v486, %v802
      %v828 = vmax.f32 %v487, %v803
      %v829 = vmax.f32 %v488, %v804
      %v830 = vmax.f32 %v489, %v805
      %v831 = vmax.f32 %v490, %v806
      %v832 = vmax.f32 %v491, %v807
      %v833 = vmax.f32 %v492, %v808
      %v834 = vmax.f32 %v493, %v809
      %v835 = vmax.f32 %v494, %v810
      %v836 = vmax.f32 %v495, %v811
      %v837 = vmax.f32 %v496, %v812
      %v838 = vmax.f32 %v497, %v813
      %v839 = vmax.f32 %v498, %v814
      %v840 = vmax.f32 %v499, %v815
      %s841 = scalar_lea.vmem %s165, 400
      %v842 = vld [vmem:[%s841] sm:$0xff]
      %v843 = vld [vmem:[%s841 + $0x8] sm:$0xff]
      %v844 = vld [vmem:[%s841 + $0x10] sm:$0xff]
      %v845 = vld [vmem:[%s841 + $0x18] sm:$0xff]
      %v846 = vld [vmem:[%s841 + $0x20] sm:$0xff]
      %v847 = vld [vmem:[%s841 + $0x28] sm:$0xff]
      %v848 = vld [vmem:[%s841 + $0x30] sm:$0xff]
      %v849 = vld [vmem:[%s841 + $0x38] sm:$0xff]
      %v850 = vld [vmem:[%s841 + $0x40] sm:$0xff]
      %v851 = vld [vmem:[%s841 + $0x48] sm:$0xff]
      %v852 = vld [vmem:[%s841 + $0x50] sm:$0xff]
      %v853 = vld [vmem:[%s841 + $0x58] sm:$0xff]
      %v854 = vld [vmem:[%s841 + $0x60] sm:$0xff]
      %v855 = vld [vmem:[%s841 + $0x68] sm:$0xff]
      %v856 = vld [vmem:[%s841 + $0x70] sm:$0xff]
      %v857 = vld [vmem:[%s841 + $0x78] sm:$0xff]
      %v858 = vld [vmem:[%s841 + $0x80] sm:$0xff]
      %v859 = vld [vmem:[%s841 + $0x88] sm:$0xff]
      %v860 = vld [vmem:[%s841 + $0x90] sm:$0xff]
      %v861 = vld [vmem:[%s841 + $0x98] sm:$0xff]
      %v862 = vld [vmem:[%s841 + $0xa0] sm:$0xff]
      %v863 = vld [vmem:[%s841 + $0xa8] sm:$0xff]
      %v864 = vld [vmem:[%s841 + $0xb0] sm:$0xff]
      %v865 = vld [vmem:[%s841 + $0xb8] sm:$0xff]
      %v866 = vld [vmem:[%s841 + $0xc0] sm:$0xf]
      %v868 = vsel %vm205, %v842, 0
      %v871 = vsel %vm205, %v843, 0
      %v874 = vsel %vm205, %v844, 0
      %v877 = vsel %vm205, %v845, 0
      %v880 = vsel %vm205, %v846, 0
      %v883 = vsel %vm205, %v847, 0
      %v886 = vsel %vm205, %v848, 0
      %v889 = vsel %vm205, %v849, 0
      %v892 = vsel %vm205, %v850, 0
      %v895 = vsel %vm205, %v851, 0
      %v898 = vsel %vm205, %v852, 0
      %v901 = vsel %vm205, %v853, 0
      %v904 = vsel %vm205, %v854, 0
      %v907 = vsel %vm205, %v855, 0
      %v910 = vsel %vm205, %v856, 0
      %v913 = vsel %vm205, %v857, 0
      %v916 = vsel %vm205, %v858, 0
      %v919 = vsel %vm205, %v859, 0
      %v922 = vsel %vm205, %v860, 0
      %v925 = vsel %vm205, %v861, 0
      %v928 = vsel %vm205, %v862, 0
      %v931 = vsel %vm205, %v863, 0
      %v934 = vsel %vm205, %v864, 0
      %v937 = vsel %vm205, %v865, 0
      %v940 = vsel %vm205, %v866, 0
      %942 = vmatprep.subr.mxu0 0.0
      %943 = vmatpush1.msra.mxu0 0.0
      %944 = vmatprep.subr.mxu0 0.0
      %945 = vmatpush1.msra.mxu0 0.0
      %946 = vmatprep.subr.mxu0 0.0
      %947 = vmatpush1.msra.mxu0 0.0
      %948 = vmatprep.subr.mxu0 0.0
      %949 = vmatpush1.msra.mxu0 0.0
      %950 = vmatprep.subr.mxu0 0.0
      %951 = vmatpush1.msra.mxu0 0.0
      %952 = vmatprep.subr.mxu0 0.0
      %953 = vmatpush1.msra.mxu0 0.0
      %954 = vmatprep.subr.mxu0 0.0
      %955 = vmatpush1.msra.mxu0 0.0
      %956 = vmatprep.subr.mxu0 0.0
      %957 = vmatpush1.msra.mxu0 0.0
      %958 = vmatprep.subr.mxu0 0.0
      %959 = vmatpush1.msra.mxu0 0.0
      %960 = vmatprep.subr.mxu0 0.0
      %961 = vmatpush1.msra.mxu0 0.0
      %962 = vmatprep.subr.mxu0 0.0
      %963 = vmatpush1.msra.mxu0 0.0
      %964 = vmatprep.subr.mxu0 0.0
      %965 = vmatpush1.msra.mxu0 0.0
      %966 = vmatprep.subr.mxu0 0.0
      %967 = vmatpush1.msra.mxu0 0.0
      %968 = vmatprep.subr.mxu0 0.0
      %969 = vmatpush1.msra.mxu0 0.0
      %970 = vmatprep.subr.mxu0 0.0
      %971 = vmatpush1.msra.mxu0 %v283
      %972 = vmatprep.subr.mxu0 0.0
      %973 = vmatpush1.msra.mxu0 %v196
      %974 = vmatprep.subr.mxu0 0.0
      %975 = vmatpush2.msra.mxu0 0.0
      %976 = vmatprep.subr.mxu0 0.0
      %977 = vmatpush2.msra.mxu0 0.0
      %978 = vmatprep.subr.mxu0 0.0
      %979 = vmatpush2.msra.mxu0 0.0
      %980 = vmatprep.subr.mxu0 0.0
      %981 = vmatpush2.msra.mxu0 0.0
      %982 = vmatprep.subr.mxu0 0.0
      %983 = vmatpush2.msra.mxu0 0.0
      %984 = vmatprep.subr.mxu0 0.0
      %985 = vmatpush2.msra.mxu0 0.0
      %986 = vmatprep.subr.mxu0 0.0
      %987 = vmatpush2.msra.mxu0 0.0
      %988 = vmatprep.subr.mxu0 0.0
      %989 = vmatpush2.msra.mxu0 0.0
      %990 = vmatprep.subr.mxu0 0.0
      %991 = vmatpush2.msra.mxu0 0.0
      %992 = vmatprep.subr.mxu0 0.0
      %993 = vmatpush2.msra.mxu0 0.0
      %994 = vmatprep.subr.mxu0 0.0
      %995 = vmatpush2.msra.mxu0 0.0
      %996 = vmatprep.subr.mxu0 0.0
      %997 = vmatpush2.msra.mxu0 0.0
      %998 = vmatprep.subr.mxu0 0.0
      %999 = vmatpush2.msra.mxu0 0.0
      %1000 = vmatprep.subr.mxu0 0.0
      %1001 = vmatpush2.msra.mxu0 0.0
      %1002 = vmatprep.subr.mxu0 0.0
      %1003 = vmatpush2.msra.mxu0 0.0
      %1004 = vmatprep.subr.mxu0 0.0
      %1005 = vmatpush2.msra.mxu0 0.0
      %1006 = vmatprep.mubr.f32.mxu0 0.0
      %1007 = vmatmul.mubr.f32.gmra.mxu0 %v868
      %v1008 = vpop.f32.mrf.mxu0
      %v1009 = vadd.f32 %v203, %v1008
      %v1010 = vpop.f32.mrf.mxu0
      %1011 = vmatprep.mubr.f32.mxu0 0.0
      %1012 = vmatmul.mubr.f32.gmra.mxu0 %v871
      %v1013 = vpop.f32.mrf.mxu0
      %v1014 = vadd.f32 %v203, %v1013
      %v1015 = vpop.f32.mrf.mxu0
      %1016 = vmatprep.mubr.f32.mxu0 0.0
      %1017 = vmatmul.mubr.f32.gmra.mxu0 %v874
      %v1018 = vpop.f32.mrf.mxu0
      %v1019 = vadd.f32 %v203, %v1018
      %v1020 = vpop.f32.mrf.mxu0
      %1021 = vmatprep.mubr.f32.mxu0 0.0
      %1022 = vmatmul.mubr.f32.gmra.mxu0 %v877
      %v1023 = vpop.f32.mrf.mxu0
      %v1024 = vadd.f32 %v203, %v1023
      %v1025 = vpop.f32.mrf.mxu0
      %1026 = vmatprep.mubr.f32.mxu0 0.0
      %1027 = vmatmul.mubr.f32.gmra.mxu0 %v880
      %v1028 = vpop.f32.mrf.mxu0
      %v1029 = vadd.f32 %v203, %v1028
      %v1030 = vpop.f32.mrf.mxu0
      %1031 = vmatprep.mubr.f32.mxu0 0.0
      %1032 = vmatmul.mubr.f32.gmra.mxu0 %v883
      %v1033 = vpop.f32.mrf.mxu0
      %v1034 = vadd.f32 %v203, %v1033
      %v1035 = vpop.f32.mrf.mxu0
      %1036 = vmatprep.mubr.f32.mxu0 0.0
      %1037 = vmatmul.mubr.f32.gmra.mxu0 %v886
      %v1038 = vpop.f32.mrf.mxu0
      %v1039 = vadd.f32 %v203, %v1038
      %v1040 = vpop.f32.mrf.mxu0
      %1041 = vmatprep.mubr.f32.mxu0 0.0
      %1042 = vmatmul.mubr.f32.gmra.mxu0 %v889
      %v1043 = vpop.f32.mrf.mxu0
      %v1044 = vadd.f32 %v203, %v1043
      %v1045 = vpop.f32.mrf.mxu0
      %1046 = vmatprep.mubr.f32.mxu0 0.0
      %1047 = vmatmul.mubr.f32.gmra.mxu0 %v892
      %v1048 = vpop.f32.mrf.mxu0
      %v1049 = vadd.f32 %v203, %v1048
      %v1050 = vpop.f32.mrf.mxu0
      %1051 = vmatprep.mubr.f32.mxu0 0.0
      %1052 = vmatmul.mubr.f32.gmra.mxu0 %v895
      %v1053 = vpop.f32.mrf.mxu0
      %v1054 = vadd.f32 %v203, %v1053
      %v1055 = vpop.f32.mrf.mxu0
      %1056 = vmatprep.mubr.f32.mxu0 0.0
      %1057 = vmatmul.mubr.f32.gmra.mxu0 %v898
      %v1058 = vpop.f32.mrf.mxu0
      %v1059 = vadd.f32 %v203, %v1058
      %v1060 = vpop.f32.mrf.mxu0
      %1061 = vmatprep.mubr.f32.mxu0 0.0
      %1062 = vmatmul.mubr.f32.gmra.mxu0 %v901
      %v1063 = vpop.f32.mrf.mxu0
      %v1064 = vadd.f32 %v203, %v1063
      %v1065 = vpop.f32.mrf.mxu0
      %1066 = vmatprep.mubr.f32.mxu0 0.0
      %1067 = vmatmul.mubr.f32.gmra.mxu0 %v904
      %v1068 = vpop.f32.mrf.mxu0
      %v1069 = vadd.f32 %v203, %v1068
      %v1070 = vpop.f32.mrf.mxu0
      %1071 = vmatprep.mubr.f32.mxu0 0.0
      %1072 = vmatmul.mubr.f32.gmra.mxu0 %v907
      %v1073 = vpop.f32.mrf.mxu0
      %v1074 = vadd.f32 %v203, %v1073
      %v1075 = vpop.f32.mrf.mxu0
      %1076 = vmatprep.mubr.f32.mxu0 0.0
      %1077 = vmatmul.mubr.f32.gmra.mxu0 %v910
      %v1078 = vpop.f32.mrf.mxu0
      %v1079 = vadd.f32 %v203, %v1078
      %v1080 = vpop.f32.mrf.mxu0
      %1081 = vmatprep.mubr.f32.mxu0 0.0
      %1082 = vmatmul.mubr.f32.gmra.mxu0 %v913
      %v1083 = vpop.f32.mrf.mxu0
      %v1084 = vadd.f32 %v203, %v1083
      %v1085 = vpop.f32.mrf.mxu0
      %1086 = vmatprep.mubr.f32.mxu0 0.0
      %1087 = vmatmul.mubr.f32.gmra.mxu0 %v916
      %v1088 = vpop.f32.mrf.mxu0
      %v1089 = vadd.f32 %v203, %v1088
      %v1090 = vpop.f32.mrf.mxu0
      %1091 = vmatprep.mubr.f32.mxu0 0.0
      %1092 = vmatmul.mubr.f32.gmra.mxu0 %v919
      %v1093 = vpop.f32.mrf.mxu0
      %v1094 = vadd.f32 %v203, %v1093
      %v1095 = vpop.f32.mrf.mxu0
      %1096 = vmatprep.mubr.f32.mxu0 0.0
      %1097 = vmatmul.mubr.f32.gmra.mxu0 %v922
      %v1098 = vpop.f32.mrf.mxu0
      %v1099 = vadd.f32 %v203, %v1098
      %v1100 = vpop.f32.mrf.mxu0
      %1101 = vmatprep.mubr.f32.mxu0 0.0
      %1102 = vmatmul.mubr.f32.gmra.mxu0 %v925
      %v1103 = vpop.f32.mrf.mxu0
      %v1104 = vadd.f32 %v203, %v1103
      %v1105 = vpop.f32.mrf.mxu0
      %1106 = vmatprep.mubr.f32.mxu0 0.0
      %1107 = vmatmul.mubr.f32.gmra.mxu0 %v928
      %v1108 = vpop.f32.mrf.mxu0
      %v1109 = vadd.f32 %v203, %v1108
      %v1110 = vpop.f32.mrf.mxu0
      %1111 = vmatprep.mubr.f32.mxu0 0.0
      %1112 = vmatmul.mubr.f32.gmra.mxu0 %v931
      %v1113 = vpop.f32.mrf.mxu0
      %v1114 = vadd.f32 %v203, %v1113
      %v1115 = vpop.f32.mrf.mxu0
      %1116 = vmatprep.mubr.f32.mxu0 0.0
      %1117 = vmatmul.mubr.f32.gmra.mxu0 %v934
      %v1118 = vpop.f32.mrf.mxu0
      %v1119 = vadd.f32 %v203, %v1118
      %v1120 = vpop.f32.mrf.mxu0
      %1121 = vmatprep.mubr.f32.mxu0 0.0
      %1122 = vmatmul.mubr.f32.gmra.mxu0 %v937
      %v1123 = vpop.f32.mrf.mxu0
      %v1124 = vadd.f32 %v203, %v1123
      %v1125 = vpop.f32.mrf.mxu0
      %1126 = vmatprep.mubr.f32.mxu0 0.0
      %1127 = vmatmul.mubr.f32.gmra.mxu0 %v940
      %v1128 = vpop.f32.mrf.mxu0
      %v1129 = vadd.f32 %v203, %v1128
      %v1130 = vpop.f32.mrf.mxu0
      %1131 = vdwg.mxu0
      %v1132 = vmax.f32 %v1009, 0.0
      %v1133 = vmax.f32 %v1014, 0.0
      %v1134 = vmax.f32 %v1019, 0.0
      %v1135 = vmax.f32 %v1024, 0.0
      %v1136 = vmax.f32 %v1029, 0.0
      %v1137 = vmax.f32 %v1034, 0.0
      %v1138 = vmax.f32 %v1039, 0.0
      %v1139 = vmax.f32 %v1044, 0.0
      %v1140 = vmax.f32 %v1049, 0.0
      %v1141 = vmax.f32 %v1054, 0.0
      %v1142 = vmax.f32 %v1059, 0.0
      %v1143 = vmax.f32 %v1064, 0.0
      %v1144 = vmax.f32 %v1069, 0.0
      %v1145 = vmax.f32 %v1074, 0.0
      %v1146 = vmax.f32 %v1079, 0.0
      %v1147 = vmax.f32 %v1084, 0.0
      %v1148 = vmax.f32 %v1089, 0.0
      %v1149 = vmax.f32 %v1094, 0.0
      %v1150 = vmax.f32 %v1099, 0.0
      %v1151 = vmax.f32 %v1104, 0.0
      %v1152 = vmax.f32 %v1109, 0.0
      %v1153 = vmax.f32 %v1114, 0.0
      %v1154 = vmax.f32 %v1119, 0.0
      %v1155 = vmax.f32 %v1124, 0.0
      %v1156 = vmax.f32 %v1129, 0.0
      %s1157 = scalar_lea.vmem %s165, 600
      %v1158 = vld [vmem:[%s1157] sm:$0xff]
      %v1159 = vld [vmem:[%s1157 + $0x8] sm:$0xff]
      %v1160 = vld [vmem:[%s1157 + $0x10] sm:$0xff]
      %v1161 = vld [vmem:[%s1157 + $0x18] sm:$0xff]
      %v1162 = vld [vmem:[%s1157 + $0x20] sm:$0xff]
      %v1163 = vld [vmem:[%s1157 + $0x28] sm:$0xff]
      %v1164 = vld [vmem:[%s1157 + $0x30] sm:$0xff]
      %v1165 = vld [vmem:[%s1157 + $0x38] sm:$0xff]
      %v1166 = vld [vmem:[%s1157 + $0x40] sm:$0xff]
      %v1167 = vld [vmem:[%s1157 + $0x48] sm:$0xff]
      %v1168 = vld [vmem:[%s1157 + $0x50] sm:$0xff]
      %v1169 = vld [vmem:[%s1157 + $0x58] sm:$0xff]
      %v1170 = vld [vmem:[%s1157 + $0x60] sm:$0xff]
      %v1171 = vld [vmem:[%s1157 + $0x68] sm:$0xff]
      %v1172 = vld [vmem:[%s1157 + $0x70] sm:$0xff]
      %v1173 = vld [vmem:[%s1157 + $0x78] sm:$0xff]
      %v1174 = vld [vmem:[%s1157 + $0x80] sm:$0xff]
      %v1175 = vld [vmem:[%s1157 + $0x88] sm:$0xff]
      %v1176 = vld [vmem:[%s1157 + $0x90] sm:$0xff]
      %v1177 = vld [vmem:[%s1157 + $0x98] sm:$0xff]
      %v1178 = vld [vmem:[%s1157 + $0xa0] sm:$0xff]
      %v1179 = vld [vmem:[%s1157 + $0xa8] sm:$0xff]
      %v1180 = vld [vmem:[%s1157 + $0xb0] sm:$0xff]
      %v1181 = vld [vmem:[%s1157 + $0xb8] sm:$0xff]
      %v1182 = vld [vmem:[%s1157 + $0xc0] sm:$0xf]
      %v1184 = vsel %vm205, %v1158, 0
      %v1187 = vsel %vm205, %v1159, 0
      %v1190 = vsel %vm205, %v1160, 0
      %v1193 = vsel %vm205, %v1161, 0
      %v1196 = vsel %vm205, %v1162, 0
      %v1199 = vsel %vm205, %v1163, 0
      %v1202 = vsel %vm205, %v1164, 0
      %v1205 = vsel %vm205, %v1165, 0
      %v1208 = vsel %vm205, %v1166, 0
      %v1211 = vsel %vm205, %v1167, 0
      %v1214 = vsel %vm205, %v1168, 0
      %v1217 = vsel %vm205, %v1169, 0
      %v1220 = vsel %vm205, %v1170, 0
      %v1223 = vsel %vm205, %v1171, 0
      %v1226 = vsel %vm205, %v1172, 0
      %v1229 = vsel %vm205, %v1173, 0
      %v1232 = vsel %vm205, %v1174, 0
      %v1235 = vsel %vm205, %v1175, 0
      %v1238 = vsel %vm205, %v1176, 0
      %v1241 = vsel %vm205, %v1177, 0
      %v1244 = vsel %vm205, %v1178, 0
      %v1247 = vsel %vm205, %v1179, 0
      %v1250 = vsel %vm205, %v1180, 0
      %v1253 = vsel %vm205, %v1181, 0
      %v1256 = vsel %vm205, %v1182, 0
      %1258 = vmatprep.subr.mxu0 0.0
      %1259 = vmatpush1.msra.mxu0 0.0
      %1260 = vmatprep.subr.mxu0 0.0
      %1261 = vmatpush1.msra.mxu0 0.0
      %1262 = vmatprep.subr.mxu0 0.0
      %1263 = vmatpush1.msra.mxu0 0.0
      %1264 = vmatprep.subr.mxu0 0.0
      %1265 = vmatpush1.msra.mxu0 0.0
      %1266 = vmatprep.subr.mxu0 0.0
      %1267 = vmatpush1.msra.mxu0 0.0
      %1268 = vmatprep.subr.mxu0 0.0
      %1269 = vmatpush1.msra.mxu0 0.0
      %1270 = vmatprep.subr.mxu0 0.0
      %1271 = vmatpush1.msra.mxu0 0.0
      %1272 = vmatprep.subr.mxu0 0.0
      %1273 = vmatpush1.msra.mxu0 0.0
      %1274 = vmatprep.subr.mxu0 0.0
      %1275 = vmatpush1.msra.mxu0 0.0
      %1276 = vmatprep.subr.mxu0 0.0
      %1277 = vmatpush1.msra.mxu0 0.0
      %1278 = vmatprep.subr.mxu0 0.0
      %1279 = vmatpush1.msra.mxu0 0.0
      %1280 = vmatprep.subr.mxu0 0.0
      %1281 = vmatpush1.msra.mxu0 0.0
      %1282 = vmatprep.subr.mxu0 0.0
      %1283 = vmatpush1.msra.mxu0 0.0
      %1284 = vmatprep.subr.mxu0 0.0
      %1285 = vmatpush1.msra.mxu0 0.0
      %1286 = vmatprep.subr.mxu0 0.0
      %1287 = vmatpush1.msra.mxu0 %v283
      %1288 = vmatprep.subr.mxu0 0.0
      %1289 = vmatpush1.msra.mxu0 %v196
      %1290 = vmatprep.subr.mxu0 0.0
      %1291 = vmatpush2.msra.mxu0 0.0
      %1292 = vmatprep.subr.mxu0 0.0
      %1293 = vmatpush2.msra.mxu0 0.0
      %1294 = vmatprep.subr.mxu0 0.0
      %1295 = vmatpush2.msra.mxu0 0.0
      %1296 = vmatprep.subr.mxu0 0.0
      %1297 = vmatpush2.msra.mxu0 0.0
      %1298 = vmatprep.subr.mxu0 0.0
      %1299 = vmatpush2.msra.mxu0 0.0
      %1300 = vmatprep.subr.mxu0 0.0
      %1301 = vmatpush2.msra.mxu0 0.0
      %1302 = vmatprep.subr.mxu0 0.0
      %1303 = vmatpush2.msra.mxu0 0.0
      %1304 = vmatprep.subr.mxu0 0.0
      %1305 = vmatpush2.msra.mxu0 0.0
      %1306 = vmatprep.subr.mxu0 0.0
      %1307 = vmatpush2.msra.mxu0 0.0
      %1308 = vmatprep.subr.mxu0 0.0
      %1309 = vmatpush2.msra.mxu0 0.0
      %1310 = vmatprep.subr.mxu0 0.0
      %1311 = vmatpush2.msra.mxu0 0.0
      %1312 = vmatprep.subr.mxu0 0.0
      %1313 = vmatpush2.msra.mxu0 0.0
      %1314 = vmatprep.subr.mxu0 0.0
      %1315 = vmatpush2.msra.mxu0 0.0
      %1316 = vmatprep.subr.mxu0 0.0
      %1317 = vmatpush2.msra.mxu0 0.0
      %1318 = vmatprep.subr.mxu0 0.0
      %1319 = vmatpush2.msra.mxu0 0.0
      %1320 = vmatprep.subr.mxu0 0.0
      %1321 = vmatpush2.msra.mxu0 0.0
      %1322 = vmatprep.mubr.f32.mxu0 0.0
      %1323 = vmatmul.mubr.f32.gmra.mxu0 %v1184
      %v1324 = vpop.f32.mrf.mxu0
      %v1325 = vadd.f32 %v203, %v1324
      %v1326 = vpop.f32.mrf.mxu0
      %1327 = vmatprep.mubr.f32.mxu0 0.0
      %1328 = vmatmul.mubr.f32.gmra.mxu0 %v1187
      %v1329 = vpop.f32.mrf.mxu0
      %v1330 = vadd.f32 %v203, %v1329
      %v1331 = vpop.f32.mrf.mxu0
      %1332 = vmatprep.mubr.f32.mxu0 0.0
      %1333 = vmatmul.mubr.f32.gmra.mxu0 %v1190
      %v1334 = vpop.f32.mrf.mxu0
      %v1335 = vadd.f32 %v203, %v1334
      %v1336 = vpop.f32.mrf.mxu0
      %1337 = vmatprep.mubr.f32.mxu0 0.0
      %1338 = vmatmul.mubr.f32.gmra.mxu0 %v1193
      %v1339 = vpop.f32.mrf.mxu0
      %v1340 = vadd.f32 %v203, %v1339
      %v1341 = vpop.f32.mrf.mxu0
      %1342 = vmatprep.mubr.f32.mxu0 0.0
      %1343 = vmatmul.mubr.f32.gmra.mxu0 %v1196
      %v1344 = vpop.f32.mrf.mxu0
      %v1345 = vadd.f32 %v203, %v1344
      %v1346 = vpop.f32.mrf.mxu0
      %1347 = vmatprep.mubr.f32.mxu0 0.0
      %1348 = vmatmul.mubr.f32.gmra.mxu0 %v1199
      %v1349 = vpop.f32.mrf.mxu0
      %v1350 = vadd.f32 %v203, %v1349
      %v1351 = vpop.f32.mrf.mxu0
      %1352 = vmatprep.mubr.f32.mxu0 0.0
      %1353 = vmatmul.mubr.f32.gmra.mxu0 %v1202
      %v1354 = vpop.f32.mrf.mxu0
      %v1355 = vadd.f32 %v203, %v1354
      %v1356 = vpop.f32.mrf.mxu0
      %1357 = vmatprep.mubr.f32.mxu0 0.0
      %1358 = vmatmul.mubr.f32.gmra.mxu0 %v1205
      %v1359 = vpop.f32.mrf.mxu0
      %v1360 = vadd.f32 %v203, %v1359
      %v1361 = vpop.f32.mrf.mxu0
      %1362 = vmatprep.mubr.f32.mxu0 0.0
      %1363 = vmatmul.mubr.f32.gmra.mxu0 %v1208
      %v1364 = vpop.f32.mrf.mxu0
      %v1365 = vadd.f32 %v203, %v1364
      %v1366 = vpop.f32.mrf.mxu0
      %1367 = vmatprep.mubr.f32.mxu0 0.0
      %1368 = vmatmul.mubr.f32.gmra.mxu0 %v1211
      %v1369 = vpop.f32.mrf.mxu0
      %v1370 = vadd.f32 %v203, %v1369
      %v1371 = vpop.f32.mrf.mxu0
      %1372 = vmatprep.mubr.f32.mxu0 0.0
      %1373 = vmatmul.mubr.f32.gmra.mxu0 %v1214
      %v1374 = vpop.f32.mrf.mxu0
      %v1375 = vadd.f32 %v203, %v1374
      %v1376 = vpop.f32.mrf.mxu0
      %1377 = vmatprep.mubr.f32.mxu0 0.0
      %1378 = vmatmul.mubr.f32.gmra.mxu0 %v1217
      %v1379 = vpop.f32.mrf.mxu0
      %v1380 = vadd.f32 %v203, %v1379
      %v1381 = vpop.f32.mrf.mxu0
      %1382 = vmatprep.mubr.f32.mxu0 0.0
      %1383 = vmatmul.mubr.f32.gmra.mxu0 %v1220
      %v1384 = vpop.f32.mrf.mxu0
      %v1385 = vadd.f32 %v203, %v1384
      %v1386 = vpop.f32.mrf.mxu0
      %1387 = vmatprep.mubr.f32.mxu0 0.0
      %1388 = vmatmul.mubr.f32.gmra.mxu0 %v1223
      %v1389 = vpop.f32.mrf.mxu0
      %v1390 = vadd.f32 %v203, %v1389
      %v1391 = vpop.f32.mrf.mxu0
      %1392 = vmatprep.mubr.f32.mxu0 0.0
      %1393 = vmatmul.mubr.f32.gmra.mxu0 %v1226
      %v1394 = vpop.f32.mrf.mxu0
      %v1395 = vadd.f32 %v203, %v1394
      %v1396 = vpop.f32.mrf.mxu0
      %1397 = vmatprep.mubr.f32.mxu0 0.0
      %1398 = vmatmul.mubr.f32.gmra.mxu0 %v1229
      %v1399 = vpop.f32.mrf.mxu0
      %v1400 = vadd.f32 %v203, %v1399
      %v1401 = vpop.f32.mrf.mxu0
      %1402 = vmatprep.mubr.f32.mxu0 0.0
      %1403 = vmatmul.mubr.f32.gmra.mxu0 %v1232
      %v1404 = vpop.f32.mrf.mxu0
      %v1405 = vadd.f32 %v203, %v1404
      %v1406 = vpop.f32.mrf.mxu0
      %1407 = vmatprep.mubr.f32.mxu0 0.0
      %1408 = vmatmul.mubr.f32.gmra.mxu0 %v1235
      %v1409 = vpop.f32.mrf.mxu0
      %v1410 = vadd.f32 %v203, %v1409
      %v1411 = vpop.f32.mrf.mxu0
      %1412 = vmatprep.mubr.f32.mxu0 0.0
      %1413 = vmatmul.mubr.f32.gmra.mxu0 %v1238
      %v1414 = vpop.f32.mrf.mxu0
      %v1415 = vadd.f32 %v203, %v1414
      %v1416 = vpop.f32.mrf.mxu0
      %1417 = vmatprep.mubr.f32.mxu0 0.0
      %1418 = vmatmul.mubr.f32.gmra.mxu0 %v1241
      %v1419 = vpop.f32.mrf.mxu0
      %v1420 = vadd.f32 %v203, %v1419
      %v1421 = vpop.f32.mrf.mxu0
      %1422 = vmatprep.mubr.f32.mxu0 0.0
      %1423 = vmatmul.mubr.f32.gmra.mxu0 %v1244
      %v1424 = vpop.f32.mrf.mxu0
      %v1425 = vadd.f32 %v203, %v1424
      %v1426 = vpop.f32.mrf.mxu0
      %1427 = vmatprep.mubr.f32.mxu0 0.0
      %1428 = vmatmul.mubr.f32.gmra.mxu0 %v1247
      %v1429 = vpop.f32.mrf.mxu0
      %v1430 = vadd.f32 %v203, %v1429
      %v1431 = vpop.f32.mrf.mxu0
      %1432 = vmatprep.mubr.f32.mxu0 0.0
      %1433 = vmatmul.mubr.f32.gmra.mxu0 %v1250
      %v1434 = vpop.f32.mrf.mxu0
      %v1435 = vadd.f32 %v203, %v1434
      %v1436 = vpop.f32.mrf.mxu0
      %1437 = vmatprep.mubr.f32.mxu0 0.0
      %1438 = vmatmul.mubr.f32.gmra.mxu0 %v1253
      %v1439 = vpop.f32.mrf.mxu0
      %v1440 = vadd.f32 %v203, %v1439
      %v1441 = vpop.f32.mrf.mxu0
      %1442 = vmatprep.mubr.f32.mxu0 0.0
      %1443 = vmatmul.mubr.f32.gmra.mxu0 %v1256
      %v1444 = vpop.f32.mrf.mxu0
      %v1445 = vadd.f32 %v203, %v1444
      %v1446 = vpop.f32.mrf.mxu0
      %1447 = vdwg.mxu0
      %v1448 = vmax.f32 %v1325, 0.0
      %v1449 = vmax.f32 %v1330, 0.0
      %v1450 = vmax.f32 %v1335, 0.0
      %v1451 = vmax.f32 %v1340, 0.0
      %v1452 = vmax.f32 %v1345, 0.0
      %v1453 = vmax.f32 %v1350, 0.0
      %v1454 = vmax.f32 %v1355, 0.0
      %v1455 = vmax.f32 %v1360, 0.0
      %v1456 = vmax.f32 %v1365, 0.0
      %v1457 = vmax.f32 %v1370, 0.0
      %v1458 = vmax.f32 %v1375, 0.0
      %v1459 = vmax.f32 %v1380, 0.0
      %v1460 = vmax.f32 %v1385, 0.0
      %v1461 = vmax.f32 %v1390, 0.0
      %v1462 = vmax.f32 %v1395, 0.0
      %v1463 = vmax.f32 %v1400, 0.0
      %v1464 = vmax.f32 %v1405, 0.0
      %v1465 = vmax.f32 %v1410, 0.0
      %v1466 = vmax.f32 %v1415, 0.0
      %v1467 = vmax.f32 %v1420, 0.0
      %v1468 = vmax.f32 %v1425, 0.0
      %v1469 = vmax.f32 %v1430, 0.0
      %v1470 = vmax.f32 %v1435, 0.0
      %v1471 = vmax.f32 %v1440, 0.0
      %v1472 = vmax.f32 %v1445, 0.0
      %v1473 = vmax.f32 %v1132, %v1448
      %v1474 = vmax.f32 %v1133, %v1449
      %v1475 = vmax.f32 %v1134, %v1450
      %v1476 = vmax.f32 %v1135, %v1451
      %v1477 = vmax.f32 %v1136, %v1452
      %v1478 = vmax.f32 %v1137, %v1453
      %v1479 = vmax.f32 %v1138, %v1454
      %v1480 = vmax.f32 %v1139, %v1455
      %v1481 = vmax.f32 %v1140, %v1456
      %v1482 = vmax.f32 %v1141, %v1457
      %v1483 = vmax.f32 %v1142, %v1458
      %v1484 = vmax.f32 %v1143, %v1459
      %v1485 = vmax.f32 %v1144, %v1460
      %v1486 = vmax.f32 %v1145, %v1461
      %v1487 = vmax.f32 %v1146, %v1462
      %v1488 = vmax.f32 %v1147, %v1463
      %v1489 = vmax.f32 %v1148, %v1464
      %v1490 = vmax.f32 %v1149, %v1465
      %v1491 = vmax.f32 %v1150, %v1466
      %v1492 = vmax.f32 %v1151, %v1467
      %v1493 = vmax.f32 %v1152, %v1468
      %v1494 = vmax.f32 %v1153, %v1469
      %v1495 = vmax.f32 %v1154, %v1470
      %v1496 = vmax.f32 %v1155, %v1471
      %v1497 = vmax.f32 %v1156, %v1472
      %v1498 = vmax.f32 %v816, %v1473
      %v1499 = vmax.f32 %v817, %v1474
      %v1500 = vmax.f32 %v818, %v1475
      %v1501 = vmax.f32 %v819, %v1476
      %v1502 = vmax.f32 %v820, %v1477
      %v1503 = vmax.f32 %v821, %v1478
      %v1504 = vmax.f32 %v822, %v1479
      %v1505 = vmax.f32 %v823, %v1480
      %v1506 = vmax.f32 %v824, %v1481
      %v1507 = vmax.f32 %v825, %v1482
      %v1508 = vmax.f32 %v826, %v1483
      %v1509 = vmax.f32 %v827, %v1484
      %v1510 = vmax.f32 %v828, %v1485
      %v1511 = vmax.f32 %v829, %v1486
      %v1512 = vmax.f32 %v830, %v1487
      %v1513 = vmax.f32 %v831, %v1488
      %v1514 = vmax.f32 %v832, %v1489
      %v1515 = vmax.f32 %v833, %v1490
      %v1516 = vmax.f32 %v834, %v1491
      %v1517 = vmax.f32 %v835, %v1492
      %v1518 = vmax.f32 %v836, %v1493
      %v1519 = vmax.f32 %v837, %v1494
      %v1520 = vmax.f32 %v838, %v1495
      %v1521 = vmax.f32 %v839, %v1496
      %v1522 = vmax.f32 %v840, %v1497
      %vm1523 = vcmask 261120
      %1524 = vst.msk [vmem:[%s170] sm:$0xff] %vm1523, %v1498
      %1525 = vst.msk [vmem:[%s170 + $0x8] sm:$0xff] %vm1523, %v1499
      %1526 = vst.msk [vmem:[%s170 + $0x10] sm:$0xff] %vm1523, %v1500
      %1527 = vst.msk [vmem:[%s170 + $0x18] sm:$0xff] %vm1523, %v1501
      %1528 = vst.msk [vmem:[%s170 + $0x20] sm:$0xff] %vm1523, %v1502
      %1529 = vst.msk [vmem:[%s170 + $0x28] sm:$0xff] %vm1523, %v1503
      %1530 = vst.msk [vmem:[%s170 + $0x30] sm:$0xff] %vm1523, %v1504
      %1531 = vst.msk [vmem:[%s170 + $0x38] sm:$0xff] %vm1523, %v1505
      %1532 = vst.msk [vmem:[%s170 + $0x40] sm:$0xff] %vm1523, %v1506
      %1533 = vst.msk [vmem:[%s170 + $0x48] sm:$0xff] %vm1523, %v1507
      %1534 = vst.msk [vmem:[%s170 + $0x50] sm:$0xff] %vm1523, %v1508
      %1535 = vst.msk [vmem:[%s170 + $0x58] sm:$0xff] %vm1523, %v1509
      %1536 = vst.msk [vmem:[%s170 + $0x60] sm:$0xff] %vm1523, %v1510
      %1537 = vst.msk [vmem:[%s170 + $0x68] sm:$0xff] %vm1523, %v1511
      %1538 = vst.msk [vmem:[%s170 + $0x70] sm:$0xff] %vm1523, %v1512
      %1539 = vst.msk [vmem:[%s170 + $0x78] sm:$0xff] %vm1523, %v1513
      %1540 = vst.msk [vmem:[%s170 + $0x80] sm:$0xff] %vm1523, %v1514
      %1541 = vst.msk [vmem:[%s170 + $0x88] sm:$0xff] %vm1523, %v1515
      %1542 = vst.msk [vmem:[%s170 + $0x90] sm:$0xff] %vm1523, %v1516
      %1543 = vst.msk [vmem:[%s170 + $0x98] sm:$0xff] %vm1523, %v1517
      %1544 = vst.msk [vmem:[%s170 + $0xa0] sm:$0xff] %vm1523, %v1518
      %1545 = vst.msk [vmem:[%s170 + $0xa8] sm:$0xff] %vm1523, %v1519
      %1546 = vst.msk [vmem:[%s170 + $0xb0] sm:$0xff] %vm1523, %v1520
      %1547 = vst.msk [vmem:[%s170 + $0xb8] sm:$0xff] %vm1523, %v1521
      %vm1548 = vcmask 257024
      %1549 = vst.msk [vmem:[%s170 + $0xc0] sm:$0xf] %vm1548, %v1522
      %p1550 = scmp.lt.s32.totalorder %s14, 1
      %s1551 = scalar_select %p1550, %s14, 1
      %s1552 = smul.addr %s1551, 25
      %s1553 = smul.addr %s1552, 8
      %s1554 = scalar_lea.vmem %s3, %s1553
      // Predicated region
      $region33: #{mnist_classifier_forward.3} parent=31 // pred_check
        %p1555 = pneg %p100
      $region34: #{mnist_classifier_forward.3} parent=31 // pred_check_branch
        %1557 = sbr.rel (%p1555) target = $region36
      $region35: #{mnist_classifier_forward.3} parent=31 // pred_region
        _
      $region36: #{mnist_classifier_forward.3} parent=31 // pred_fallthru
        _
    $region32: #{mnist_classifier_forward.3} parent=5 // pred_fallthru
      _
    %p1558 = scmp.le.s32.totalorder 2, %s9
    // Predicated region
    $region37: #{mnist_classifier_forward.3} parent=5 // pred_check
      %p1559 = pneg %p1558
    $region38: #{mnist_classifier_forward.3} parent=5 // pred_check_branch
      %1561 = sbr.rel (%p1559) target = $region40
    $region39: #{mnist_classifier_forward.3} parent=5 // pred_region
      %s1562 = ssub.s32 %s9, 2
      // Predicated region
      $region41: #{mnist_classifier_forward.3} parent=39 // pred_check
        %p1563 = pneg %p106
      $region42: #{mnist_classifier_forward.3} parent=39 // pred_check_branch
        %1565 = sbr.rel (%p1563) target = $region44
      $region43: #{mnist_classifier_forward.3} parent=39 // pred_region
        %p1566 = scmp.lt.s32.totalorder %s15, 1
        %s1567 = scalar_select %p1566, %s15, 1
        %s1568 = smul.addr %s1567, 25
        %s1569 = smul.addr %s1568, 8
        %s1570 = scalar_lea.vmem %s3, %s1569
      $region44: #{mnist_classifier_forward.3} parent=39 // pred_fallthru
        _
    $region40: #{mnist_classifier_forward.3} parent=5 // pred_fallthru
      _
  $region6: #{mnist_classifier_forward.3} parent=0 // loop_footer
    %s13 = sadd.s32 1, %s9
  $region7: #{mnist_classifier_forward.3} parent=0 // loop_footer_branch
    %8 = sbr.rel target = $region3
  $region8: #{mnist_classifier_forward.3} parent=0 // loop_exit
    _

// kernel: mnist_classifier_forward.4
$region0: #{mnist_classifier_forward.4}
  #allocation0 [shape = 'u32[]', space=smem, size = 0x4, offset = 0x4, fixed_abs, tag = 'smem constant byte address 0x4 - core index']
  #allocation1 [shape = 'u32[144,128]{1,0:T(1,128)}', space=vmem, size = 0x12000, scoped, tag = 'internal scratch']
  %s0 = inlined_call_operand.vmem [shape: f32[2,4,49,288], index: 0, kind: input, shape index: {}]
  %s1 = inlined_call_operand.vmem [shape: f32[288,64], index: 1, kind: input, shape index: {}]
  %s2 = inlined_call_operand.vmem [shape: f32[1,64], index: 2, kind: input, shape index: {}]
  %s3 = inlined_call_operand.vmem [shape: f32[2,49,64], index: 3, kind: output, shape index: {}]
  %s4 = sld [smem:[#allocation0]]
  $region45: #{mnist_classifier_forward.4} parent=0
    _
  %s6 = ssub.s32 1, %s4
  %s7 = scalar_select 0, %s6, %s4
  loop: start=0, step=1, limit=4
  $region2: #{mnist_classifier_forward.4} parent=0 // loop_pre_header
    _
  $region3: #{mnist_classifier_forward.4} parent=0 // loop_header
    %s9 = sphi 0, %s13
    %p10 = scmp.ge.s32.totalorder %s9, 4
    %s19 = sphi 0, %s21
    %s22 = sphi 0, %s19
    %s23 = sphi 0, %s22
    %s39 = sphi 0, %s23
    %s43 = sphi 0, %s43
    %s45 = sphi 0, %s43
    %s46 = sphi 0, %s45
    %s60 = sphi 0, %s46
    %s64 = sphi 0, %s64
    %s66 = sphi 0, %s64
    %s67 = sphi 0, %s66
    %s81 = sphi 0, %s67
    %s87 = sphi 0, %s89
    %s90 = sphi 0, %s87
    %s91 = sphi 0, %s90
    %s107 = sphi 0, %s91
  $region4: #{mnist_classifier_forward.4} parent=0 // loop_header_branch
    %12 = sbr.rel (%p10) target = $region8
  $region5: #{mnist_classifier_forward.4} parent=0 // loop_body
    %s14 = ssub.s32 %s9, 1
    %s15 = ssub.s32 %s9, 2
    %s16 = sadd.s32 %s9, 1
    %s17 = ssub.s32 %s9, %s16
    %p18 = scmp.eq.s32.totalorder %s17, 0
    %s20 = sadd.s32 %s19, 1
    %s21 = scalar_select %p18, %s19, %s20
    %p24 = pneg %p18
    %p25 = scmp.eq.s32.totalorder %s9, 1
    %p26 = por %p24, %p25
    %p27 = scmp.ne.s32.totalorder %s19, %s22
    %p28 = scmp.eq.s32.totalorder %s9, 0
    %p29 = por %p27, %p28
    %p30 = scmp.ne.s32.totalorder %s19, %s22
    %p31 = scmp.eq.s32.totalorder %s14, 1
    %p32 = por %p30, %p31
    %p33 = scmp.ne.s32.totalorder %s22, %s23
    %p34 = scmp.eq.s32.totalorder %s14, 0
    %p35 = por %p33, %p34
    %p36 = scmp.ne.s32.totalorder %s22, %s23
    %p37 = scmp.eq.s32.totalorder %s15, 1
    %p38 = por %p36, %p37
    %p40 = scmp.ne.s32.totalorder %s23, %s39
    %p41 = scmp.eq.s32.totalorder %s15, 0
    %p42 = por %p40, %p41
    %s44 = sadd.s32 %s43, 1
    %p47 = scmp.eq.s32.totalorder %s9, 1
    %p48 = scmp.ne.s32.totalorder %s43, %s45
    %p49 = scmp.eq.s32.totalorder %s9, 0
    %p50 = por %p48, %p49
    %p51 = scmp.ne.s32.totalorder %s43, %s45
    %p52 = scmp.eq.s32.totalorder %s14, 1
    %p53 = por %p51, %p52
    %p54 = scmp.ne.s32.totalorder %s45, %s46
    %p55 = scmp.eq.s32.totalorder %s14, 0
    %p56 = por %p54, %p55
    %p57 = scmp.ne.s32.totalorder %s45, %s46
    %p58 = scmp.eq.s32.totalorder %s15, 1
    %p59 = por %p57, %p58
    %p61 = scmp.ne.s32.totalorder %s46, %s60
    %p62 = scmp.eq.s32.totalorder %s15, 0
    %p63 = por %p61, %p62
    %s65 = sadd.s32 %s64, 1
    %p68 = scmp.eq.s32.totalorder %s9, 1
    %p69 = scmp.ne.s32.totalorder %s64, %s66
    %p70 = scmp.eq.s32.totalorder %s9, 0
    %p71 = por %p69, %p70
    %p72 = scmp.ne.s32.totalorder %s64, %s66
    %p73 = scmp.eq.s32.totalorder %s14, 1
    %p74 = por %p72, %p73
    %p75 = scmp.ne.s32.totalorder %s66, %s67
    %p76 = scmp.eq.s32.totalorder %s14, 0
    %p77 = por %p75, %p76
    %p78 = scmp.ne.s32.totalorder %s66, %s67
    %p79 = scmp.eq.s32.totalorder %s15, 1
    %p80 = por %p78, %p79
    %p82 = scmp.ne.s32.totalorder %s67, %s81
    %p83 = scmp.eq.s32.totalorder %s15, 0
    %p84 = por %p82, %p83
    %s85 = ssub.s32 %s9, %s16
    %p86 = scmp.eq.s32.totalorder %s85, 0
    %s88 = sadd.s32 %s87, 1
    %s89 = scalar_select %p86, %s87, %s88
    %p92 = pneg %p86
    %p93 = scmp.eq.s32.totalorder %s9, 1
    %p94 = por %p92, %p93
    %p95 = scmp.ne.s32.totalorder %s87, %s90
    %p96 = scmp.eq.s32.totalorder %s9, 0
    %p97 = por %p95, %p96
    %p98 = scmp.ne.s32.totalorder %s87, %s90
    %p99 = scmp.eq.s32.totalorder %s14, 1
    %p100 = por %p98, %p99
    %p101 = scmp.ne.s32.totalorder %s90, %s91
    %p102 = scmp.eq.s32.totalorder %s14, 0
    %p103 = por %p101, %p102
    %p104 = scmp.ne.s32.totalorder %s90, %s91
    %p105 = scmp.eq.s32.totalorder %s15, 1
    %p106 = por %p104, %p105
    %p108 = scmp.ne.s32.totalorder %s91, %s107
    %p109 = scmp.eq.s32.totalorder %s15, 0
    %p110 = por %p108, %p109
    %p111 = scmp.le.s32.totalorder 1, %s9
    %p112 = scmp.lt.s32.totalorder %s9, 3
    %p113 = pnand %p111, %p112
    %p114 = pneg %p113
    // Predicated region
    $region9: #{mnist_classifier_forward.4} parent=5 // pred_check
      _
    $region10: #{mnist_classifier_forward.4} parent=5 // pred_check_branch
      %116 = sbr.rel (%p113) target = $region12
    $region11: #{mnist_classifier_forward.4} parent=5 // pred_region
      %s117 = ssub.s32 %s9, 1
      // Predicated region
      $region13: #{mnist_classifier_forward.4} parent=11 // pred_check
        %p118 = pneg %p56
      $region14: #{mnist_classifier_forward.4} parent=11 // pred_check_branch
        %120 = sbr.rel (%p118) target = $region16
      $region15: #{mnist_classifier_forward.4} parent=11 // pred_region
        _
      $region16: #{mnist_classifier_forward.4} parent=11 // pred_fallthru
        _
      // Predicated region
      $region17: #{mnist_classifier_forward.4} parent=11 // pred_check
        %p121 = pneg %p77
      $region18: #{mnist_classifier_forward.4} parent=11 // pred_check_branch
        %123 = sbr.rel (%p121) target = $region20
      $region19: #{mnist_classifier_forward.4} parent=11 // pred_region
        _
      $region20: #{mnist_classifier_forward.4} parent=11 // pred_fallthru
        _
    $region12: #{mnist_classifier_forward.4} parent=5 // pred_fallthru
      _
    %p124 = scmp.lt.s32.totalorder %s9, 2
    // Predicated region
    $region21: #{mnist_classifier_forward.4} parent=5 // pred_check
      %p125 = pneg %p124
    $region22: #{mnist_classifier_forward.4} parent=5 // pred_check_branch
      %127 = sbr.rel (%p125) target = $region24
    $region23: #{mnist_classifier_forward.4} parent=5 // pred_region
      // Predicated region
      $region25: #{mnist_classifier_forward.4} parent=23 // pred_check
        %p128 = pneg %p29
      $region26: #{mnist_classifier_forward.4} parent=23 // pred_check_branch
        %130 = sbr.rel (%p128) target = $region28
      $region27: #{mnist_classifier_forward.4} parent=23 // pred_region
        %p131 = scmp.lt.s32.totalorder %s9, 1
        %s132 = scalar_select %p131, %s9, 1
        %s133 = smul.addr %s132, 84
        %s134 = smul.addr %s133, 8
        %s135 = scalar_lea.vmem %s0, %s134
      $region28: #{mnist_classifier_forward.4} parent=23 // pred_fallthru
        _
    $region24: #{mnist_classifier_forward.4} parent=5 // pred_fallthru
      _
    %p136 = scmp.le.s32.totalorder 1, %s9
    %p137 = scmp.lt.s32.totalorder %s9, 3
    %p138 = pnand %p136, %p137
    %p139 = pneg %p138
    // Predicated region
    $region29: #{mnist_classifier_forward.4} parent=5 // pred_check
      _
    $region30: #{mnist_classifier_forward.4} parent=5 // pred_check_branch
      %141 = sbr.rel (%p138) target = $region32
    $region31: #{mnist_classifier_forward.4} parent=5 // pred_region
      %s142 = ssub.s32 %s9, 1
      %p143 = scmp.lt.s32.totalorder %s14, 1
      %s144 = scalar_select %p143, %s14, 1
      %s145 = smul.addr %s144, 84
      %s146 = smul.addr %s145, 8
      %s147 = scalar_lea.vmem %s0, %s146
      %p148 = pneg %p35
      %p149 = pneg %p32
      %p150 = pneg %p56
      %p151 = pneg %p53
      %p152 = pneg %p77
      %p153 = pneg %p74
      %p154 = pneg %p103
      %p155 = pneg %p100
      %p156 = scmp.lt.s32.totalorder %s14, 1
      %s157 = scalar_select %p156, %s14, 1
      %s158 = smul.addr %s157, 7
      %s159 = smul.addr %s158, 8
      %s160 = scalar_lea.vmem %s3, %s159
      %p161 = scmp.lt.s32.totalorder %s14, 1
      %s162 = scalar_select %p161, %s14, 1
      %s163 = smul.addr %s162, 84
      %s164 = smul.addr %s163, 8
      %s165 = scalar_lea.vmem %s0, %s164
      %p166 = scmp.lt.s32.totalorder %s14, 1
      %s167 = scalar_select %p166, %s14, 1
      %s168 = smul.addr %s167, 7
      %s169 = smul.addr %s168, 8
      %s170 = scalar_lea.vmem %s3, %s169
      %v171 = vld [vmem:[%s165] sm:$0xff]
      %v172 = vld [vmem:[%s165 + $0x8] sm:$0xff]
      %v173 = vld [vmem:[%s165 + $0x10] sm:$0xff]
      %v174 = vld [vmem:[%s165 + $0x18] sm:$0xff]
      %v175 = vld [vmem:[%s165 + $0x20] sm:$0xff]
      %v176 = vld [vmem:[%s165 + $0x28] sm:$0xff]
      %v177 = vld [vmem:[%s165 + $0x30] sm:$0xff]
      %v178 = vld [vmem:[%s165 + $0x38] sm:$0xff]
      %v179 = vld [vmem:[%s165 + $0x40] sm:$0xff]
      %v180 = vld [vmem:[%s165 + $0x48] sm:$0xff]
      %v181 = vld [vmem:[%s165 + $0x50] sm:$0xff]
      %v182 = vld [vmem:[%s165 + $0x58] sm:$0xff]
      %v183 = vld [vmem:[%s165 + $0x60] sm:$0xff]
      %v184 = vld [vmem:[%s165 + $0x68] sm:$0xff]
      %v185 = vld [vmem:[%s165 + $0x70] sm:$0xff]
      %v186 = vld [vmem:[%s165 + $0x78] sm:$0xff]
      %v187 = vld [vmem:[%s165 + $0x80] sm:$0xff]
      %v188 = vld [vmem:[%s165 + $0x88] sm:$0xff]
      %v189 = vld [vmem:[%s165 + $0x90] sm:$0x1]
      %v190 = vld [vmem:[%s165 + $0x98] sm:$0x1]
      %v191 = vld [vmem:[%s165 + $0xa0] sm:$0x1]
      %v192 = vld [vmem:[%s1] sm:$0xff]
      %v193 = vld [vmem:[%s1 + $0x8] sm:$0xff]
      %v194 = vld [vmem:[%s1 + $0x10] sm:$0xff]
      %v195 = vld [vmem:[%s1 + $0x18] sm:$0xff]
      %v196 = vld [vmem:[%s1 + $0x20] sm:$0xff]
      %v197 = vld [vmem:[%s1 + $0x28] sm:$0xff]
      %v198 = vld [vmem:[%s1 + $0x30] sm:$0xff]
      %v199 = vld [vmem:[%s1 + $0x38] sm:$0xff]
      %v200 = vld [vmem:[%s1 + $0x40] sm:$0xff]
      %v201 = vld [vmem:[%s1 + $0x48] sm:$0xff]
      %v202 = vld [vmem:[%s1 + $0x50] sm:$0xff]
      %v203 = vld [vmem:[%s1 + $0x58] sm:$0xff]
      %v204 = vld [vmem:[%s1 + $0x60] sm:$0xff]
      %v205 = vld [vmem:[%s1 + $0x68] sm:$0xff]
      %v206 = vld [vmem:[%s1 + $0x70] sm:$0xff]
      %v207 = vld [vmem:[%s1 + $0x78] sm:$0xff]
      %v208 = vld [vmem:[%s1 + $0x80] sm:$0xff]
      %v209 = vld [vmem:[%s1 + $0x88] sm:$0xff]
      %v210 = vld [vmem:[%s1 + $0x90] sm:$0xff]
      %v211 = vld [vmem:[%s1 + $0x98] sm:$0xff]
      %v212 = vld [vmem:[%s1 + $0xa0] sm:$0xff]
      %v213 = vld [vmem:[%s1 + $0xa8] sm:$0xff]
      %v214 = vld [vmem:[%s1 + $0xb0] sm:$0xff]
      %v215 = vld [vmem:[%s1 + $0xb8] sm:$0xff]
      %v216 = vld [vmem:[%s1 + $0xc0] sm:$0xff]
      %v217 = vld [vmem:[%s1 + $0xc8] sm:$0xff]
      %v218 = vld [vmem:[%s1 + $0xd0] sm:$0xff]
      %v219 = vld [vmem:[%s1 + $0xd8] sm:$0xff]
      %v220 = vld [vmem:[%s1 + $0xe0] sm:$0xff]
      %v221 = vld [vmem:[%s1 + $0xe8] sm:$0xff]
      %v222 = vld [vmem:[%s1 + $0xf0] sm:$0xff]
      %v223 = vld [vmem:[%s1 + $0xf8] sm:$0xff]
      %v224 = vld [vmem:[%s1 + $0x100] sm:$0xff]
      %v225 = vld [vmem:[%s1 + $0x108] sm:$0xff]
      %v226 = vld [vmem:[%s1 + $0x110] sm:$0xff]
      %v227 = vld [vmem:[%s1 + $0x118] sm:$0xff]
      %v228 = vld [vmem:[%s2] sm:$0x1]
      %v230 = vlaneseq
      %v231 = vshrl.u32 %v230, 7
      %v232 = vsub.s32 0, %v231
      %v233 = vrot.slane %v228, %v232
      %vm235 = vcmask 261120
      %v237 = vsel %vm235, %v173, 0
      %v240 = vsel %vm235, %v176, 0
      %v243 = vsel %vm235, %v179, 0
      %v246 = vsel %vm235, %v182, 0
      %v249 = vsel %vm235, %v185, 0
      %v252 = vsel %vm235, %v188, 0
      %v255 = vsel %vm235, %v191, 0
      %257 = vmatprep.subr.mxu0 0.0
      %258 = vmatpush1.msra.mxu0 %v207
      %259 = vmatprep.subr.mxu0 0.0
      %260 = vmatpush1.msra.mxu0 %v206
      %261 = vmatprep.subr.mxu0 0.0
      %262 = vmatpush1.msra.mxu0 %v205
      %263 = vmatprep.subr.mxu0 0.0
      %264 = vmatpush1.msra.mxu0 %v204
      %265 = vmatprep.subr.mxu0 0.0
      %266 = vmatpush1.msra.mxu0 %v203
      %267 = vmatprep.subr.mxu0 0.0
      %268 = vmatpush1.msra.mxu0 %v202
      %269 = vmatprep.subr.mxu0 0.0
      %270 = vmatpush1.msra.mxu0 %v201
      %271 = vmatprep.subr.mxu0 0.0
      %272 = vmatpush1.msra.mxu0 %v200
      %273 = vmatprep.subr.mxu0 0.0
      %274 = vmatpush1.msra.mxu0 %v199
      %275 = vmatprep.subr.mxu0 0.0
      %276 = vmatpush1.msra.mxu0 %v198
      %277 = vmatprep.subr.mxu0 0.0
      %278 = vmatpush1.msra.mxu0 %v197
      %279 = vmatprep.subr.mxu0 0.0
      %280 = vmatpush1.msra.mxu0 %v196
      %281 = vmatprep.subr.mxu0 0.0
      %282 = vmatpush1.msra.mxu0 %v195
      %283 = vmatprep.subr.mxu0 0.0
      %284 = vmatpush1.msra.mxu0 %v194
      %285 = vmatprep.subr.mxu0 0.0
      %286 = vmatpush1.msra.mxu0 %v193
      %287 = vmatprep.subr.mxu0 0.0
      %288 = vmatpush1.msra.mxu0 %v192
      %289 = vmatprep.subr.mxu0 0.0
      %290 = vmatpush2.msra.mxu0 %v223
      %291 = vmatprep.subr.mxu0 0.0
      %292 = vmatpush2.msra.mxu0 %v222
      %293 = vmatprep.subr.mxu0 0.0
      %294 = vmatpush2.msra.mxu0 %v221
      %295 = vmatprep.subr.mxu0 0.0
      %296 = vmatpush2.msra.mxu0 %v220
      %297 = vmatprep.subr.mxu0 0.0
      %298 = vmatpush2.msra.mxu0 %v219
      %299 = vmatprep.subr.mxu0 0.0
      %300 = vmatpush2.msra.mxu0 %v218
      %301 = vmatprep.subr.mxu0 0.0
      %302 = vmatpush2.msra.mxu0 %v217
      %303 = vmatprep.subr.mxu0 0.0
      %304 = vmatpush2.msra.mxu0 %v216
      %305 = vmatprep.subr.mxu0 0.0
      %306 = vmatpush2.msra.mxu0 %v215
      %307 = vmatprep.subr.mxu0 0.0
      %308 = vmatpush2.msra.mxu0 %v214
      %309 = vmatprep.subr.mxu0 0.0
      %310 = vmatpush2.msra.mxu0 %v213
      %311 = vmatprep.subr.mxu0 0.0
      %312 = vmatpush2.msra.mxu0 %v212
      %313 = vmatprep.subr.mxu0 0.0
      %314 = vmatpush2.msra.mxu0 %v211
      %315 = vmatprep.subr.mxu0 0.0
      %316 = vmatpush2.msra.mxu0 %v210
      %317 = vmatprep.subr.mxu0 0.0
      %318 = vmatpush2.msra.mxu0 %v209
      %319 = vmatprep.subr.mxu0 0.0
      %320 = vmatpush2.msra.mxu0 %v208
      %321 = vmatprep.mubr.f32.mxu0 %v172
      %322 = vmatmul.mubr.f32.gmra.mxu0 %v171
      %v323 = vpop.f32.mrf.mxu0
      %v324 = vadd.f32 %v233, %v323
      %v325 = vpop.f32.mrf.mxu0
      %326 = vmatprep.mubr.f32.mxu0 %v175
      %327 = vmatmul.mubr.f32.gmra.mxu0 %v174
      %v328 = vpop.f32.mrf.mxu0
      %v329 = vadd.f32 %v233, %v328
      %v330 = vpop.f32.mrf.mxu0
      %331 = vmatprep.mubr.f32.mxu0 %v178
      %332 = vmatmul.mubr.f32.gmra.mxu0 %v177
      %v333 = vpop.f32.mrf.mxu0
      %v334 = vadd.f32 %v233, %v333
      %v335 = vpop.f32.mrf.mxu0
      %336 = vmatprep.mubr.f32.mxu0 %v181
      %337 = vmatmul.mubr.f32.gmra.mxu0 %v180
      %v338 = vpop.f32.mrf.mxu0
      %v339 = vadd.f32 %v233, %v338
      %v340 = vpop.f32.mrf.mxu0
      %341 = vmatprep.mubr.f32.mxu0 %v184
      %342 = vmatmul.mubr.f32.gmra.mxu0 %v183
      %v343 = vpop.f32.mrf.mxu0
      %v344 = vadd.f32 %v233, %v343
      %v345 = vpop.f32.mrf.mxu0
      %346 = vmatprep.mubr.f32.mxu0 %v187
      %347 = vmatmul.mubr.f32.gmra.mxu0 %v186
      %v348 = vpop.f32.mrf.mxu0
      %v349 = vadd.f32 %v233, %v348
      %v350 = vpop.f32.mrf.mxu0
      %351 = vmatprep.mubr.f32.mxu0 %v190
      %352 = vmatmul.mubr.f32.gmra.mxu0 %v189
      %v353 = vpop.f32.mrf.mxu0
      %v354 = vadd.f32 %v233, %v353
      %v355 = vpop.f32.mrf.mxu0
      %356 = vdwg.mxu0
      %357 = vmatprep.subr.mxu0 0.0
      %358 = vmatpush1.msra.mxu0 0.0
      %359 = vmatprep.subr.mxu0 0.0
      %360 = vmatpush1.msra.mxu0 0.0
      %361 = vmatprep.subr.mxu0 0.0
      %362 = vmatpush1.msra.mxu0 0.0
      %363 = vmatprep.subr.mxu0 0.0
      %364 = vmatpush1.msra.mxu0 0.0
      %365 = vmatprep.subr.mxu0 0.0
      %366 = vmatpush1.msra.mxu0 0.0
      %367 = vmatprep.subr.mxu0 0.0
      %368 = vmatpush1.msra.mxu0 0.0
      %369 = vmatprep.subr.mxu0 0.0
      %370 = vmatpush1.msra.mxu0 0.0
      %371 = vmatprep.subr.mxu0 0.0
      %372 = vmatpush1.msra.mxu0 0.0
      %373 = vmatprep.subr.mxu0 0.0
      %374 = vmatpush1.msra.mxu0 0.0
      %375 = vmatprep.subr.mxu0 0.0
      %376 = vmatpush1.msra.mxu0 0.0
      %377 = vmatprep.subr.mxu0 0.0
      %378 = vmatpush1.msra.mxu0 0.0
      %379 = vmatprep.subr.mxu0 0.0
      %380 = vmatpush1.msra.mxu0 0.0
      %381 = vmatprep.subr.mxu0 0.0
      %382 = vmatpush1.msra.mxu0 %v227
      %383 = vmatprep.subr.mxu0 0.0
      %384 = vmatpush1.msra.mxu0 %v226
      %385 = vmatprep.subr.mxu0 0.0
      %386 = vmatpush1.msra.mxu0 %v225
      %387 = vmatprep.subr.mxu0 0.0
      %388 = vmatpush1.msra.mxu0 %v224
      %389 = vmatprep.subr.mxu0 0.0
      %390 = vmatpush2.msra.mxu0 0.0
      %391 = vmatprep.subr.mxu0 0.0
      %392 = vmatpush2.msra.mxu0 0.0
      %393 = vmatprep.subr.mxu0 0.0
      %394 = vmatpush2.msra.mxu0 0.0
      %395 = vmatprep.subr.mxu0 0.0
      %396 = vmatpush2.msra.mxu0 0.0
      %397 = vmatprep.subr.mxu0 0.0
      %398 = vmatpush2.msra.mxu0 0.0
      %399 = vmatprep.subr.mxu0 0.0
      %400 = vmatpush2.msra.mxu0 0.0
      %401 = vmatprep.subr.mxu0 0.0
      %402 = vmatpush2.msra.mxu0 0.0
      %403 = vmatprep.subr.mxu0 0.0
      %404 = vmatpush2.msra.mxu0 0.0
      %405 = vmatprep.subr.mxu0 0.0
      %406 = vmatpush2.msra.mxu0 0.0
      %407 = vmatprep.subr.mxu0 0.0
      %408 = vmatpush2.msra.mxu0 0.0
      %409 = vmatprep.subr.mxu0 0.0
      %410 = vmatpush2.msra.mxu0 0.0
      %411 = vmatprep.subr.mxu0 0.0
      %412 = vmatpush2.msra.mxu0 0.0
      %413 = vmatprep.subr.mxu0 0.0
      %414 = vmatpush2.msra.mxu0 0.0
      %415 = vmatprep.subr.mxu0 0.0
      %416 = vmatpush2.msra.mxu0 0.0
      %417 = vmatprep.subr.mxu0 0.0
      %418 = vmatpush2.msra.mxu0 0.0
      %419 = vmatprep.subr.mxu0 0.0
      %420 = vmatpush2.msra.mxu0 0.0
      %421 = vmatprep.mubr.f32.mxu0 0.0
      %422 = vmatmul.mubr.f32.gmra.mxu0 %v237
      %v423 = vpop.f32.mrf.mxu0
      %v424 = vadd.f32 %v324, %v423
      %v425 = vpop.f32.mrf.mxu0
      %426 = vmatprep.mubr.f32.mxu0 0.0
      %427 = vmatmul.mubr.f32.gmra.mxu0 %v240
      %v428 = vpop.f32.mrf.mxu0
      %v429 = vadd.f32 %v329, %v428
      %v430 = vpop.f32.mrf.mxu0
      %431 = vmatprep.mubr.f32.mxu0 0.0
      %432 = vmatmul.mubr.f32.gmra.mxu0 %v243
      %v433 = vpop.f32.mrf.mxu0
      %v434 = vadd.f32 %v334, %v433
      %v435 = vpop.f32.mrf.mxu0
      %436 = vmatprep.mubr.f32.mxu0 0.0
      %437 = vmatmul.mubr.f32.gmra.mxu0 %v246
      %v438 = vpop.f32.mrf.mxu0
      %v439 = vadd.f32 %v339, %v438
      %v440 = vpop.f32.mrf.mxu0
      %441 = vmatprep.mubr.f32.mxu0 0.0
      %442 = vmatmul.mubr.f32.gmra.mxu0 %v249
      %v443 = vpop.f32.mrf.mxu0
      %v444 = vadd.f32 %v344, %v443
      %v445 = vpop.f32.mrf.mxu0
      %446 = vmatprep.mubr.f32.mxu0 0.0
      %447 = vmatmul.mubr.f32.gmra.mxu0 %v252
      %v448 = vpop.f32.mrf.mxu0
      %v449 = vadd.f32 %v349, %v448
      %v450 = vpop.f32.mrf.mxu0
      %451 = vmatprep.mubr.f32.mxu0 0.0
      %452 = vmatmul.mubr.f32.gmra.mxu0 %v255
      %v453 = vpop.f32.mrf.mxu0
      %v454 = vadd.f32 %v354, %v453
      %v455 = vpop.f32.mrf.mxu0
      %456 = vdwg.mxu0
      %v457 = vmax.f32 %v424, 0.0
      %v458 = vmax.f32 %v429, 0.0
      %v459 = vmax.f32 %v434, 0.0
      %v460 = vmax.f32 %v439, 0.0
      %v461 = vmax.f32 %v444, 0.0
      %v462 = vmax.f32 %v449, 0.0
      %v463 = vmax.f32 %v454, 0.0
      %s464 = scalar_lea.vmem %s165, 168
      %v465 = vld [vmem:[%s464] sm:$0xff]
      %v466 = vld [vmem:[%s464 + $0x8] sm:$0xff]
      %v467 = vld [vmem:[%s464 + $0x10] sm:$0xff]
      %v468 = vld [vmem:[%s464 + $0x18] sm:$0xff]
      %v469 = vld [vmem:[%s464 + $0x20] sm:$0xff]
      %v470 = vld [vmem:[%s464 + $0x28] sm:$0xff]
      %v471 = vld [vmem:[%s464 + $0x30] sm:$0xff]
      %v472 = vld [vmem:[%s464 + $0x38] sm:$0xff]
      %v473 = vld [vmem:[%s464 + $0x40] sm:$0xff]
      %v474 = vld [vmem:[%s464 + $0x48] sm:$0xff]
      %v475 = vld [vmem:[%s464 + $0x50] sm:$0xff]
      %v476 = vld [vmem:[%s464 + $0x58] sm:$0xff]
      %v477 = vld [vmem:[%s464 + $0x60] sm:$0xff]
      %v478 = vld [vmem:[%s464 + $0x68] sm:$0xff]
      %v479 = vld [vmem:[%s464 + $0x70] sm:$0xff]
      %v480 = vld [vmem:[%s464 + $0x78] sm:$0xff]
      %v481 = vld [vmem:[%s464 + $0x80] sm:$0xff]
      %v482 = vld [vmem:[%s464 + $0x88] sm:$0xff]
      %v483 = vld [vmem:[%s464 + $0x90] sm:$0x1]
      %v484 = vld [vmem:[%s464 + $0x98] sm:$0x1]
      %v485 = vld [vmem:[%s464 + $0xa0] sm:$0x1]
      %v487 = vsel %vm235, %v467, 0
      %v490 = vsel %vm235, %v470, 0
      %v493 = vsel %vm235, %v473, 0
      %v496 = vsel %vm235, %v476, 0
      %v499 = vsel %vm235, %v479, 0
      %v502 = vsel %vm235, %v482, 0
      %v505 = vsel %vm235, %v485, 0
      %507 = vmatprep.subr.mxu0 0.0
      %508 = vmatpush1.msra.mxu0 %v207
      %509 = vmatprep.subr.mxu0 0.0
      %510 = vmatpush1.msra.mxu0 %v206
      %511 = vmatprep.subr.mxu0 0.0
      %512 = vmatpush1.msra.mxu0 %v205
      %513 = vmatprep.subr.mxu0 0.0
      %514 = vmatpush1.msra.mxu0 %v204
      %515 = vmatprep.subr.mxu0 0.0
      %516 = vmatpush1.msra.mxu0 %v203
      %517 = vmatprep.subr.mxu0 0.0
      %518 = vmatpush1.msra.mxu0 %v202
      %519 = vmatprep.subr.mxu0 0.0
      %520 = vmatpush1.msra.mxu0 %v201
      %521 = vmatprep.subr.mxu0 0.0
      %522 = vmatpush1.msra.mxu0 %v200
      %523 = vmatprep.subr.mxu0 0.0
      %524 = vmatpush1.msra.mxu0 %v199
      %525 = vmatprep.subr.mxu0 0.0
      %526 = vmatpush1.msra.mxu0 %v198
      %527 = vmatprep.subr.mxu0 0.0
      %528 = vmatpush1.msra.mxu0 %v197
      %529 = vmatprep.subr.mxu0 0.0
      %530 = vmatpush1.msra.mxu0 %v196
      %531 = vmatprep.subr.mxu0 0.0
      %532 = vmatpush1.msra.mxu0 %v195
      %533 = vmatprep.subr.mxu0 0.0
      %534 = vmatpush1.msra.mxu0 %v194
      %535 = vmatprep.subr.mxu0 0.0
      %536 = vmatpush1.msra.mxu0 %v193
      %537 = vmatprep.subr.mxu0 0.0
      %538 = vmatpush1.msra.mxu0 %v192
      %539 = vmatprep.subr.mxu0 0.0
      %540 = vmatpush2.msra.mxu0 %v223
      %541 = vmatprep.subr.mxu0 0.0
      %542 = vmatpush2.msra.mxu0 %v222
      %543 = vmatprep.subr.mxu0 0.0
      %544 = vmatpush2.msra.mxu0 %v221
      %545 = vmatprep.subr.mxu0 0.0
      %546 = vmatpush2.msra.mxu0 %v220
      %547 = vmatprep.subr.mxu0 0.0
      %548 = vmatpush2.msra.mxu0 %v219
      %549 = vmatprep.subr.mxu0 0.0
      %550 = vmatpush2.msra.mxu0 %v218
      %551 = vmatprep.subr.mxu0 0.0
      %552 = vmatpush2.msra.mxu0 %v217
      %553 = vmatprep.subr.mxu0 0.0
      %554 = vmatpush2.msra.mxu0 %v216
      %555 = vmatprep.subr.mxu0 0.0
      %556 = vmatpush2.msra.mxu0 %v215
      %557 = vmatprep.subr.mxu0 0.0
      %558 = vmatpush2.msra.mxu0 %v214
      %559 = vmatprep.subr.mxu0 0.0
      %560 = vmatpush2.msra.mxu0 %v213
      %561 = vmatprep.subr.mxu0 0.0
      %562 = vmatpush2.msra.mxu0 %v212
      %563 = vmatprep.subr.mxu0 0.0
      %564 = vmatpush2.msra.mxu0 %v211
      %565 = vmatprep.subr.mxu0 0.0
      %566 = vmatpush2.msra.mxu0 %v210
      %567 = vmatprep.subr.mxu0 0.0
      %568 = vmatpush2.msra.mxu0 %v209
      %569 = vmatprep.subr.mxu0 0.0
      %570 = vmatpush2.msra.mxu0 %v208
      %571 = vmatprep.mubr.f32.mxu0 %v466
      %572 = vmatmul.mubr.f32.gmra.mxu0 %v465
      %v573 = vpop.f32.mrf.mxu0
      %v574 = vadd.f32 %v233, %v573
      %v575 = vpop.f32.mrf.mxu0
      %576 = vmatprep.mubr.f32.mxu0 %v469
      %577 = vmatmul.mubr.f32.gmra.mxu0 %v468
      %v578 = vpop.f32.mrf.mxu0
      %v579 = vadd.f32 %v233, %v578
      %v580 = vpop.f32.mrf.mxu0
      %581 = vmatprep.mubr.f32.mxu0 %v472
      %582 = vmatmul.mubr.f32.gmra.mxu0 %v471
      %v583 = vpop.f32.mrf.mxu0
      %v584 = vadd.f32 %v233, %v583
      %v585 = vpop.f32.mrf.mxu0
      %586 = vmatprep.mubr.f32.mxu0 %v475
      %587 = vmatmul.mubr.f32.gmra.mxu0 %v474
      %v588 = vpop.f32.mrf.mxu0
      %v589 = vadd.f32 %v233, %v588
      %v590 = vpop.f32.mrf.mxu0
      %591 = vmatprep.mubr.f32.mxu0 %v478
      %592 = vmatmul.mubr.f32.gmra.mxu0 %v477
      %v593 = vpop.f32.mrf.mxu0
      %v594 = vadd.f32 %v233, %v593
      %v595 = vpop.f32.mrf.mxu0
      %596 = vmatprep.mubr.f32.mxu0 %v481
      %597 = vmatmul.mubr.f32.gmra.mxu0 %v480
      %v598 = vpop.f32.mrf.mxu0
      %v599 = vadd.f32 %v233, %v598
      %v600 = vpop.f32.mrf.mxu0
      %601 = vmatprep.mubr.f32.mxu0 %v484
      %602 = vmatmul.mubr.f32.gmra.mxu0 %v483
      %v603 = vpop.f32.mrf.mxu0
      %v604 = vadd.f32 %v233, %v603
      %v605 = vpop.f32.mrf.mxu0
      %606 = vdwg.mxu0
      %607 = vmatprep.subr.mxu0 0.0
      %608 = vmatpush1.msra.mxu0 0.0
      %609 = vmatprep.subr.mxu0 0.0
      %610 = vmatpush1.msra.mxu0 0.0
      %611 = vmatprep.subr.mxu0 0.0
      %612 = vmatpush1.msra.mxu0 0.0
      %613 = vmatprep.subr.mxu0 0.0
      %614 = vmatpush1.msra.mxu0 0.0
      %615 = vmatprep.subr.mxu0 0.0
      %616 = vmatpush1.msra.mxu0 0.0
      %617 = vmatprep.subr.mxu0 0.0
      %618 = vmatpush1.msra.mxu0 0.0
      %619 = vmatprep.subr.mxu0 0.0
      %620 = vmatpush1.msra.mxu0 0.0
      %621 = vmatprep.subr.mxu0 0.0
      %622 = vmatpush1.msra.mxu0 0.0
      %623 = vmatprep.subr.mxu0 0.0
      %624 = vmatpush1.msra.mxu0 0.0
      %625 = vmatprep.subr.mxu0 0.0
      %626 = vmatpush1.msra.mxu0 0.0
      %627 = vmatprep.subr.mxu0 0.0
      %628 = vmatpush1.msra.mxu0 0.0
      %629 = vmatprep.subr.mxu0 0.0
      %630 = vmatpush1.msra.mxu0 0.0
      %631 = vmatprep.subr.mxu0 0.0
      %632 = vmatpush1.msra.mxu0 %v227
      %633 = vmatprep.subr.mxu0 0.0
      %634 = vmatpush1.msra.mxu0 %v226
      %635 = vmatprep.subr.mxu0 0.0
      %636 = vmatpush1.msra.mxu0 %v225
      %637 = vmatprep.subr.mxu0 0.0
      %638 = vmatpush1.msra.mxu0 %v224
      %639 = vmatprep.subr.mxu0 0.0
      %640 = vmatpush2.msra.mxu0 0.0
      %641 = vmatprep.subr.mxu0 0.0
      %642 = vmatpush2.msra.mxu0 0.0
      %643 = vmatprep.subr.mxu0 0.0
      %644 = vmatpush2.msra.mxu0 0.0
      %645 = vmatprep.subr.mxu0 0.0
      %646 = vmatpush2.msra.mxu0 0.0
      %647 = vmatprep.subr.mxu0 0.0
      %648 = vmatpush2.msra.mxu0 0.0
      %649 = vmatprep.subr.mxu0 0.0
      %650 = vmatpush2.msra.mxu0 0.0
      %651 = vmatprep.subr.mxu0 0.0
      %652 = vmatpush2.msra.mxu0 0.0
      %653 = vmatprep.subr.mxu0 0.0
      %654 = vmatpush2.msra.mxu0 0.0
      %655 = vmatprep.subr.mxu0 0.0
      %656 = vmatpush2.msra.mxu0 0.0
      %657 = vmatprep.subr.mxu0 0.0
      %658 = vmatpush2.msra.mxu0 0.0
      %659 = vmatprep.subr.mxu0 0.0
      %660 = vmatpush2.msra.mxu0 0.0
      %661 = vmatprep.subr.mxu0 0.0
      %662 = vmatpush2.msra.mxu0 0.0
      %663 = vmatprep.subr.mxu0 0.0
      %664 = vmatpush2.msra.mxu0 0.0
      %665 = vmatprep.subr.mxu0 0.0
      %666 = vmatpush2.msra.mxu0 0.0
      %667 = vmatprep.subr.mxu0 0.0
      %668 = vmatpush2.msra.mxu0 0.0
      %669 = vmatprep.subr.mxu0 0.0
      %670 = vmatpush2.msra.mxu0 0.0
      %671 = vmatprep.mubr.f32.mxu0 0.0
      %672 = vmatmul.mubr.f32.gmra.mxu0 %v487
      %v673 = vpop.f32.mrf.mxu0
      %v674 = vadd.f32 %v574, %v673
      %v675 = vpop.f32.mrf.mxu0
      %676 = vmatprep.mubr.f32.mxu0 0.0
      %677 = vmatmul.mubr.f32.gmra.mxu0 %v490
      %v678 = vpop.f32.mrf.mxu0
      %v679 = vadd.f32 %v579, %v678
      %v680 = vpop.f32.mrf.mxu0
      %681 = vmatprep.mubr.f32.mxu0 0.0
      %682 = vmatmul.mubr.f32.gmra.mxu0 %v493
      %v683 = vpop.f32.mrf.mxu0
      %v684 = vadd.f32 %v584, %v683
      %v685 = vpop.f32.mrf.mxu0
      %686 = vmatprep.mubr.f32.mxu0 0.0
      %687 = vmatmul.mubr.f32.gmra.mxu0 %v496
      %v688 = vpop.f32.mrf.mxu0
      %v689 = vadd.f32 %v589, %v688
      %v690 = vpop.f32.mrf.mxu0
      %691 = vmatprep.mubr.f32.mxu0 0.0
      %692 = vmatmul.mubr.f32.gmra.mxu0 %v499
      %v693 = vpop.f32.mrf.mxu0
      %v694 = vadd.f32 %v594, %v693
      %v695 = vpop.f32.mrf.mxu0
      %696 = vmatprep.mubr.f32.mxu0 0.0
      %697 = vmatmul.mubr.f32.gmra.mxu0 %v502
      %v698 = vpop.f32.mrf.mxu0
      %v699 = vadd.f32 %v599, %v698
      %v700 = vpop.f32.mrf.mxu0
      %701 = vmatprep.mubr.f32.mxu0 0.0
      %702 = vmatmul.mubr.f32.gmra.mxu0 %v505
      %v703 = vpop.f32.mrf.mxu0
      %v704 = vadd.f32 %v604, %v703
      %v705 = vpop.f32.mrf.mxu0
      %706 = vdwg.mxu0
      %v707 = vmax.f32 %v674, 0.0
      %v708 = vmax.f32 %v679, 0.0
      %v709 = vmax.f32 %v684, 0.0
      %v710 = vmax.f32 %v689, 0.0
      %v711 = vmax.f32 %v694, 0.0
      %v712 = vmax.f32 %v699, 0.0
      %v713 = vmax.f32 %v704, 0.0
      %v714 = vmax.f32 %v457, %v707
      %v715 = vmax.f32 %v458, %v708
      %v716 = vmax.f32 %v459, %v709
      %v717 = vmax.f32 %v460, %v710
      %v718 = vmax.f32 %v461, %v711
      %v719 = vmax.f32 %v462, %v712
      %v720 = vmax.f32 %v463, %v713
      %s721 = scalar_lea.vmem %s165, 336
      %v722 = vld [vmem:[%s721] sm:$0xff]
      %v723 = vld [vmem:[%s721 + $0x8] sm:$0xff]
      %v724 = vld [vmem:[%s721 + $0x10] sm:$0xff]
      %v725 = vld [vmem:[%s721 + $0x18] sm:$0xff]
      %v726 = vld [vmem:[%s721 + $0x20] sm:$0xff]
      %v727 = vld [vmem:[%s721 + $0x28] sm:$0xff]
      %v728 = vld [vmem:[%s721 + $0x30] sm:$0xff]
      %v729 = vld [vmem:[%s721 + $0x38] sm:$0xff]
      %v730 = vld [vmem:[%s721 + $0x40] sm:$0xff]
      %v731 = vld [vmem:[%s721 + $0x48] sm:$0xff]
      %v732 = vld [vmem:[%s721 + $0x50] sm:$0xff]
      %v733 = vld [vmem:[%s721 + $0x58] sm:$0xff]
      %v734 = vld [vmem:[%s721 + $0x60] sm:$0xff]
      %v735 = vld [vmem:[%s721 + $0x68] sm:$0xff]
      %v736 = vld [vmem:[%s721 + $0x70] sm:$0xff]
      %v737 = vld [vmem:[%s721 + $0x78] sm:$0xff]
      %v738 = vld [vmem:[%s721 + $0x80] sm:$0xff]
      %v739 = vld [vmem:[%s721 + $0x88] sm:$0xff]
      %v740 = vld [vmem:[%s721 + $0x90] sm:$0x1]
      %v741 = vld [vmem:[%s721 + $0x98] sm:$0x1]
      %v742 = vld [vmem:[%s721 + $0xa0] sm:$0x1]
      %v744 = vsel %vm235, %v724, 0
      %v747 = vsel %vm235, %v727, 0
      %v750 = vsel %vm235, %v730, 0
      %v753 = vsel %vm235, %v733, 0
      %v756 = vsel %vm235, %v736, 0
      %v759 = vsel %vm235, %v739, 0
      %v762 = vsel %vm235, %v742, 0
      %764 = vmatprep.subr.mxu0 0.0
      %765 = vmatpush1.msra.mxu0 %v207
      %766 = vmatprep.subr.mxu0 0.0
      %767 = vmatpush1.msra.mxu0 %v206
      %768 = vmatprep.subr.mxu0 0.0
      %769 = vmatpush1.msra.mxu0 %v205
      %770 = vmatprep.subr.mxu0 0.0
      %771 = vmatpush1.msra.mxu0 %v204
      %772 = vmatprep.subr.mxu0 0.0
      %773 = vmatpush1.msra.mxu0 %v203
      %774 = vmatprep.subr.mxu0 0.0
      %775 = vmatpush1.msra.mxu0 %v202
      %776 = vmatprep.subr.mxu0 0.0
      %777 = vmatpush1.msra.mxu0 %v201
      %778 = vmatprep.subr.mxu0 0.0
      %779 = vmatpush1.msra.mxu0 %v200
      %780 = vmatprep.subr.mxu0 0.0
      %781 = vmatpush1.msra.mxu0 %v199
      %782 = vmatprep.subr.mxu0 0.0
      %783 = vmatpush1.msra.mxu0 %v198
      %784 = vmatprep.subr.mxu0 0.0
      %785 = vmatpush1.msra.mxu0 %v197
      %786 = vmatprep.subr.mxu0 0.0
      %787 = vmatpush1.msra.mxu0 %v196
      %788 = vmatprep.subr.mxu0 0.0
      %789 = vmatpush1.msra.mxu0 %v195
      %790 = vmatprep.subr.mxu0 0.0
      %791 = vmatpush1.msra.mxu0 %v194
      %792 = vmatprep.subr.mxu0 0.0
      %793 = vmatpush1.msra.mxu0 %v193
      %794 = vmatprep.subr.mxu0 0.0
      %795 = vmatpush1.msra.mxu0 %v192
      %796 = vmatprep.subr.mxu0 0.0
      %797 = vmatpush2.msra.mxu0 %v223
      %798 = vmatprep.subr.mxu0 0.0
      %799 = vmatpush2.msra.mxu0 %v222
      %800 = vmatprep.subr.mxu0 0.0
      %801 = vmatpush2.msra.mxu0 %v221
      %802 = vmatprep.subr.mxu0 0.0
      %803 = vmatpush2.msra.mxu0 %v220
      %804 = vmatprep.subr.mxu0 0.0
      %805 = vmatpush2.msra.mxu0 %v219
      %806 = vmatprep.subr.mxu0 0.0
      %807 = vmatpush2.msra.mxu0 %v218
      %808 = vmatprep.subr.mxu0 0.0
      %809 = vmatpush2.msra.mxu0 %v217
      %810 = vmatprep.subr.mxu0 0.0
      %811 = vmatpush2.msra.mxu0 %v216
      %812 = vmatprep.subr.mxu0 0.0
      %813 = vmatpush2.msra.mxu0 %v215
      %814 = vmatprep.subr.mxu0 0.0
      %815 = vmatpush2.msra.mxu0 %v214
      %816 = vmatprep.subr.mxu0 0.0
      %817 = vmatpush2.msra.mxu0 %v213
      %818 = vmatprep.subr.mxu0 0.0
      %819 = vmatpush2.msra.mxu0 %v212
      %820 = vmatprep.subr.mxu0 0.0
      %821 = vmatpush2.msra.mxu0 %v211
      %822 = vmatprep.subr.mxu0 0.0
      %823 = vmatpush2.msra.mxu0 %v210
      %824 = vmatprep.subr.mxu0 0.0
      %825 = vmatpush2.msra.mxu0 %v209
      %826 = vmatprep.subr.mxu0 0.0
      %827 = vmatpush2.msra.mxu0 %v208
      %828 = vmatprep.mubr.f32.mxu0 %v723
      %829 = vmatmul.mubr.f32.gmra.mxu0 %v722
      %v830 = vpop.f32.mrf.mxu0
      %v831 = vadd.f32 %v233, %v830
      %v832 = vpop.f32.mrf.mxu0
      %833 = vmatprep.mubr.f32.mxu0 %v726
      %834 = vmatmul.mubr.f32.gmra.mxu0 %v725
      %v835 = vpop.f32.mrf.mxu0
      %v836 = vadd.f32 %v233, %v835
      %v837 = vpop.f32.mrf.mxu0
      %838 = vmatprep.mubr.f32.mxu0 %v729
      %839 = vmatmul.mubr.f32.gmra.mxu0 %v728
      %v840 = vpop.f32.mrf.mxu0
      %v841 = vadd.f32 %v233, %v840
      %v842 = vpop.f32.mrf.mxu0
      %843 = vmatprep.mubr.f32.mxu0 %v732
      %844 = vmatmul.mubr.f32.gmra.mxu0 %v731
      %v845 = vpop.f32.mrf.mxu0
      %v846 = vadd.f32 %v233, %v845
      %v847 = vpop.f32.mrf.mxu0
      %848 = vmatprep.mubr.f32.mxu0 %v735
      %849 = vmatmul.mubr.f32.gmra.mxu0 %v734
      %v850 = vpop.f32.mrf.mxu0
      %v851 = vadd.f32 %v233, %v850
      %v852 = vpop.f32.mrf.mxu0
      %853 = vmatprep.mubr.f32.mxu0 %v738
      %854 = vmatmul.mubr.f32.gmra.mxu0 %v737
      %v855 = vpop.f32.mrf.mxu0
      %v856 = vadd.f32 %v233, %v855
      %v857 = vpop.f32.mrf.mxu0
      %858 = vmatprep.mubr.f32.mxu0 %v741
      %859 = vmatmul.mubr.f32.gmra.mxu0 %v740
      %v860 = vpop.f32.mrf.mxu0
      %v861 = vadd.f32 %v233, %v860
      %v862 = vpop.f32.mrf.mxu0
      %863 = vdwg.mxu0
      %864 = vmatprep.subr.mxu0 0.0
      %865 = vmatpush1.msra.mxu0 0.0
      %866 = vmatprep.subr.mxu0 0.0
      %867 = vmatpush1.msra.mxu0 0.0
      %868 = vmatprep.subr.mxu0 0.0
      %869 = vmatpush1.msra.mxu0 0.0
      %870 = vmatprep.subr.mxu0 0.0
      %871 = vmatpush1.msra.mxu0 0.0
      %872 = vmatprep.subr.mxu0 0.0
      %873 = vmatpush1.msra.mxu0 0.0
      %874 = vmatprep.subr.mxu0 0.0
      %875 = vmatpush1.msra.mxu0 0.0
      %876 = vmatprep.subr.mxu0 0.0
      %877 = vmatpush1.msra.mxu0 0.0
      %878 = vmatprep.subr.mxu0 0.0
      %879 = vmatpush1.msra.mxu0 0.0
      %880 = vmatprep.subr.mxu0 0.0
      %881 = vmatpush1.msra.mxu0 0.0
      %882 = vmatprep.subr.mxu0 0.0
      %883 = vmatpush1.msra.mxu0 0.0
      %884 = vmatprep.subr.mxu0 0.0
      %885 = vmatpush1.msra.mxu0 0.0
      %886 = vmatprep.subr.mxu0 0.0
      %887 = vmatpush1.msra.mxu0 0.0
      %888 = vmatprep.subr.mxu0 0.0
      %889 = vmatpush1.msra.mxu0 %v227
      %890 = vmatprep.subr.mxu0 0.0
      %891 = vmatpush1.msra.mxu0 %v226
      %892 = vmatprep.subr.mxu0 0.0
      %893 = vmatpush1.msra.mxu0 %v225
      %894 = vmatprep.subr.mxu0 0.0
      %895 = vmatpush1.msra.mxu0 %v224
      %896 = vmatprep.subr.mxu0 0.0
      %897 = vmatpush2.msra.mxu0 0.0
      %898 = vmatprep.subr.mxu0 0.0
      %899 = vmatpush2.msra.mxu0 0.0
      %900 = vmatprep.subr.mxu0 0.0
      %901 = vmatpush2.msra.mxu0 0.0
      %902 = vmatprep.subr.mxu0 0.0
      %903 = vmatpush2.msra.mxu0 0.0
      %904 = vmatprep.subr.mxu0 0.0
      %905 = vmatpush2.msra.mxu0 0.0
      %906 = vmatprep.subr.mxu0 0.0
      %907 = vmatpush2.msra.mxu0 0.0
      %908 = vmatprep.subr.mxu0 0.0
      %909 = vmatpush2.msra.mxu0 0.0
      %910 = vmatprep.subr.mxu0 0.0
      %911 = vmatpush2.msra.mxu0 0.0
      %912 = vmatprep.subr.mxu0 0.0
      %913 = vmatpush2.msra.mxu0 0.0
      %914 = vmatprep.subr.mxu0 0.0
      %915 = vmatpush2.msra.mxu0 0.0
      %916 = vmatprep.subr.mxu0 0.0
      %917 = vmatpush2.msra.mxu0 0.0
      %918 = vmatprep.subr.mxu0 0.0
      %919 = vmatpush2.msra.mxu0 0.0
      %920 = vmatprep.subr.mxu0 0.0
      %921 = vmatpush2.msra.mxu0 0.0
      %922 = vmatprep.subr.mxu0 0.0
      %923 = vmatpush2.msra.mxu0 0.0
      %924 = vmatprep.subr.mxu0 0.0
      %925 = vmatpush2.msra.mxu0 0.0
      %926 = vmatprep.subr.mxu0 0.0
      %927 = vmatpush2.msra.mxu0 0.0
      %928 = vmatprep.mubr.f32.mxu0 0.0
      %929 = vmatmul.mubr.f32.gmra.mxu0 %v744
      %v930 = vpop.f32.mrf.mxu0
      %v931 = vadd.f32 %v831, %v930
      %v932 = vpop.f32.mrf.mxu0
      %933 = vmatprep.mubr.f32.mxu0 0.0
      %934 = vmatmul.mubr.f32.gmra.mxu0 %v747
      %v935 = vpop.f32.mrf.mxu0
      %v936 = vadd.f32 %v836, %v935
      %v937 = vpop.f32.mrf.mxu0
      %938 = vmatprep.mubr.f32.mxu0 0.0
      %939 = vmatmul.mubr.f32.gmra.mxu0 %v750
      %v940 = vpop.f32.mrf.mxu0
      %v941 = vadd.f32 %v841, %v940
      %v942 = vpop.f32.mrf.mxu0
      %943 = vmatprep.mubr.f32.mxu0 0.0
      %944 = vmatmul.mubr.f32.gmra.mxu0 %v753
      %v945 = vpop.f32.mrf.mxu0
      %v946 = vadd.f32 %v846, %v945
      %v947 = vpop.f32.mrf.mxu0
      %948 = vmatprep.mubr.f32.mxu0 0.0
      %949 = vmatmul.mubr.f32.gmra.mxu0 %v756
      %v950 = vpop.f32.mrf.mxu0
      %v951 = vadd.f32 %v851, %v950
      %v952 = vpop.f32.mrf.mxu0
      %953 = vmatprep.mubr.f32.mxu0 0.0
      %954 = vmatmul.mubr.f32.gmra.mxu0 %v759
      %v955 = vpop.f32.mrf.mxu0
      %v956 = vadd.f32 %v856, %v955
      %v957 = vpop.f32.mrf.mxu0
      %958 = vmatprep.mubr.f32.mxu0 0.0
      %959 = vmatmul.mubr.f32.gmra.mxu0 %v762
      %v960 = vpop.f32.mrf.mxu0
      %v961 = vadd.f32 %v861, %v960
      %v962 = vpop.f32.mrf.mxu0
      %963 = vdwg.mxu0
      %v964 = vmax.f32 %v931, 0.0
      %v965 = vmax.f32 %v936, 0.0
      %v966 = vmax.f32 %v941, 0.0
      %v967 = vmax.f32 %v946, 0.0
      %v968 = vmax.f32 %v951, 0.0
      %v969 = vmax.f32 %v956, 0.0
      %v970 = vmax.f32 %v961, 0.0
      %s971 = scalar_lea.vmem %s165, 504
      %v972 = vld [vmem:[%s971] sm:$0xff]
      %v973 = vld [vmem:[%s971 + $0x8] sm:$0xff]
      %v974 = vld [vmem:[%s971 + $0x10] sm:$0xff]
      %v975 = vld [vmem:[%s971 + $0x18] sm:$0xff]
      %v976 = vld [vmem:[%s971 + $0x20] sm:$0xff]
      %v977 = vld [vmem:[%s971 + $0x28] sm:$0xff]
      %v978 = vld [vmem:[%s971 + $0x30] sm:$0xff]
      %v979 = vld [vmem:[%s971 + $0x38] sm:$0xff]
      %v980 = vld [vmem:[%s971 + $0x40] sm:$0xff]
      %v981 = vld [vmem:[%s971 + $0x48] sm:$0xff]
      %v982 = vld [vmem:[%s971 + $0x50] sm:$0xff]
      %v983 = vld [vmem:[%s971 + $0x58] sm:$0xff]
      %v984 = vld [vmem:[%s971 + $0x60] sm:$0xff]
      %v985 = vld [vmem:[%s971 + $0x68] sm:$0xff]
      %v986 = vld [vmem:[%s971 + $0x70] sm:$0xff]
      %v987 = vld [vmem:[%s971 + $0x78] sm:$0xff]
      %v988 = vld [vmem:[%s971 + $0x80] sm:$0xff]
      %v989 = vld [vmem:[%s971 + $0x88] sm:$0xff]
      %v990 = vld [vmem:[%s971 + $0x90] sm:$0x1]
      %v991 = vld [vmem:[%s971 + $0x98] sm:$0x1]
      %v992 = vld [vmem:[%s971 + $0xa0] sm:$0x1]
      %v994 = vsel %vm235, %v974, 0
      %v997 = vsel %vm235, %v977, 0
      %v1000 = vsel %vm235, %v980, 0
      %v1003 = vsel %vm235, %v983, 0
      %v1006 = vsel %vm235, %v986, 0
      %v1009 = vsel %vm235, %v989, 0
      %v1012 = vsel %vm235, %v992, 0
      %1014 = vmatprep.subr.mxu0 0.0
      %1015 = vmatpush1.msra.mxu0 %v207
      %1016 = vmatprep.subr.mxu0 0.0
      %1017 = vmatpush1.msra.mxu0 %v206
      %1018 = vmatprep.subr.mxu0 0.0
      %1019 = vmatpush1.msra.mxu0 %v205
      %1020 = vmatprep.subr.mxu0 0.0
      %1021 = vmatpush1.msra.mxu0 %v204
      %1022 = vmatprep.subr.mxu0 0.0
      %1023 = vmatpush1.msra.mxu0 %v203
      %1024 = vmatprep.subr.mxu0 0.0
      %1025 = vmatpush1.msra.mxu0 %v202
      %1026 = vmatprep.subr.mxu0 0.0
      %1027 = vmatpush1.msra.mxu0 %v201
      %1028 = vmatprep.subr.mxu0 0.0
      %1029 = vmatpush1.msra.mxu0 %v200
      %1030 = vmatprep.subr.mxu0 0.0
      %1031 = vmatpush1.msra.mxu0 %v199
      %1032 = vmatprep.subr.mxu0 0.0
      %1033 = vmatpush1.msra.mxu0 %v198
      %1034 = vmatprep.subr.mxu0 0.0
      %1035 = vmatpush1.msra.mxu0 %v197
      %1036 = vmatprep.subr.mxu0 0.0
      %1037 = vmatpush1.msra.mxu0 %v196
      %1038 = vmatprep.subr.mxu0 0.0
      %1039 = vmatpush1.msra.mxu0 %v195
      %1040 = vmatprep.subr.mxu0 0.0
      %1041 = vmatpush1.msra.mxu0 %v194
      %1042 = vmatprep.subr.mxu0 0.0
      %1043 = vmatpush1.msra.mxu0 %v193
      %1044 = vmatprep.subr.mxu0 0.0
      %1045 = vmatpush1.msra.mxu0 %v192
      %1046 = vmatprep.subr.mxu0 0.0
      %1047 = vmatpush2.msra.mxu0 %v223
      %1048 = vmatprep.subr.mxu0 0.0
      %1049 = vmatpush2.msra.mxu0 %v222
      %1050 = vmatprep.subr.mxu0 0.0
      %1051 = vmatpush2.msra.mxu0 %v221
      %1052 = vmatprep.subr.mxu0 0.0
      %1053 = vmatpush2.msra.mxu0 %v220
      %1054 = vmatprep.subr.mxu0 0.0
      %1055 = vmatpush2.msra.mxu0 %v219
      %1056 = vmatprep.subr.mxu0 0.0
      %1057 = vmatpush2.msra.mxu0 %v218
      %1058 = vmatprep.subr.mxu0 0.0
      %1059 = vmatpush2.msra.mxu0 %v217
      %1060 = vmatprep.subr.mxu0 0.0
      %1061 = vmatpush2.msra.mxu0 %v216
      %1062 = vmatprep.subr.mxu0 0.0
      %1063 = vmatpush2.msra.mxu0 %v215
      %1064 = vmatprep.subr.mxu0 0.0
      %1065 = vmatpush2.msra.mxu0 %v214
      %1066 = vmatprep.subr.mxu0 0.0
      %1067 = vmatpush2.msra.mxu0 %v213
      %1068 = vmatprep.subr.mxu0 0.0
      %1069 = vmatpush2.msra.mxu0 %v212
      %1070 = vmatprep.subr.mxu0 0.0
      %1071 = vmatpush2.msra.mxu0 %v211
      %1072 = vmatprep.subr.mxu0 0.0
      %1073 = vmatpush2.msra.mxu0 %v210
      %1074 = vmatprep.subr.mxu0 0.0
      %1075 = vmatpush2.msra.mxu0 %v209
      %1076 = vmatprep.subr.mxu0 0.0
      %1077 = vmatpush2.msra.mxu0 %v208
      %1078 = vmatprep.mubr.f32.mxu0 %v973
      %1079 = vmatmul.mubr.f32.gmra.mxu0 %v972
      %v1080 = vpop.f32.mrf.mxu0
      %v1081 = vadd.f32 %v233, %v1080
      %v1082 = vpop.f32.mrf.mxu0
      %1083 = vmatprep.mubr.f32.mxu0 %v976
      %1084 = vmatmul.mubr.f32.gmra.mxu0 %v975
      %v1085 = vpop.f32.mrf.mxu0
      %v1086 = vadd.f32 %v233, %v1085
      %v1087 = vpop.f32.mrf.mxu0
      %1088 = vmatprep.mubr.f32.mxu0 %v979
      %1089 = vmatmul.mubr.f32.gmra.mxu0 %v978
      %v1090 = vpop.f32.mrf.mxu0
      %v1091 = vadd.f32 %v233, %v1090
      %v1092 = vpop.f32.mrf.mxu0
      %1093 = vmatprep.mubr.f32.mxu0 %v982
      %1094 = vmatmul.mubr.f32.gmra.mxu0 %v981
      %v1095 = vpop.f32.mrf.mxu0
      %v1096 = vadd.f32 %v233, %v1095
      %v1097 = vpop.f32.mrf.mxu0
      %1098 = vmatprep.mubr.f32.mxu0 %v985
      %1099 = vmatmul.mubr.f32.gmra.mxu0 %v984
      %v1100 = vpop.f32.mrf.mxu0
      %v1101 = vadd.f32 %v233, %v1100
      %v1102 = vpop.f32.mrf.mxu0
      %1103 = vmatprep.mubr.f32.mxu0 %v988
      %1104 = vmatmul.mubr.f32.gmra.mxu0 %v987
      %v1105 = vpop.f32.mrf.mxu0
      %v1106 = vadd.f32 %v233, %v1105
      %v1107 = vpop.f32.mrf.mxu0
      %1108 = vmatprep.mubr.f32.mxu0 %v991
      %1109 = vmatmul.mubr.f32.gmra.mxu0 %v990
      %v1110 = vpop.f32.mrf.mxu0
      %v1111 = vadd.f32 %v233, %v1110
      %v1112 = vpop.f32.mrf.mxu0
      %1113 = vdwg.mxu0
      %1114 = vmatprep.subr.mxu0 0.0
      %1115 = vmatpush1.msra.mxu0 0.0
      %1116 = vmatprep.subr.mxu0 0.0
      %1117 = vmatpush1.msra.mxu0 0.0
      %1118 = vmatprep.subr.mxu0 0.0
      %1119 = vmatpush1.msra.mxu0 0.0
      %1120 = vmatprep.subr.mxu0 0.0
      %1121 = vmatpush1.msra.mxu0 0.0
      %1122 = vmatprep.subr.mxu0 0.0
      %1123 = vmatpush1.msra.mxu0 0.0
      %1124 = vmatprep.subr.mxu0 0.0
      %1125 = vmatpush1.msra.mxu0 0.0
      %1126 = vmatprep.subr.mxu0 0.0
      %1127 = vmatpush1.msra.mxu0 0.0
      %1128 = vmatprep.subr.mxu0 0.0
      %1129 = vmatpush1.msra.mxu0 0.0
      %1130 = vmatprep.subr.mxu0 0.0
      %1131 = vmatpush1.msra.mxu0 0.0
      %1132 = vmatprep.subr.mxu0 0.0
      %1133 = vmatpush1.msra.mxu0 0.0
      %1134 = vmatprep.subr.mxu0 0.0
      %1135 = vmatpush1.msra.mxu0 0.0
      %1136 = vmatprep.subr.mxu0 0.0
      %1137 = vmatpush1.msra.mxu0 0.0
      %1138 = vmatprep.subr.mxu0 0.0
      %1139 = vmatpush1.msra.mxu0 %v227
      %1140 = vmatprep.subr.mxu0 0.0
      %1141 = vmatpush1.msra.mxu0 %v226
      %1142 = vmatprep.subr.mxu0 0.0
      %1143 = vmatpush1.msra.mxu0 %v225
      %1144 = vmatprep.subr.mxu0 0.0
      %1145 = vmatpush1.msra.mxu0 %v224
      %1146 = vmatprep.subr.mxu0 0.0
      %1147 = vmatpush2.msra.mxu0 0.0
      %1148 = vmatprep.subr.mxu0 0.0
      %1149 = vmatpush2.msra.mxu0 0.0
      %1150 = vmatprep.subr.mxu0 0.0
      %1151 = vmatpush2.msra.mxu0 0.0
      %1152 = vmatprep.subr.mxu0 0.0
      %1153 = vmatpush2.msra.mxu0 0.0
      %1154 = vmatprep.subr.mxu0 0.0
      %1155 = vmatpush2.msra.mxu0 0.0
      %1156 = vmatprep.subr.mxu0 0.0
      %1157 = vmatpush2.msra.mxu0 0.0
      %1158 = vmatprep.subr.mxu0 0.0
      %1159 = vmatpush2.msra.mxu0 0.0
      %1160 = vmatprep.subr.mxu0 0.0
      %1161 = vmatpush2.msra.mxu0 0.0
      %1162 = vmatprep.subr.mxu0 0.0
      %1163 = vmatpush2.msra.mxu0 0.0
      %1164 = vmatprep.subr.mxu0 0.0
      %1165 = vmatpush2.msra.mxu0 0.0
      %1166 = vmatprep.subr.mxu0 0.0
      %1167 = vmatpush2.msra.mxu0 0.0
      %1168 = vmatprep.subr.mxu0 0.0
      %1169 = vmatpush2.msra.mxu0 0.0
      %1170 = vmatprep.subr.mxu0 0.0
      %1171 = vmatpush2.msra.mxu0 0.0
      %1172 = vmatprep.subr.mxu0 0.0
      %1173 = vmatpush2.msra.mxu0 0.0
      %1174 = vmatprep.subr.mxu0 0.0
      %1175 = vmatpush2.msra.mxu0 0.0
      %1176 = vmatprep.subr.mxu0 0.0
      %1177 = vmatpush2.msra.mxu0 0.0
      %1178 = vmatprep.mubr.f32.mxu0 0.0
      %1179 = vmatmul.mubr.f32.gmra.mxu0 %v994
      %v1180 = vpop.f32.mrf.mxu0
      %v1181 = vadd.f32 %v1081, %v1180
      %v1182 = vpop.f32.mrf.mxu0
      %1183 = vmatprep.mubr.f32.mxu0 0.0
      %1184 = vmatmul.mubr.f32.gmra.mxu0 %v997
      %v1185 = vpop.f32.mrf.mxu0
      %v1186 = vadd.f32 %v1086, %v1185
      %v1187 = vpop.f32.mrf.mxu0
      %1188 = vmatprep.mubr.f32.mxu0 0.0
      %1189 = vmatmul.mubr.f32.gmra.mxu0 %v1000
      %v1190 = vpop.f32.mrf.mxu0
      %v1191 = vadd.f32 %v1091, %v1190
      %v1192 = vpop.f32.mrf.mxu0
      %1193 = vmatprep.mubr.f32.mxu0 0.0
      %1194 = vmatmul.mubr.f32.gmra.mxu0 %v1003
      %v1195 = vpop.f32.mrf.mxu0
      %v1196 = vadd.f32 %v1096, %v1195
      %v1197 = vpop.f32.mrf.mxu0
      %1198 = vmatprep.mubr.f32.mxu0 0.0
      %1199 = vmatmul.mubr.f32.gmra.mxu0 %v1006
      %v1200 = vpop.f32.mrf.mxu0
      %v1201 = vadd.f32 %v1101, %v1200
      %v1202 = vpop.f32.mrf.mxu0
      %1203 = vmatprep.mubr.f32.mxu0 0.0
      %1204 = vmatmul.mubr.f32.gmra.mxu0 %v1009
      %v1205 = vpop.f32.mrf.mxu0
      %v1206 = vadd.f32 %v1106, %v1205
      %v1207 = vpop.f32.mrf.mxu0
      %1208 = vmatprep.mubr.f32.mxu0 0.0
      %1209 = vmatmul.mubr.f32.gmra.mxu0 %v1012
      %v1210 = vpop.f32.mrf.mxu0
      %v1211 = vadd.f32 %v1111, %v1210
      %v1212 = vpop.f32.mrf.mxu0
      %1213 = vdwg.mxu0
      %v1214 = vmax.f32 %v1181, 0.0
      %v1215 = vmax.f32 %v1186, 0.0
      %v1216 = vmax.f32 %v1191, 0.0
      %v1217 = vmax.f32 %v1196, 0.0
      %v1218 = vmax.f32 %v1201, 0.0
      %v1219 = vmax.f32 %v1206, 0.0
      %v1220 = vmax.f32 %v1211, 0.0
      %v1221 = vmax.f32 %v964, %v1214
      %v1222 = vmax.f32 %v965, %v1215
      %v1223 = vmax.f32 %v966, %v1216
      %v1224 = vmax.f32 %v967, %v1217
      %v1225 = vmax.f32 %v968, %v1218
      %v1226 = vmax.f32 %v969, %v1219
      %v1227 = vmax.f32 %v970, %v1220
      %v1228 = vmax.f32 %v714, %v1221
      %v1229 = vmax.f32 %v715, %v1222
      %v1230 = vmax.f32 %v716, %v1223
      %v1231 = vmax.f32 %v717, %v1224
      %v1232 = vmax.f32 %v718, %v1225
      %v1233 = vmax.f32 %v719, %v1226
      %v1234 = vmax.f32 %v720, %v1227
      %vm1235 = vcmask 523264
      %1236 = vst.msk [vmem:[%s170] sm:$0xff] %vm1235, %v1228
      %1237 = vst.msk [vmem:[%s170 + $0x8] sm:$0xff] %vm1235, %v1229
      %1238 = vst.msk [vmem:[%s170 + $0x10] sm:$0xff] %vm1235, %v1230
      %1239 = vst.msk [vmem:[%s170 + $0x18] sm:$0xff] %vm1235, %v1231
      %1240 = vst.msk [vmem:[%s170 + $0x20] sm:$0xff] %vm1235, %v1232
      %1241 = vst.msk [vmem:[%s170 + $0x28] sm:$0xff] %vm1235, %v1233
      %vm1242 = vcmask 516096
      %1243 = vst.msk [vmem:[%s170 + $0x30] sm:$0x1] %vm1242, %v1234
      %p1244 = scmp.lt.s32.totalorder %s14, 1
      %s1245 = scalar_select %p1244, %s14, 1
      %s1246 = smul.addr %s1245, 7
      %s1247 = smul.addr %s1246, 8
      %s1248 = scalar_lea.vmem %s3, %s1247
      // Predicated region
      $region33: #{mnist_classifier_forward.4} parent=31 // pred_check
        %p1249 = pneg %p100
      $region34: #{mnist_classifier_forward.4} parent=31 // pred_check_branch
        %1251 = sbr.rel (%p1249) target = $region36
      $region35: #{mnist_classifier_forward.4} parent=31 // pred_region
        _
      $region36: #{mnist_classifier_forward.4} parent=31 // pred_fallthru
        _
    $region32: #{mnist_classifier_forward.4} parent=5 // pred_fallthru
      _
    %p1252 = scmp.le.s32.totalorder 2, %s9
    // Predicated region
    $region37: #{mnist_classifier_forward.4} parent=5 // pred_check
      %p1253 = pneg %p1252
    $region38: #{mnist_classifier_forward.4} parent=5 // pred_check_branch
      %1255 = sbr.rel (%p1253) target = $region40
    $region39: #{mnist_classifier_forward.4} parent=5 // pred_region
      %s1256 = ssub.s32 %s9, 2
      // Predicated region
      $region41: #{mnist_classifier_forward.4} parent=39 // pred_check
        %p1257 = pneg %p106
      $region42: #{mnist_classifier_forward.4} parent=39 // pred_check_branch
        %1259 = sbr.rel (%p1257) target = $region44
      $region43: #{mnist_classifier_forward.4} parent=39 // pred_region
        %p1260 = scmp.lt.s32.totalorder %s15, 1
        %s1261 = scalar_select %p1260, %s15, 1
        %s1262 = smul.addr %s1261, 7
        %s1263 = smul.addr %s1262, 8
        %s1264 = scalar_lea.vmem %s3, %s1263
      $region44: #{mnist_classifier_forward.4} parent=39 // pred_fallthru
        _
    $region40: #{mnist_classifier_forward.4} parent=5 // pred_fallthru
      _
  $region6: #{mnist_classifier_forward.4} parent=0 // loop_footer
    %s13 = sadd.s32 1, %s9
  $region7: #{mnist_classifier_forward.4} parent=0 // loop_footer_branch
    %8 = sbr.rel target = $region3
  $region8: #{mnist_classifier_forward.4} parent=0 // loop_exit
    _

// kernel: mnist_classifier_forward.5
$region0: #{mnist_classifier_forward.5}
  #allocation0 [shape = 'u32[]', space=smem, size = 0x4, offset = 0x4, fixed_abs, tag = 'smem constant byte address 0x4 - core index']
  #allocation1 [shape = 'u32[144,128]{1,0:T(1,128)}', space=vmem, size = 0x12000, scoped, tag = 'internal scratch']
  %s0 = inlined_call_operand.vmem [shape: f32[2,3136], index: 0, kind: input, shape index: {}]
  %s1 = inlined_call_operand.vmem [shape: f32[3136,128], index: 1, kind: input, shape index: {}]
  %s2 = inlined_call_operand.vmem [shape: f32[1,128], index: 2, kind: input, shape index: {}]
  %s3 = inlined_call_operand.vmem [shape: f32[128,128], index: 3, kind: input, shape index: {}]
  %s4 = inlined_call_operand.vmem [shape: f32[1,128], index: 4, kind: input, shape index: {}]
  %s5 = inlined_call_operand.hbm [shape: f32[2,128], index: 5, kind: output, shape index: {}]
  %s6 = sld [smem:[#allocation0]]
  $region30: #{mnist_classifier_forward.5} parent=0
    _
  %s8 = ssub.s32 1, %s6
  %s9 = scalar_select 0, %s8, %s6
  $region1: #{mnist_classifier_forward.5} parent=0
    #allocation2 [shape = 'u8[1024]{0}', space=vmem, size = 0x400, scoped, tag = 'output window, operand 0, single buffered']
    #allocation3 [shape = 's32[1]{0}', space=sflag, size = 0x4, scoped, tag = 'scoped memory for mnist_classifier_forward.5']
    %10 = vsyncpa [#allocation3], 0
    // Predicated region
    $region2: #{mnist_classifier_forward.5} parent=1 // pred_check
      _
    $region3: #{mnist_classifier_forward.5} parent=1 // pred_check_branch
      %12 = sbr.rel (0) target = $region5
    $region4: #{mnist_classifier_forward.5} parent=1 // pred_region
      _
    $region5: #{mnist_classifier_forward.5} parent=1 // pred_fallthru
      _
    // Predicated region
    $region6: #{mnist_classifier_forward.5} parent=1 // pred_check
      _
    $region7: #{mnist_classifier_forward.5} parent=1 // pred_check_branch
      %14 = sbr.rel (0) target = $region9
    $region8: #{mnist_classifier_forward.5} parent=1 // pred_region
      _
    $region9: #{mnist_classifier_forward.5} parent=1 // pred_fallthru
      _
    // Predicated region
    $region10: #{mnist_classifier_forward.5} parent=1 // pred_check
      _
    $region11: #{mnist_classifier_forward.5} parent=1 // pred_check_branch
      %16 = sbr.rel (0) target = $region13
    $region12: #{mnist_classifier_forward.5} parent=1 // pred_region
      _
    $region13: #{mnist_classifier_forward.5} parent=1 // pred_fallthru
      _
    // Predicated region
    $region14: #{mnist_classifier_forward.5} parent=1 // pred_check
      _
    $region15: #{mnist_classifier_forward.5} parent=1 // pred_check_branch
      %18 = sbr.rel (0) target = $region17
    $region16: #{mnist_classifier_forward.5} parent=1 // pred_region
      _
    $region17: #{mnist_classifier_forward.5} parent=1 // pred_fallthru
      _
    // Predicated region
    $region18: #{mnist_classifier_forward.5} parent=1 // pred_check
      _
    $region19: #{mnist_classifier_forward.5} parent=1 // pred_check_branch
      %20 = sbr.rel (0) target = $region21
    $region20: #{mnist_classifier_forward.5} parent=1 // pred_region
      _
    $region21: #{mnist_classifier_forward.5} parent=1 // pred_fallthru
      _
    %v21 = vld [vmem:[%s0] sm:$0xff]
    %v22 = vld [vmem:[%s0 + $0x8] sm:$0xff]
    %v23 = vld [vmem:[%s0 + $0x10] sm:$0xff]
    %v24 = vld [vmem:[%s0 + $0x18] sm:$0xff]
    %v25 = vld [vmem:[%s0 + $0x20] sm:$0xff]
    %v26 = vld [vmem:[%s0 + $0x28] sm:$0xff]
    %v27 = vld [vmem:[%s0 + $0x30] sm:$0x3]
    %v28 = vld [vmem:[%s1] sm:$0xff]
    %v29 = vld [vmem:[%s1 + $0x8] sm:$0xff]
    %v30 = vld [vmem:[%s1 + $0x10] sm:$0xff]
    %v31 = vld [vmem:[%s1 + $0x18] sm:$0xff]
    %v32 = vld [vmem:[%s1 + $0x20] sm:$0xff]
    %v33 = vld [vmem:[%s1 + $0x28] sm:$0xff]
    %v34 = vld [vmem:[%s1 + $0x30] sm:$0xff]
    %v35 = vld [vmem:[%s1 + $0x38] sm:$0xff]
    %v36 = vld [vmem:[%s1 + $0x40] sm:$0xff]
    %v37 = vld [vmem:[%s1 + $0x48] sm:$0xff]
    %v38 = vld [vmem:[%s1 + $0x50] sm:$0xff]
    %v39 = vld [vmem:[%s1 + $0x58] sm:$0xff]
    %v40 = vld [vmem:[%s1 + $0x60] sm:$0xff]
    %v41 = vld [vmem:[%s1 + $0x68] sm:$0xff]
    %v42 = vld [vmem:[%s1 + $0x70] sm:$0xff]
    %v43 = vld [vmem:[%s1 + $0x78] sm:$0xff]
    %v44 = vld [vmem:[%s1 + $0x80] sm:$0xff]
    %v45 = vld [vmem:[%s1 + $0x88] sm:$0xff]
    %v46 = vld [vmem:[%s1 + $0x90] sm:$0xff]
    %v47 = vld [vmem:[%s1 + $0x98] sm:$0xff]
    %v48 = vld [vmem:[%s1 + $0xa0] sm:$0xff]
    %v49 = vld [vmem:[%s1 + $0xa8] sm:$0xff]
    %v50 = vld [vmem:[%s1 + $0xb0] sm:$0xff]
    %v51 = vld [vmem:[%s1 + $0xb8] sm:$0xff]
    %v52 = vld [vmem:[%s1 + $0xc0] sm:$0xff]
    %v53 = vld [vmem:[%s1 + $0xc8] sm:$0xff]
    %v54 = vld [vmem:[%s1 + $0xd0] sm:$0xff]
    %v55 = vld [vmem:[%s1 + $0xd8] sm:$0xff]
    %v56 = vld [vmem:[%s1 + $0xe0] sm:$0xff]
    %v57 = vld [vmem:[%s1 + $0xe8] sm:$0xff]
    %v58 = vld [vmem:[%s1 + $0xf0] sm:$0xff]
    %v59 = vld [vmem:[%s1 + $0xf8] sm:$0xff]
    %v60 = vld [vmem:[%s1 + $0x100] sm:$0xff]
    %v61 = vld [vmem:[%s1 + $0x108] sm:$0xff]
    %v62 = vld [vmem:[%s1 + $0x110] sm:$0xff]
    %v63 = vld [vmem:[%s1 + $0x118] sm:$0xff]
    %v64 = vld [vmem:[%s1 + $0x120] sm:$0xff]
    %v65 = vld [vmem:[%s1 + $0x128] sm:$0xff]
    %v66 = vld [vmem:[%s1 + $0x130] sm:$0xff]
    %v67 = vld [vmem:[%s1 + $0x138] sm:$0xff]
    %v68 = vld [vmem:[%s1 + $0x140] sm:$0xff]
    %v69 = vld [vmem:[%s1 + $0x148] sm:$0xff]
    %v70 = vld [vmem:[%s1 + $0x150] sm:$0xff]
    %v71 = vld [vmem:[%s1 + $0x158] sm:$0xff]
    %v72 = vld [vmem:[%s1 + $0x160] sm:$0xff]
    %v73 = vld [vmem:[%s1 + $0x168] sm:$0xff]
    %v74 = vld [vmem:[%s1 + $0x170] sm:$0xff]
    %v75 = vld [vmem:[%s1 + $0x178] sm:$0xff]
    %v76 = vld [vmem:[%s1 + $0x180] sm:$0xff]
    %v77 = vld [vmem:[%s1 + $0x188] sm:$0xff]
    %v78 = vld [vmem:[%s1 + $0x190] sm:$0xff]
    %v79 = vld [vmem:[%s1 + $0x198] sm:$0xff]
    %v80 = vld [vmem:[%s1 + $0x1a0] sm:$0xff]
    %v81 = vld [vmem:[%s1 + $0x1a8] sm:$0xff]
    %v82 = vld [vmem:[%s1 + $0x1b0] sm:$0xff]
    %v83 = vld [vmem:[%s1 + $0x1b8] sm:$0xff]
    %v84 = vld [vmem:[%s1 + $0x1c0] sm:$0xff]
    %v85 = vld [vmem:[%s1 + $0x1c8] sm:$0xff]
    %v86 = vld [vmem:[%s1 + $0x1d0] sm:$0xff]
    %v87 = vld [vmem:[%s1 + $0x1d8] sm:$0xff]
    %v88 = vld [vmem:[%s1 + $0x1e0] sm:$0xff]
    %v89 = vld [vmem:[%s1 + $0x1e8] sm:$0xff]
    %v90 = vld [vmem:[%s1 + $0x1f0] sm:$0xff]
    %v91 = vld [vmem:[%s1 + $0x1f8] sm:$0xff]
    %v92 = vld [vmem:[%s1 + $0x200] sm:$0xff]
    %v93 = vld [vmem:[%s1 + $0x208] sm:$0xff]
    %v94 = vld [vmem:[%s1 + $0x210] sm:$0xff]
    %v95 = vld [vmem:[%s1 + $0x218] sm:$0xff]
    %v96 = vld [vmem:[%s1 + $0x220] sm:$0xff]
    %v97 = vld [vmem:[%s1 + $0x228] sm:$0xff]
    %v98 = vld [vmem:[%s1 + $0x230] sm:$0xff]
    %v99 = vld [vmem:[%s1 + $0x238] sm:$0xff]
    %v100 = vld [vmem:[%s1 + $0x240] sm:$0xff]
    %v101 = vld [vmem:[%s1 + $0x248] sm:$0xff]
    %v102 = vld [vmem:[%s1 + $0x250] sm:$0xff]
    %v103 = vld [vmem:[%s1 + $0x258] sm:$0xff]
    %v104 = vld [vmem:[%s1 + $0x260] sm:$0xff]
    %v105 = vld [vmem:[%s1 + $0x268] sm:$0xff]
    %v106 = vld [vmem:[%s1 + $0x270] sm:$0xff]
    %v107 = vld [vmem:[%s1 + $0x278] sm:$0xff]
    %v108 = vld [vmem:[%s1 + $0x280] sm:$0xff]
    %v109 = vld [vmem:[%s1 + $0x288] sm:$0xff]
    %v110 = vld [vmem:[%s1 + $0x290] sm:$0xff]
    %v111 = vld [vmem:[%s1 + $0x298] sm:$0xff]
    %v112 = vld [vmem:[%s1 + $0x2a0] sm:$0xff]
    %v113 = vld [vmem:[%s1 + $0x2a8] sm:$0xff]
    %v114 = vld [vmem:[%s1 + $0x2b0] sm:$0xff]
    %v115 = vld [vmem:[%s1 + $0x2b8] sm:$0xff]
    %v116 = vld [vmem:[%s1 + $0x2c0] sm:$0xff]
    %v117 = vld [vmem:[%s1 + $0x2c8] sm:$0xff]
    %v118 = vld [vmem:[%s1 + $0x2d0] sm:$0xff]
    %v119 = vld [vmem:[%s1 + $0x2d8] sm:$0xff]
    %v120 = vld [vmem:[%s1 + $0x2e0] sm:$0xff]
    %v121 = vld [vmem:[%s1 + $0x2e8] sm:$0xff]
    %v122 = vld [vmem:[%s1 + $0x2f0] sm:$0xff]
    %v123 = vld [vmem:[%s1 + $0x2f8] sm:$0xff]
    %v124 = vld [vmem:[%s1 + $0x300] sm:$0xff]
    %v125 = vld [vmem:[%s1 + $0x308] sm:$0xff]
    %v126 = vld [vmem:[%s1 + $0x310] sm:$0xff]
    %v127 = vld [vmem:[%s1 + $0x318] sm:$0xff]
    %v128 = vld [vmem:[%s1 + $0x320] sm:$0xff]
    %v129 = vld [vmem:[%s1 + $0x328] sm:$0xff]
    %v130 = vld [vmem:[%s1 + $0x330] sm:$0xff]
    %v131 = vld [vmem:[%s1 + $0x338] sm:$0xff]
    %v132 = vld [vmem:[%s1 + $0x340] sm:$0xff]
    %v133 = vld [vmem:[%s1 + $0x348] sm:$0xff]
    %v134 = vld [vmem:[%s1 + $0x350] sm:$0xff]
    %v135 = vld [vmem:[%s1 + $0x358] sm:$0xff]
    %v136 = vld [vmem:[%s1 + $0x360] sm:$0xff]
    %v137 = vld [vmem:[%s1 + $0x368] sm:$0xff]
    %v138 = vld [vmem:[%s1 + $0x370] sm:$0xff]
    %v139 = vld [vmem:[%s1 + $0x378] sm:$0xff]
    %v140 = vld [vmem:[%s1 + $0x380] sm:$0xff]
    %v141 = vld [vmem:[%s1 + $0x388] sm:$0xff]
    %v142 = vld [vmem:[%s1 + $0x390] sm:$0xff]
    %v143 = vld [vmem:[%s1 + $0x398] sm:$0xff]
    %v144 = vld [vmem:[%s1 + $0x3a0] sm:$0xff]
    %v145 = vld [vmem:[%s1 + $0x3a8] sm:$0xff]
    %v146 = vld [vmem:[%s1 + $0x3b0] sm:$0xff]
    %v147 = vld [vmem:[%s1 + $0x3b8] sm:$0xff]
    %v148 = vld [vmem:[%s1 + $0x3c0] sm:$0xff]
    %v149 = vld [vmem:[%s1 + $0x3c8] sm:$0xff]
    %v150 = vld [vmem:[%s1 + $0x3d0] sm:$0xff]
    %v151 = vld [vmem:[%s1 + $0x3d8] sm:$0xff]
    %v152 = vld [vmem:[%s1 + $0x3e0] sm:$0xff]
    %v153 = vld [vmem:[%s1 + $0x3e8] sm:$0xff]
    %v154 = vld [vmem:[%s1 + $0x3f0] sm:$0xff]
    %v155 = vld [vmem:[%s1 + $0x3f8] sm:$0xff]
    %v156 = vld [vmem:[%s1 + $0x400] sm:$0xff]
    %v157 = vld [vmem:[%s1 + $0x408] sm:$0xff]
    %v158 = vld [vmem:[%s1 + $0x410] sm:$0xff]
    %v159 = vld [vmem:[%s1 + $0x418] sm:$0xff]
    %v160 = vld [vmem:[%s1 + $0x420] sm:$0xff]
    %v161 = vld [vmem:[%s1 + $0x428] sm:$0xff]
    %v162 = vld [vmem:[%s1 + $0x430] sm:$0xff]
    %v163 = vld [vmem:[%s1 + $0x438] sm:$0xff]
    %v164 = vld [vmem:[%s1 + $0x440] sm:$0xff]
    %v165 = vld [vmem:[%s1 + $0x448] sm:$0xff]
    %v166 = vld [vmem:[%s1 + $0x450] sm:$0xff]
    %v167 = vld [vmem:[%s1 + $0x458] sm:$0xff]
    %v168 = vld [vmem:[%s1 + $0x460] sm:$0xff]
    %v169 = vld [vmem:[%s1 + $0x468] sm:$0xff]
    %v170 = vld [vmem:[%s1 + $0x470] sm:$0xff]
    %v171 = vld [vmem:[%s1 + $0x478] sm:$0xff]
    %v172 = vld [vmem:[%s1 + $0x480] sm:$0xff]
    %v173 = vld [vmem:[%s1 + $0x488] sm:$0xff]
    %v174 = vld [vmem:[%s1 + $0x490] sm:$0xff]
    %v175 = vld [vmem:[%s1 + $0x498] sm:$0xff]
    %v176 = vld [vmem:[%s1 + $0x4a0] sm:$0xff]
    %v177 = vld [vmem:[%s1 + $0x4a8] sm:$0xff]
    %v178 = vld [vmem:[%s1 + $0x4b0] sm:$0xff]
    %v179 = vld [vmem:[%s1 + $0x4b8] sm:$0xff]
    %v180 = vld [vmem:[%s1 + $0x4c0] sm:$0xff]
    %v181 = vld [vmem:[%s1 + $0x4c8] sm:$0xff]
    %v182 = vld [vmem:[%s1 + $0x4d0] sm:$0xff]
    %v183 = vld [vmem:[%s1 + $0x4d8] sm:$0xff]
    %v184 = vld [vmem:[%s1 + $0x4e0] sm:$0xff]
    %v185 = vld [vmem:[%s1 + $0x4e8] sm:$0xff]
    %v186 = vld [vmem:[%s1 + $0x4f0] sm:$0xff]
    %v187 = vld [vmem:[%s1 + $0x4f8] sm:$0xff]
    %v188 = vld [vmem:[%s1 + $0x500] sm:$0xff]
    %v189 = vld [vmem:[%s1 + $0x508] sm:$0xff]
    %v190 = vld [vmem:[%s1 + $0x510] sm:$0xff]
    %v191 = vld [vmem:[%s1 + $0x518] sm:$0xff]
    %v192 = vld [vmem:[%s1 + $0x520] sm:$0xff]
    %v193 = vld [vmem:[%s1 + $0x528] sm:$0xff]
    %v194 = vld [vmem:[%s1 + $0x530] sm:$0xff]
    %v195 = vld [vmem:[%s1 + $0x538] sm:$0xff]
    %v196 = vld [vmem:[%s1 + $0x540] sm:$0xff]
    %v197 = vld [vmem:[%s1 + $0x548] sm:$0xff]
    %v198 = vld [vmem:[%s1 + $0x550] sm:$0xff]
    %v199 = vld [vmem:[%s1 + $0x558] sm:$0xff]
    %v200 = vld [vmem:[%s1 + $0x560] sm:$0xff]
    %v201 = vld [vmem:[%s1 + $0x568] sm:$0xff]
    %v202 = vld [vmem:[%s1 + $0x570] sm:$0xff]
    %v203 = vld [vmem:[%s1 + $0x578] sm:$0xff]
    %v204 = vld [vmem:[%s1 + $0x580] sm:$0xff]
    %v205 = vld [vmem:[%s1 + $0x588] sm:$0xff]
    %v206 = vld [vmem:[%s1 + $0x590] sm:$0xff]
    %v207 = vld [vmem:[%s1 + $0x598] sm:$0xff]
    %v208 = vld [vmem:[%s1 + $0x5a0] sm:$0xff]
    %v209 = vld [vmem:[%s1 + $0x5a8] sm:$0xff]
    %v210 = vld [vmem:[%s1 + $0x5b0] sm:$0xff]
    %v211 = vld [vmem:[%s1 + $0x5b8] sm:$0xff]
    %v212 = vld [vmem:[%s1 + $0x5c0] sm:$0xff]
    %v213 = vld [vmem:[%s1 + $0x5c8] sm:$0xff]
    %v214 = vld [vmem:[%s1 + $0x5d0] sm:$0xff]
    %v215 = vld [vmem:[%s1 + $0x5d8] sm:$0xff]
    %v216 = vld [vmem:[%s1 + $0x5e0] sm:$0xff]
    %v217 = vld [vmem:[%s1 + $0x5e8] sm:$0xff]
    %v218 = vld [vmem:[%s1 + $0x5f0] sm:$0xff]
    %v219 = vld [vmem:[%s1 + $0x5f8] sm:$0xff]
    %v220 = vld [vmem:[%s1 + $0x600] sm:$0xff]
    %v221 = vld [vmem:[%s1 + $0x608] sm:$0xff]
    %v222 = vld [vmem:[%s1 + $0x610] sm:$0xff]
    %v223 = vld [vmem:[%s1 + $0x618] sm:$0xff]
    %v224 = vld [vmem:[%s1 + $0x620] sm:$0xff]
    %v225 = vld [vmem:[%s1 + $0x628] sm:$0xff]
    %v226 = vld [vmem:[%s1 + $0x630] sm:$0xff]
    %v227 = vld [vmem:[%s1 + $0x638] sm:$0xff]
    %v228 = vld [vmem:[%s1 + $0x640] sm:$0xff]
    %v229 = vld [vmem:[%s1 + $0x648] sm:$0xff]
    %v230 = vld [vmem:[%s1 + $0x650] sm:$0xff]
    %v231 = vld [vmem:[%s1 + $0x658] sm:$0xff]
    %v232 = vld [vmem:[%s1 + $0x660] sm:$0xff]
    %v233 = vld [vmem:[%s1 + $0x668] sm:$0xff]
    %v234 = vld [vmem:[%s1 + $0x670] sm:$0xff]
    %v235 = vld [vmem:[%s1 + $0x678] sm:$0xff]
    %v236 = vld [vmem:[%s1 + $0x680] sm:$0xff]
    %v237 = vld [vmem:[%s1 + $0x688] sm:$0xff]
    %v238 = vld [vmem:[%s1 + $0x690] sm:$0xff]
    %v239 = vld [vmem:[%s1 + $0x698] sm:$0xff]
    %v240 = vld [vmem:[%s1 + $0x6a0] sm:$0xff]
    %v241 = vld [vmem:[%s1 + $0x6a8] sm:$0xff]
    %v242 = vld [vmem:[%s1 + $0x6b0] sm:$0xff]
    %v243 = vld [vmem:[%s1 + $0x6b8] sm:$0xff]
    %v244 = vld [vmem:[%s1 + $0x6c0] sm:$0xff]
    %v245 = vld [vmem:[%s1 + $0x6c8] sm:$0xff]
    %v246 = vld [vmem:[%s1 + $0x6d0] sm:$0xff]
    %v247 = vld [vmem:[%s1 + $0x6d8] sm:$0xff]
    %v248 = vld [vmem:[%s1 + $0x6e0] sm:$0xff]
    %v249 = vld [vmem:[%s1 + $0x6e8] sm:$0xff]
    %v250 = vld [vmem:[%s1 + $0x6f0] sm:$0xff]
    %v251 = vld [vmem:[%s1 + $0x6f8] sm:$0xff]
    %v252 = vld [vmem:[%s1 + $0x700] sm:$0xff]
    %v253 = vld [vmem:[%s1 + $0x708] sm:$0xff]
    %v254 = vld [vmem:[%s1 + $0x710] sm:$0xff]
    %v255 = vld [vmem:[%s1 + $0x718] sm:$0xff]
    %v256 = vld [vmem:[%s1 + $0x720] sm:$0xff]
    %v257 = vld [vmem:[%s1 + $0x728] sm:$0xff]
    %v258 = vld [vmem:[%s1 + $0x730] sm:$0xff]
    %v259 = vld [vmem:[%s1 + $0x738] sm:$0xff]
    %v260 = vld [vmem:[%s1 + $0x740] sm:$0xff]
    %v261 = vld [vmem:[%s1 + $0x748] sm:$0xff]
    %v262 = vld [vmem:[%s1 + $0x750] sm:$0xff]
    %v263 = vld [vmem:[%s1 + $0x758] sm:$0xff]
    %v264 = vld [vmem:[%s1 + $0x760] sm:$0xff]
    %v265 = vld [vmem:[%s1 + $0x768] sm:$0xff]
    %v266 = vld [vmem:[%s1 + $0x770] sm:$0xff]
    %v267 = vld [vmem:[%s1 + $0x778] sm:$0xff]
    %v268 = vld [vmem:[%s1 + $0x780] sm:$0xff]
    %v269 = vld [vmem:[%s1 + $0x788] sm:$0xff]
    %v270 = vld [vmem:[%s1 + $0x790] sm:$0xff]
    %v271 = vld [vmem:[%s1 + $0x798] sm:$0xff]
    %v272 = vld [vmem:[%s1 + $0x7a0] sm:$0xff]
    %v273 = vld [vmem:[%s1 + $0x7a8] sm:$0xff]
    %v274 = vld [vmem:[%s1 + $0x7b0] sm:$0xff]
    %v275 = vld [vmem:[%s1 + $0x7b8] sm:$0xff]
    %v276 = vld [vmem:[%s1 + $0x7c0] sm:$0xff]
    %v277 = vld [vmem:[%s1 + $0x7c8] sm:$0xff]
    %v278 = vld [vmem:[%s1 + $0x7d0] sm:$0xff]
    %v279 = vld [vmem:[%s1 + $0x7d8] sm:$0xff]
    %v280 = vld [vmem:[%s1 + $0x7e0] sm:$0xff]
    %v281 = vld [vmem:[%s1 + $0x7e8] sm:$0xff]
    %v282 = vld [vmem:[%s1 + $0x7f0] sm:$0xff]
    %v283 = vld [vmem:[%s1 + $0x7f8] sm:$0xff]
    %v284 = vld [vmem:[%s1 + $0x800] sm:$0xff]
    %v285 = vld [vmem:[%s1 + $0x808] sm:$0xff]
    %v286 = vld [vmem:[%s1 + $0x810] sm:$0xff]
    %v287 = vld [vmem:[%s1 + $0x818] sm:$0xff]
    %v288 = vld [vmem:[%s1 + $0x820] sm:$0xff]
    %v289 = vld [vmem:[%s1 + $0x828] sm:$0xff]
    %v290 = vld [vmem:[%s1 + $0x830] sm:$0xff]
    %v291 = vld [vmem:[%s1 + $0x838] sm:$0xff]
    %v292 = vld [vmem:[%s1 + $0x840] sm:$0xff]
    %v293 = vld [vmem:[%s1 + $0x848] sm:$0xff]
    %v294 = vld [vmem:[%s1 + $0x850] sm:$0xff]
    %v295 = vld [vmem:[%s1 + $0x858] sm:$0xff]
    %v296 = vld [vmem:[%s1 + $0x860] sm:$0xff]
    %v297 = vld [vmem:[%s1 + $0x868] sm:$0xff]
    %v298 = vld [vmem:[%s1 + $0x870] sm:$0xff]
    %v299 = vld [vmem:[%s1 + $0x878] sm:$0xff]
    %v300 = vld [vmem:[%s1 + $0x880] sm:$0xff]
    %v301 = vld [vmem:[%s1 + $0x888] sm:$0xff]
    %v302 = vld [vmem:[%s1 + $0x890] sm:$0xff]
    %v303 = vld [vmem:[%s1 + $0x898] sm:$0xff]
    %v304 = vld [vmem:[%s1 + $0x8a0] sm:$0xff]
    %v305 = vld [vmem:[%s1 + $0x8a8] sm:$0xff]
    %v306 = vld [vmem:[%s1 + $0x8b0] sm:$0xff]
    %v307 = vld [vmem:[%s1 + $0x8b8] sm:$0xff]
    %v308 = vld [vmem:[%s1 + $0x8c0] sm:$0xff]
    %v309 = vld [vmem:[%s1 + $0x8c8] sm:$0xff]
    %v310 = vld [vmem:[%s1 + $0x8d0] sm:$0xff]
    %v311 = vld [vmem:[%s1 + $0x8d8] sm:$0xff]
    %v312 = vld [vmem:[%s1 + $0x8e0] sm:$0xff]
    %v313 = vld [vmem:[%s1 + $0x8e8] sm:$0xff]
    %v314 = vld [vmem:[%s1 + $0x8f0] sm:$0xff]
    %v315 = vld [vmem:[%s1 + $0x8f8] sm:$0xff]
    %v316 = vld [vmem:[%s1 + $0x900] sm:$0xff]
    %v317 = vld [vmem:[%s1 + $0x908] sm:$0xff]
    %v318 = vld [vmem:[%s1 + $0x910] sm:$0xff]
    %v319 = vld [vmem:[%s1 + $0x918] sm:$0xff]
    %v320 = vld [vmem:[%s1 + $0x920] sm:$0xff]
    %v321 = vld [vmem:[%s1 + $0x928] sm:$0xff]
    %v322 = vld [vmem:[%s1 + $0x930] sm:$0xff]
    %v323 = vld [vmem:[%s1 + $0x938] sm:$0xff]
    %v324 = vld [vmem:[%s1 + $0x940] sm:$0xff]
    %v325 = vld [vmem:[%s1 + $0x948] sm:$0xff]
    %v326 = vld [vmem:[%s1 + $0x950] sm:$0xff]
    %v327 = vld [vmem:[%s1 + $0x958] sm:$0xff]
    %v328 = vld [vmem:[%s1 + $0x960] sm:$0xff]
    %v329 = vld [vmem:[%s1 + $0x968] sm:$0xff]
    %v330 = vld [vmem:[%s1 + $0x970] sm:$0xff]
    %v331 = vld [vmem:[%s1 + $0x978] sm:$0xff]
    %v332 = vld [vmem:[%s1 + $0x980] sm:$0xff]
    %v333 = vld [vmem:[%s1 + $0x988] sm:$0xff]
    %v334 = vld [vmem:[%s1 + $0x990] sm:$0xff]
    %v335 = vld [vmem:[%s1 + $0x998] sm:$0xff]
    %v336 = vld [vmem:[%s1 + $0x9a0] sm:$0xff]
    %v337 = vld [vmem:[%s1 + $0x9a8] sm:$0xff]
    %v338 = vld [vmem:[%s1 + $0x9b0] sm:$0xff]
    %v339 = vld [vmem:[%s1 + $0x9b8] sm:$0xff]
    %v340 = vld [vmem:[%s1 + $0x9c0] sm:$0xff]
    %v341 = vld [vmem:[%s1 + $0x9c8] sm:$0xff]
    %v342 = vld [vmem:[%s1 + $0x9d0] sm:$0xff]
    %v343 = vld [vmem:[%s1 + $0x9d8] sm:$0xff]
    %v344 = vld [vmem:[%s1 + $0x9e0] sm:$0xff]
    %v345 = vld [vmem:[%s1 + $0x9e8] sm:$0xff]
    %v346 = vld [vmem:[%s1 + $0x9f0] sm:$0xff]
    %v347 = vld [vmem:[%s1 + $0x9f8] sm:$0xff]
    %v348 = vld [vmem:[%s1 + $0xa00] sm:$0xff]
    %v349 = vld [vmem:[%s1 + $0xa08] sm:$0xff]
    %v350 = vld [vmem:[%s1 + $0xa10] sm:$0xff]
    %v351 = vld [vmem:[%s1 + $0xa18] sm:$0xff]
    %v352 = vld [vmem:[%s1 + $0xa20] sm:$0xff]
    %v353 = vld [vmem:[%s1 + $0xa28] sm:$0xff]
    %v354 = vld [vmem:[%s1 + $0xa30] sm:$0xff]
    %v355 = vld [vmem:[%s1 + $0xa38] sm:$0xff]
    %v356 = vld [vmem:[%s1 + $0xa40] sm:$0xff]
    %v357 = vld [vmem:[%s1 + $0xa48] sm:$0xff]
    %v358 = vld [vmem:[%s1 + $0xa50] sm:$0xff]
    %v359 = vld [vmem:[%s1 + $0xa58] sm:$0xff]
    %v360 = vld [vmem:[%s1 + $0xa60] sm:$0xff]
    %v361 = vld [vmem:[%s1 + $0xa68] sm:$0xff]
    %v362 = vld [vmem:[%s1 + $0xa70] sm:$0xff]
    %v363 = vld [vmem:[%s1 + $0xa78] sm:$0xff]
    %v364 = vld [vmem:[%s1 + $0xa80] sm:$0xff]
    %v365 = vld [vmem:[%s1 + $0xa88] sm:$0xff]
    %v366 = vld [vmem:[%s1 + $0xa90] sm:$0xff]
    %v367 = vld [vmem:[%s1 + $0xa98] sm:$0xff]
    %v368 = vld [vmem:[%s1 + $0xaa0] sm:$0xff]
    %v369 = vld [vmem:[%s1 + $0xaa8] sm:$0xff]
    %v370 = vld [vmem:[%s1 + $0xab0] sm:$0xff]
    %v371 = vld [vmem:[%s1 + $0xab8] sm:$0xff]
    %v372 = vld [vmem:[%s1 + $0xac0] sm:$0xff]
    %v373 = vld [vmem:[%s1 + $0xac8] sm:$0xff]
    %v374 = vld [vmem:[%s1 + $0xad0] sm:$0xff]
    %v375 = vld [vmem:[%s1 + $0xad8] sm:$0xff]
    %v376 = vld [vmem:[%s1 + $0xae0] sm:$0xff]
    %v377 = vld [vmem:[%s1 + $0xae8] sm:$0xff]
    %v378 = vld [vmem:[%s1 + $0xaf0] sm:$0xff]
    %v379 = vld [vmem:[%s1 + $0xaf8] sm:$0xff]
    %v380 = vld [vmem:[%s1 + $0xb00] sm:$0xff]
    %v381 = vld [vmem:[%s1 + $0xb08] sm:$0xff]
    %v382 = vld [vmem:[%s1 + $0xb10] sm:$0xff]
    %v383 = vld [vmem:[%s1 + $0xb18] sm:$0xff]
    %v384 = vld [vmem:[%s1 + $0xb20] sm:$0xff]
    %v385 = vld [vmem:[%s1 + $0xb28] sm:$0xff]
    %v386 = vld [vmem:[%s1 + $0xb30] sm:$0xff]
    %v387 = vld [vmem:[%s1 + $0xb38] sm:$0xff]
    %v388 = vld [vmem:[%s1 + $0xb40] sm:$0xff]
    %v389 = vld [vmem:[%s1 + $0xb48] sm:$0xff]
    %v390 = vld [vmem:[%s1 + $0xb50] sm:$0xff]
    %v391 = vld [vmem:[%s1 + $0xb58] sm:$0xff]
    %v392 = vld [vmem:[%s1 + $0xb60] sm:$0xff]
    %v393 = vld [vmem:[%s1 + $0xb68] sm:$0xff]
    %v394 = vld [vmem:[%s1 + $0xb70] sm:$0xff]
    %v395 = vld [vmem:[%s1 + $0xb78] sm:$0xff]
    %v396 = vld [vmem:[%s1 + $0xb80] sm:$0xff]
    %v397 = vld [vmem:[%s1 + $0xb88] sm:$0xff]
    %v398 = vld [vmem:[%s1 + $0xb90] sm:$0xff]
    %v399 = vld [vmem:[%s1 + $0xb98] sm:$0xff]
    %v400 = vld [vmem:[%s1 + $0xba0] sm:$0xff]
    %v401 = vld [vmem:[%s1 + $0xba8] sm:$0xff]
    %v402 = vld [vmem:[%s1 + $0xbb0] sm:$0xff]
    %v403 = vld [vmem:[%s1 + $0xbb8] sm:$0xff]
    %v404 = vld [vmem:[%s1 + $0xbc0] sm:$0xff]
    %v405 = vld [vmem:[%s1 + $0xbc8] sm:$0xff]
    %v406 = vld [vmem:[%s1 + $0xbd0] sm:$0xff]
    %v407 = vld [vmem:[%s1 + $0xbd8] sm:$0xff]
    %v408 = vld [vmem:[%s1 + $0xbe0] sm:$0xff]
    %v409 = vld [vmem:[%s1 + $0xbe8] sm:$0xff]
    %v410 = vld [vmem:[%s1 + $0xbf0] sm:$0xff]
    %v411 = vld [vmem:[%s1 + $0xbf8] sm:$0xff]
    %v412 = vld [vmem:[%s1 + $0xc00] sm:$0xff]
    %v413 = vld [vmem:[%s1 + $0xc08] sm:$0xff]
    %v414 = vld [vmem:[%s1 + $0xc10] sm:$0xff]
    %v415 = vld [vmem:[%s1 + $0xc18] sm:$0xff]
    %v416 = vld [vmem:[%s1 + $0xc20] sm:$0xff]
    %v417 = vld [vmem:[%s1 + $0xc28] sm:$0xff]
    %v418 = vld [vmem:[%s1 + $0xc30] sm:$0xff]
    %v419 = vld [vmem:[%s1 + $0xc38] sm:$0xff]
    %v420 = vld [vmem:[%s2] sm:$0x1]
    %v422 = vlaneseq
    %v423 = vshrl.u32 %v422, 7
    %v424 = vsub.s32 0, %v423
    %v425 = vrot.slane %v420, %v424
    %v434 = vcombine.high %v21, %v21
    %v436 = vunpack.c.l.s4 1983009808
    %v437 = vunpack.c.0.s8 %v436
    %v438 = vlaneseq
    %v439 = vshrl.u32 %v438, 7
    %v440 = vsub.s32 %v437, %v439
    %v441 = vrot.slane %v21, %v440
    %v443 = vunpack.c.l.s4 1983009808
    %v444 = vunpack.c.0.s8 %v443
    %v445 = vlaneseq
    %v446 = vshrl.u32 %v445, 7
    %v447 = vsub.s32 %v444, %v446
    %v448 = vrot.slane %v434, %v447
    %v449 = vcombine.high %v441, %v441
    %v450 = vcombine.high %v448, %v448
    %v451 = vcombine.high %v22, %v22
    %v453 = vunpack.c.l.s4 1983009808
    %v454 = vunpack.c.0.s8 %v453
    %v455 = vlaneseq
    %v456 = vshrl.u32 %v455, 7
    %v457 = vsub.s32 %v454, %v456
    %v458 = vrot.slane %v22, %v457
    %v460 = vunpack.c.l.s4 1983009808
    %v461 = vunpack.c.0.s8 %v460
    %v462 = vlaneseq
    %v463 = vshrl.u32 %v462, 7
    %v464 = vsub.s32 %v461, %v463
    %v465 = vrot.slane %v451, %v464
    %v466 = vcombine.high %v458, %v458
    %v467 = vcombine.high %v465, %v465
    %v468 = vcombine.high %v23, %v23
    %v470 = vunpack.c.l.s4 1983009808
    %v471 = vunpack.c.0.s8 %v470
    %v472 = vlaneseq
    %v473 = vshrl.u32 %v472, 7
    %v474 = vsub.s32 %v471, %v473
    %v475 = vrot.slane %v23, %v474
    %v477 = vunpack.c.l.s4 1983009808
    %v478 = vunpack.c.0.s8 %v477
    %v479 = vlaneseq
    %v480 = vshrl.u32 %v479, 7
    %v481 = vsub.s32 %v478, %v480
    %v482 = vrot.slane %v468, %v481
    %v483 = vcombine.high %v475, %v475
    %v484 = vcombine.high %v482, %v482
    %v485 = vcombine.high %v24, %v24
    %v487 = vunpack.c.l.s4 1983009808
    %v488 = vunpack.c.0.s8 %v487
    %v489 = vlaneseq
    %v490 = vshrl.u32 %v489, 7
    %v491 = vsub.s32 %v488, %v490
    %v492 = vrot.slane %v24, %v491
    %v494 = vunpack.c.l.s4 1983009808
    %v495 = vunpack.c.0.s8 %v494
    %v496 = vlaneseq
    %v497 = vshrl.u32 %v496, 7
    %v498 = vsub.s32 %v495, %v497
    %v499 = vrot.slane %v485, %v498
    %v500 = vcombine.high %v492, %v492
    %v501 = vcombine.high %v499, %v499
    %v502 = vcombine.high %v25, %v25
    %v504 = vunpack.c.l.s4 1983009808
    %v505 = vunpack.c.0.s8 %v504
    %v506 = vlaneseq
    %v507 = vshrl.u32 %v506, 7
    %v508 = vsub.s32 %v505, %v507
    %v509 = vrot.slane %v25, %v508
    %v511 = vunpack.c.l.s4 1983009808
    %v512 = vunpack.c.0.s8 %v511
    %v513 = vlaneseq
    %v514 = vshrl.u32 %v513, 7
    %v515 = vsub.s32 %v512, %v514
    %v516 = vrot.slane %v502, %v515
    %v517 = vcombine.high %v509, %v509
    %v518 = vcombine.high %v516, %v516
    %v519 = vcombine.high %v26, %v26
    %v521 = vunpack.c.l.s4 1983009808
    %v522 = vunpack.c.0.s8 %v521
    %v523 = vlaneseq
    %v524 = vshrl.u32 %v523, 7
    %v525 = vsub.s32 %v522, %v524
    %v526 = vrot.slane %v26, %v525
    %v528 = vunpack.c.l.s4 1983009808
    %v529 = vunpack.c.0.s8 %v528
    %v530 = vlaneseq
    %v531 = vshrl.u32 %v530, 7
    %v532 = vsub.s32 %v529, %v531
    %v533 = vrot.slane %v519, %v532
    %v534 = vcombine.high %v526, %v526
    %v535 = vcombine.high %v533, %v533
    %v537 = vunpack.c.l.s4 1983009808
    %v538 = vunpack.c.0.s8 %v537
    %v539 = vlaneseq
    %v540 = vshrl.u32 %v539, 7
    %v541 = vsub.s32 %v538, %v540
    %v542 = vrot.slane %v27, %v541
    %vm567 = vcmask 523264
    %v568 = vsel %vm567, %v542, 0
    %570 = vmatprep.subr.mxu0 0.0
    %571 = vmatpush1.msra.mxu0 %v43
    %572 = vmatprep.subr.mxu0 0.0
    %573 = vmatpush1.msra.mxu0 %v42
    %574 = vmatprep.subr.mxu0 0.0
    %575 = vmatpush1.msra.mxu0 %v41
    %576 = vmatprep.subr.mxu0 0.0
    %577 = vmatpush1.msra.mxu0 %v40
    %578 = vmatprep.subr.mxu0 0.0
    %579 = vmatpush1.msra.mxu0 %v39
    %580 = vmatprep.subr.mxu0 0.0
    %581 = vmatpush1.msra.mxu0 %v38
    %582 = vmatprep.subr.mxu0 0.0
    %583 = vmatpush1.msra.mxu0 %v37
    %584 = vmatprep.subr.mxu0 0.0
    %585 = vmatpush1.msra.mxu0 %v36
    %586 = vmatprep.subr.mxu0 0.0
    %587 = vmatpush1.msra.mxu0 %v35
    %588 = vmatprep.subr.mxu0 0.0
    %589 = vmatpush1.msra.mxu0 %v34
    %590 = vmatprep.subr.mxu0 0.0
    %591 = vmatpush1.msra.mxu0 %v33
    %592 = vmatprep.subr.mxu0 0.0
    %593 = vmatpush1.msra.mxu0 %v32
    %594 = vmatprep.subr.mxu0 0.0
    %595 = vmatpush1.msra.mxu0 %v31
    %596 = vmatprep.subr.mxu0 0.0
    %597 = vmatpush1.msra.mxu0 %v30
    %598 = vmatprep.subr.mxu0 0.0
    %599 = vmatpush1.msra.mxu0 %v29
    %600 = vmatprep.subr.mxu0 0.0
    %601 = vmatpush1.msra.mxu0 %v28
    %602 = vmatprep.subr.mxu0 0.0
    %603 = vmatpush2.msra.mxu0 %v59
    %604 = vmatprep.subr.mxu0 0.0
    %605 = vmatpush2.msra.mxu0 %v58
    %606 = vmatprep.subr.mxu0 0.0
    %607 = vmatpush2.msra.mxu0 %v57
    %608 = vmatprep.subr.mxu0 0.0
    %609 = vmatpush2.msra.mxu0 %v56
    %610 = vmatprep.subr.mxu0 0.0
    %611 = vmatpush2.msra.mxu0 %v55
    %612 = vmatprep.subr.mxu0 0.0
    %613 = vmatpush2.msra.mxu0 %v54
    %614 = vmatprep.subr.mxu0 0.0
    %615 = vmatpush2.msra.mxu0 %v53
    %616 = vmatprep.subr.mxu0 0.0
    %617 = vmatpush2.msra.mxu0 %v52
    %618 = vmatprep.subr.mxu0 0.0
    %619 = vmatpush2.msra.mxu0 %v51
    %620 = vmatprep.subr.mxu0 0.0
    %621 = vmatpush2.msra.mxu0 %v50
    %622 = vmatprep.subr.mxu0 0.0
    %623 = vmatpush2.msra.mxu0 %v49
    %624 = vmatprep.subr.mxu0 0.0
    %625 = vmatpush2.msra.mxu0 %v48
    %626 = vmatprep.subr.mxu0 0.0
    %627 = vmatpush2.msra.mxu0 %v47
    %628 = vmatprep.subr.mxu0 0.0
    %629 = vmatpush2.msra.mxu0 %v46
    %630 = vmatprep.subr.mxu0 0.0
    %631 = vmatpush2.msra.mxu0 %v45
    %632 = vmatprep.subr.mxu0 0.0
    %633 = vmatpush2.msra.mxu0 %v44
    %634 = vmatprep.mubr.f32.mxu0 %v449
    %635 = vmatmul.mubr.f32.gmra.mxu0 %v441
    %v636 = vpop.f32.mrf.mxu0
    %v637 = vadd.f32 %v425, %v636
    %v638 = vpop.f32.mrf.mxu0
    %639 = vdwg.mxu0
    %640 = vmatprep.subr.mxu0 0.0
    %641 = vmatpush1.msra.mxu0 %v75
    %642 = vmatprep.subr.mxu0 0.0
    %643 = vmatpush1.msra.mxu0 %v74
    %644 = vmatprep.subr.mxu0 0.0
    %645 = vmatpush1.msra.mxu0 %v73
    %646 = vmatprep.subr.mxu0 0.0
    %647 = vmatpush1.msra.mxu0 %v72
    %648 = vmatprep.subr.mxu0 0.0
    %649 = vmatpush1.msra.mxu0 %v71
    %650 = vmatprep.subr.mxu0 0.0
    %651 = vmatpush1.msra.mxu0 %v70
    %652 = vmatprep.subr.mxu0 0.0
    %653 = vmatpush1.msra.mxu0 %v69
    %654 = vmatprep.subr.mxu0 0.0
    %655 = vmatpush1.msra.mxu0 %v68
    %656 = vmatprep.subr.mxu0 0.0
    %657 = vmatpush1.msra.mxu0 %v67
    %658 = vmatprep.subr.mxu0 0.0
    %659 = vmatpush1.msra.mxu0 %v66
    %660 = vmatprep.subr.mxu0 0.0
    %661 = vmatpush1.msra.mxu0 %v65
    %662 = vmatprep.subr.mxu0 0.0
    %663 = vmatpush1.msra.mxu0 %v64
    %664 = vmatprep.subr.mxu0 0.0
    %665 = vmatpush1.msra.mxu0 %v63
    %666 = vmatprep.subr.mxu0 0.0
    %667 = vmatpush1.msra.mxu0 %v62
    %668 = vmatprep.subr.mxu0 0.0
    %669 = vmatpush1.msra.mxu0 %v61
    %670 = vmatprep.subr.mxu0 0.0
    %671 = vmatpush1.msra.mxu0 %v60
    %672 = vmatprep.subr.mxu0 0.0
    %673 = vmatpush2.msra.mxu0 %v91
    %674 = vmatprep.subr.mxu0 0.0
    %675 = vmatpush2.msra.mxu0 %v90
    %676 = vmatprep.subr.mxu0 0.0
    %677 = vmatpush2.msra.mxu0 %v89
    %678 = vmatprep.subr.mxu0 0.0
    %679 = vmatpush2.msra.mxu0 %v88
    %680 = vmatprep.subr.mxu0 0.0
    %681 = vmatpush2.msra.mxu0 %v87
    %682 = vmatprep.subr.mxu0 0.0
    %683 = vmatpush2.msra.mxu0 %v86
    %684 = vmatprep.subr.mxu0 0.0
    %685 = vmatpush2.msra.mxu0 %v85
    %686 = vmatprep.subr.mxu0 0.0
    %687 = vmatpush2.msra.mxu0 %v84
    %688 = vmatprep.subr.mxu0 0.0
    %689 = vmatpush2.msra.mxu0 %v83
    %690 = vmatprep.subr.mxu0 0.0
    %691 = vmatpush2.msra.mxu0 %v82
    %692 = vmatprep.subr.mxu0 0.0
    %693 = vmatpush2.msra.mxu0 %v81
    %694 = vmatprep.subr.mxu0 0.0
    %695 = vmatpush2.msra.mxu0 %v80
    %696 = vmatprep.subr.mxu0 0.0
    %697 = vmatpush2.msra.mxu0 %v79
    %698 = vmatprep.subr.mxu0 0.0
    %699 = vmatpush2.msra.mxu0 %v78
    %700 = vmatprep.subr.mxu0 0.0
    %701 = vmatpush2.msra.mxu0 %v77
    %702 = vmatprep.subr.mxu0 0.0
    %703 = vmatpush2.msra.mxu0 %v76
    %704 = vmatprep.mubr.f32.mxu0 %v450
    %705 = vmatmul.mubr.f32.gmra.mxu0 %v448
    %v706 = vpop.f32.mrf.mxu0
    %v707 = vadd.f32 %v637, %v706
    %v708 = vpop.f32.mrf.mxu0
    %709 = vdwg.mxu0
    %710 = vmatprep.subr.mxu0 0.0
    %711 = vmatpush1.msra.mxu0 %v107
    %712 = vmatprep.subr.mxu0 0.0
    %713 = vmatpush1.msra.mxu0 %v106
    %714 = vmatprep.subr.mxu0 0.0
    %715 = vmatpush1.msra.mxu0 %v105
    %716 = vmatprep.subr.mxu0 0.0
    %717 = vmatpush1.msra.mxu0 %v104
    %718 = vmatprep.subr.mxu0 0.0
    %719 = vmatpush1.msra.mxu0 %v103
    %720 = vmatprep.subr.mxu0 0.0
    %721 = vmatpush1.msra.mxu0 %v102
    %722 = vmatprep.subr.mxu0 0.0
    %723 = vmatpush1.msra.mxu0 %v101
    %724 = vmatprep.subr.mxu0 0.0
    %725 = vmatpush1.msra.mxu0 %v100
    %726 = vmatprep.subr.mxu0 0.0
    %727 = vmatpush1.msra.mxu0 %v99
    %728 = vmatprep.subr.mxu0 0.0
    %729 = vmatpush1.msra.mxu0 %v98
    %730 = vmatprep.subr.mxu0 0.0
    %731 = vmatpush1.msra.mxu0 %v97
    %732 = vmatprep.subr.mxu0 0.0
    %733 = vmatpush1.msra.mxu0 %v96
    %734 = vmatprep.subr.mxu0 0.0
    %735 = vmatpush1.msra.mxu0 %v95
    %736 = vmatprep.subr.mxu0 0.0
    %737 = vmatpush1.msra.mxu0 %v94
    %738 = vmatprep.subr.mxu0 0.0
    %739 = vmatpush1.msra.mxu0 %v93
    %740 = vmatprep.subr.mxu0 0.0
    %741 = vmatpush1.msra.mxu0 %v92
    %742 = vmatprep.subr.mxu0 0.0
    %743 = vmatpush2.msra.mxu0 %v123
    %744 = vmatprep.subr.mxu0 0.0
    %745 = vmatpush2.msra.mxu0 %v122
    %746 = vmatprep.subr.mxu0 0.0
    %747 = vmatpush2.msra.mxu0 %v121
    %748 = vmatprep.subr.mxu0 0.0
    %749 = vmatpush2.msra.mxu0 %v120
    %750 = vmatprep.subr.mxu0 0.0
    %751 = vmatpush2.msra.mxu0 %v119
    %752 = vmatprep.subr.mxu0 0.0
    %753 = vmatpush2.msra.mxu0 %v118
    %754 = vmatprep.subr.mxu0 0.0
    %755 = vmatpush2.msra.mxu0 %v117
    %756 = vmatprep.subr.mxu0 0.0
    %757 = vmatpush2.msra.mxu0 %v116
    %758 = vmatprep.subr.mxu0 0.0
    %759 = vmatpush2.msra.mxu0 %v115
    %760 = vmatprep.subr.mxu0 0.0
    %761 = vmatpush2.msra.mxu0 %v114
    %762 = vmatprep.subr.mxu0 0.0
    %763 = vmatpush2.msra.mxu0 %v113
    %764 = vmatprep.subr.mxu0 0.0
    %765 = vmatpush2.msra.mxu0 %v112
    %766 = vmatprep.subr.mxu0 0.0
    %767 = vmatpush2.msra.mxu0 %v111
    %768 = vmatprep.subr.mxu0 0.0
    %769 = vmatpush2.msra.mxu0 %v110
    %770 = vmatprep.subr.mxu0 0.0
    %771 = vmatpush2.msra.mxu0 %v109
    %772 = vmatprep.subr.mxu0 0.0
    %773 = vmatpush2.msra.mxu0 %v108
    %774 = vmatprep.mubr.f32.mxu0 %v466
    %775 = vmatmul.mubr.f32.gmra.mxu0 %v458
    %v776 = vpop.f32.mrf.mxu0
    %v777 = vadd.f32 %v707, %v776
    %v778 = vpop.f32.mrf.mxu0
    %779 = vdwg.mxu0
    %780 = vmatprep.subr.mxu0 0.0
    %781 = vmatpush1.msra.mxu0 %v139
    %782 = vmatprep.subr.mxu0 0.0
    %783 = vmatpush1.msra.mxu0 %v138
    %784 = vmatprep.subr.mxu0 0.0
    %785 = vmatpush1.msra.mxu0 %v137
    %786 = vmatprep.subr.mxu0 0.0
    %787 = vmatpush1.msra.mxu0 %v136
    %788 = vmatprep.subr.mxu0 0.0
    %789 = vmatpush1.msra.mxu0 %v135
    %790 = vmatprep.subr.mxu0 0.0
    %791 = vmatpush1.msra.mxu0 %v134
    %792 = vmatprep.subr.mxu0 0.0
    %793 = vmatpush1.msra.mxu0 %v133
    %794 = vmatprep.subr.mxu0 0.0
    %795 = vmatpush1.msra.mxu0 %v132
    %796 = vmatprep.subr.mxu0 0.0
    %797 = vmatpush1.msra.mxu0 %v131
    %798 = vmatprep.subr.mxu0 0.0
    %799 = vmatpush1.msra.mxu0 %v130
    %800 = vmatprep.subr.mxu0 0.0
    %801 = vmatpush1.msra.mxu0 %v129
    %802 = vmatprep.subr.mxu0 0.0
    %803 = vmatpush1.msra.mxu0 %v128
    %804 = vmatprep.subr.mxu0 0.0
    %805 = vmatpush1.msra.mxu0 %v127
    %806 = vmatprep.subr.mxu0 0.0
    %807 = vmatpush1.msra.mxu0 %v126
    %808 = vmatprep.subr.mxu0 0.0
    %809 = vmatpush1.msra.mxu0 %v125
    %810 = vmatprep.subr.mxu0 0.0
    %811 = vmatpush1.msra.mxu0 %v124
    %812 = vmatprep.subr.mxu0 0.0
    %813 = vmatpush2.msra.mxu0 %v155
    %814 = vmatprep.subr.mxu0 0.0
    %815 = vmatpush2.msra.mxu0 %v154
    %816 = vmatprep.subr.mxu0 0.0
    %817 = vmatpush2.msra.mxu0 %v153
    %818 = vmatprep.subr.mxu0 0.0
    %819 = vmatpush2.msra.mxu0 %v152
    %820 = vmatprep.subr.mxu0 0.0
    %821 = vmatpush2.msra.mxu0 %v151
    %822 = vmatprep.subr.mxu0 0.0
    %823 = vmatpush2.msra.mxu0 %v150
    %824 = vmatprep.subr.mxu0 0.0
    %825 = vmatpush2.msra.mxu0 %v149
    %826 = vmatprep.subr.mxu0 0.0
    %827 = vmatpush2.msra.mxu0 %v148
    %828 = vmatprep.subr.mxu0 0.0
    %829 = vmatpush2.msra.mxu0 %v147
    %830 = vmatprep.subr.mxu0 0.0
    %831 = vmatpush2.msra.mxu0 %v146
    %832 = vmatprep.subr.mxu0 0.0
    %833 = vmatpush2.msra.mxu0 %v145
    %834 = vmatprep.subr.mxu0 0.0
    %835 = vmatpush2.msra.mxu0 %v144
    %836 = vmatprep.subr.mxu0 0.0
    %837 = vmatpush2.msra.mxu0 %v143
    %838 = vmatprep.subr.mxu0 0.0
    %839 = vmatpush2.msra.mxu0 %v142
    %840 = vmatprep.subr.mxu0 0.0
    %841 = vmatpush2.msra.mxu0 %v141
    %842 = vmatprep.subr.mxu0 0.0
    %843 = vmatpush2.msra.mxu0 %v140
    %844 = vmatprep.mubr.f32.mxu0 %v467
    %845 = vmatmul.mubr.f32.gmra.mxu0 %v465
    %v846 = vpop.f32.mrf.mxu0
    %v847 = vadd.f32 %v777, %v846
    %v848 = vpop.f32.mrf.mxu0
    %849 = vdwg.mxu0
    %850 = vmatprep.subr.mxu0 0.0
    %851 = vmatpush1.msra.mxu0 %v171
    %852 = vmatprep.subr.mxu0 0.0
    %853 = vmatpush1.msra.mxu0 %v170
    %854 = vmatprep.subr.mxu0 0.0
    %855 = vmatpush1.msra.mxu0 %v169
    %856 = vmatprep.subr.mxu0 0.0
    %857 = vmatpush1.msra.mxu0 %v168
    %858 = vmatprep.subr.mxu0 0.0
    %859 = vmatpush1.msra.mxu0 %v167
    %860 = vmatprep.subr.mxu0 0.0
    %861 = vmatpush1.msra.mxu0 %v166
    %862 = vmatprep.subr.mxu0 0.0
    %863 = vmatpush1.msra.mxu0 %v165
    %864 = vmatprep.subr.mxu0 0.0
    %865 = vmatpush1.msra.mxu0 %v164
    %866 = vmatprep.subr.mxu0 0.0
    %867 = vmatpush1.msra.mxu0 %v163
    %868 = vmatprep.subr.mxu0 0.0
    %869 = vmatpush1.msra.mxu0 %v162
    %870 = vmatprep.subr.mxu0 0.0
    %871 = vmatpush1.msra.mxu0 %v161
    %872 = vmatprep.subr.mxu0 0.0
    %873 = vmatpush1.msra.mxu0 %v160
    %874 = vmatprep.subr.mxu0 0.0
    %875 = vmatpush1.msra.mxu0 %v159
    %876 = vmatprep.subr.mxu0 0.0
    %877 = vmatpush1.msra.mxu0 %v158
    %878 = vmatprep.subr.mxu0 0.0
    %879 = vmatpush1.msra.mxu0 %v157
    %880 = vmatprep.subr.mxu0 0.0
    %881 = vmatpush1.msra.mxu0 %v156
    %882 = vmatprep.subr.mxu0 0.0
    %883 = vmatpush2.msra.mxu0 %v187
    %884 = vmatprep.subr.mxu0 0.0
    %885 = vmatpush2.msra.mxu0 %v186
    %886 = vmatprep.subr.mxu0 0.0
    %887 = vmatpush2.msra.mxu0 %v185
    %888 = vmatprep.subr.mxu0 0.0
    %889 = vmatpush2.msra.mxu0 %v184
    %890 = vmatprep.subr.mxu0 0.0
    %891 = vmatpush2.msra.mxu0 %v183
    %892 = vmatprep.subr.mxu0 0.0
    %893 = vmatpush2.msra.mxu0 %v182
    %894 = vmatprep.subr.mxu0 0.0
    %895 = vmatpush2.msra.mxu0 %v181
    %896 = vmatprep.subr.mxu0 0.0
    %897 = vmatpush2.msra.mxu0 %v180
    %898 = vmatprep.subr.mxu0 0.0
    %899 = vmatpush2.msra.mxu0 %v179
    %900 = vmatprep.subr.mxu0 0.0
    %901 = vmatpush2.msra.mxu0 %v178
    %902 = vmatprep.subr.mxu0 0.0
    %903 = vmatpush2.msra.mxu0 %v177
    %904 = vmatprep.subr.mxu0 0.0
    %905 = vmatpush2.msra.mxu0 %v176
    %906 = vmatprep.subr.mxu0 0.0
    %907 = vmatpush2.msra.mxu0 %v175
    %908 = vmatprep.subr.mxu0 0.0
    %909 = vmatpush2.msra.mxu0 %v174
    %910 = vmatprep.subr.mxu0 0.0
    %911 = vmatpush2.msra.mxu0 %v173
    %912 = vmatprep.subr.mxu0 0.0
    %913 = vmatpush2.msra.mxu0 %v172
    %914 = vmatprep.mubr.f32.mxu0 %v483
    %915 = vmatmul.mubr.f32.gmra.mxu0 %v475
    %v916 = vpop.f32.mrf.mxu0
    %v917 = vadd.f32 %v847, %v916
    %v918 = vpop.f32.mrf.mxu0
    %919 = vdwg.mxu0
    %920 = vmatprep.subr.mxu0 0.0
    %921 = vmatpush1.msra.mxu0 %v203
    %922 = vmatprep.subr.mxu0 0.0
    %923 = vmatpush1.msra.mxu0 %v202
    %924 = vmatprep.subr.mxu0 0.0
    %925 = vmatpush1.msra.mxu0 %v201
    %926 = vmatprep.subr.mxu0 0.0
    %927 = vmatpush1.msra.mxu0 %v200
    %928 = vmatprep.subr.mxu0 0.0
    %929 = vmatpush1.msra.mxu0 %v199
    %930 = vmatprep.subr.mxu0 0.0
    %931 = vmatpush1.msra.mxu0 %v198
    %932 = vmatprep.subr.mxu0 0.0
    %933 = vmatpush1.msra.mxu0 %v197
    %934 = vmatprep.subr.mxu0 0.0
    %935 = vmatpush1.msra.mxu0 %v196
    %936 = vmatprep.subr.mxu0 0.0
    %937 = vmatpush1.msra.mxu0 %v195
    %938 = vmatprep.subr.mxu0 0.0
    %939 = vmatpush1.msra.mxu0 %v194
    %940 = vmatprep.subr.mxu0 0.0
    %941 = vmatpush1.msra.mxu0 %v193
    %942 = vmatprep.subr.mxu0 0.0
    %943 = vmatpush1.msra.mxu0 %v192
    %944 = vmatprep.subr.mxu0 0.0
    %945 = vmatpush1.msra.mxu0 %v191
    %946 = vmatprep.subr.mxu0 0.0
    %947 = vmatpush1.msra.mxu0 %v190
    %948 = vmatprep.subr.mxu0 0.0
    %949 = vmatpush1.msra.mxu0 %v189
    %950 = vmatprep.subr.mxu0 0.0
    %951 = vmatpush1.msra.mxu0 %v188
    %952 = vmatprep.subr.mxu0 0.0
    %953 = vmatpush2.msra.mxu0 %v219
    %954 = vmatprep.subr.mxu0 0.0
    %955 = vmatpush2.msra.mxu0 %v218
    %956 = vmatprep.subr.mxu0 0.0
    %957 = vmatpush2.msra.mxu0 %v217
    %958 = vmatprep.subr.mxu0 0.0
    %959 = vmatpush2.msra.mxu0 %v216
    %960 = vmatprep.subr.mxu0 0.0
    %961 = vmatpush2.msra.mxu0 %v215
    %962 = vmatprep.subr.mxu0 0.0
    %963 = vmatpush2.msra.mxu0 %v214
    %964 = vmatprep.subr.mxu0 0.0
    %965 = vmatpush2.msra.mxu0 %v213
    %966 = vmatprep.subr.mxu0 0.0
    %967 = vmatpush2.msra.mxu0 %v212
    %968 = vmatprep.subr.mxu0 0.0
    %969 = vmatpush2.msra.mxu0 %v211
    %970 = vmatprep.subr.mxu0 0.0
    %971 = vmatpush2.msra.mxu0 %v210
    %972 = vmatprep.subr.mxu0 0.0
    %973 = vmatpush2.msra.mxu0 %v209
    %974 = vmatprep.subr.mxu0 0.0
    %975 = vmatpush2.msra.mxu0 %v208
    %976 = vmatprep.subr.mxu0 0.0
    %977 = vmatpush2.msra.mxu0 %v207
    %978 = vmatprep.subr.mxu0 0.0
    %979 = vmatpush2.msra.mxu0 %v206
    %980 = vmatprep.subr.mxu0 0.0
    %981 = vmatpush2.msra.mxu0 %v205
    %982 = vmatprep.subr.mxu0 0.0
    %983 = vmatpush2.msra.mxu0 %v204
    %984 = vmatprep.mubr.f32.mxu0 %v484
    %985 = vmatmul.mubr.f32.gmra.mxu0 %v482
    %v986 = vpop.f32.mrf.mxu0
    %v987 = vadd.f32 %v917, %v986
    %v988 = vpop.f32.mrf.mxu0
    %989 = vdwg.mxu0
    %990 = vmatprep.subr.mxu0 0.0
    %991 = vmatpush1.msra.mxu0 %v235
    %992 = vmatprep.subr.mxu0 0.0
    %993 = vmatpush1.msra.mxu0 %v234
    %994 = vmatprep.subr.mxu0 0.0
    %995 = vmatpush1.msra.mxu0 %v233
    %996 = vmatprep.subr.mxu0 0.0
    %997 = vmatpush1.msra.mxu0 %v232
    %998 = vmatprep.subr.mxu0 0.0
    %999 = vmatpush1.msra.mxu0 %v231
    %1000 = vmatprep.subr.mxu0 0.0
    %1001 = vmatpush1.msra.mxu0 %v230
    %1002 = vmatprep.subr.mxu0 0.0
    %1003 = vmatpush1.msra.mxu0 %v229
    %1004 = vmatprep.subr.mxu0 0.0
    %1005 = vmatpush1.msra.mxu0 %v228
    %1006 = vmatprep.subr.mxu0 0.0
    %1007 = vmatpush1.msra.mxu0 %v227
    %1008 = vmatprep.subr.mxu0 0.0
    %1009 = vmatpush1.msra.mxu0 %v226
    %1010 = vmatprep.subr.mxu0 0.0
    %1011 = vmatpush1.msra.mxu0 %v225
    %1012 = vmatprep.subr.mxu0 0.0
    %1013 = vmatpush1.msra.mxu0 %v224
    %1014 = vmatprep.subr.mxu0 0.0
    %1015 = vmatpush1.msra.mxu0 %v223
    %1016 = vmatprep.subr.mxu0 0.0
    %1017 = vmatpush1.msra.mxu0 %v222
    %1018 = vmatprep.subr.mxu0 0.0
    %1019 = vmatpush1.msra.mxu0 %v221
    %1020 = vmatprep.subr.mxu0 0.0
    %1021 = vmatpush1.msra.mxu0 %v220
    %1022 = vmatprep.subr.mxu0 0.0
    %1023 = vmatpush2.msra.mxu0 %v251
    %1024 = vmatprep.subr.mxu0 0.0
    %1025 = vmatpush2.msra.mxu0 %v250
    %1026 = vmatprep.subr.mxu0 0.0
    %1027 = vmatpush2.msra.mxu0 %v249
    %1028 = vmatprep.subr.mxu0 0.0
    %1029 = vmatpush2.msra.mxu0 %v248
    %1030 = vmatprep.subr.mxu0 0.0
    %1031 = vmatpush2.msra.mxu0 %v247
    %1032 = vmatprep.subr.mxu0 0.0
    %1033 = vmatpush2.msra.mxu0 %v246
    %1034 = vmatprep.subr.mxu0 0.0
    %1035 = vmatpush2.msra.mxu0 %v245
    %1036 = vmatprep.subr.mxu0 0.0
    %1037 = vmatpush2.msra.mxu0 %v244
    %1038 = vmatprep.subr.mxu0 0.0
    %1039 = vmatpush2.msra.mxu0 %v243
    %1040 = vmatprep.subr.mxu0 0.0
    %1041 = vmatpush2.msra.mxu0 %v242
    %1042 = vmatprep.subr.mxu0 0.0
    %1043 = vmatpush2.msra.mxu0 %v241
    %1044 = vmatprep.subr.mxu0 0.0
    %1045 = vmatpush2.msra.mxu0 %v240
    %1046 = vmatprep.subr.mxu0 0.0
    %1047 = vmatpush2.msra.mxu0 %v239
    %1048 = vmatprep.subr.mxu0 0.0
    %1049 = vmatpush2.msra.mxu0 %v238
    %1050 = vmatprep.subr.mxu0 0.0
    %1051 = vmatpush2.msra.mxu0 %v237
    %1052 = vmatprep.subr.mxu0 0.0
    %1053 = vmatpush2.msra.mxu0 %v236
    %1054 = vmatprep.mubr.f32.mxu0 %v500
    %1055 = vmatmul.mubr.f32.gmra.mxu0 %v492
    %v1056 = vpop.f32.mrf.mxu0
    %v1057 = vadd.f32 %v987, %v1056
    %v1058 = vpop.f32.mrf.mxu0
    %1059 = vdwg.mxu0
    %1060 = vmatprep.subr.mxu0 0.0
    %1061 = vmatpush1.msra.mxu0 %v267
    %1062 = vmatprep.subr.mxu0 0.0
    %1063 = vmatpush1.msra.mxu0 %v266
    %1064 = vmatprep.subr.mxu0 0.0
    %1065 = vmatpush1.msra.mxu0 %v265
    %1066 = vmatprep.subr.mxu0 0.0
    %1067 = vmatpush1.msra.mxu0 %v264
    %1068 = vmatprep.subr.mxu0 0.0
    %1069 = vmatpush1.msra.mxu0 %v263
    %1070 = vmatprep.subr.mxu0 0.0
    %1071 = vmatpush1.msra.mxu0 %v262
    %1072 = vmatprep.subr.mxu0 0.0
    %1073 = vmatpush1.msra.mxu0 %v261
    %1074 = vmatprep.subr.mxu0 0.0
    %1075 = vmatpush1.msra.mxu0 %v260
    %1076 = vmatprep.subr.mxu0 0.0
    %1077 = vmatpush1.msra.mxu0 %v259
    %1078 = vmatprep.subr.mxu0 0.0
    %1079 = vmatpush1.msra.mxu0 %v258
    %1080 = vmatprep.subr.mxu0 0.0
    %1081 = vmatpush1.msra.mxu0 %v257
    %1082 = vmatprep.subr.mxu0 0.0
    %1083 = vmatpush1.msra.mxu0 %v256
    %1084 = vmatprep.subr.mxu0 0.0
    %1085 = vmatpush1.msra.mxu0 %v255
    %1086 = vmatprep.subr.mxu0 0.0
    %1087 = vmatpush1.msra.mxu0 %v254
    %1088 = vmatprep.subr.mxu0 0.0
    %1089 = vmatpush1.msra.mxu0 %v253
    %1090 = vmatprep.subr.mxu0 0.0
    %1091 = vmatpush1.msra.mxu0 %v252
    %1092 = vmatprep.subr.mxu0 0.0
    %1093 = vmatpush2.msra.mxu0 %v283
    %1094 = vmatprep.subr.mxu0 0.0
    %1095 = vmatpush2.msra.mxu0 %v282
    %1096 = vmatprep.subr.mxu0 0.0
    %1097 = vmatpush2.msra.mxu0 %v281
    %1098 = vmatprep.subr.mxu0 0.0
    %1099 = vmatpush2.msra.mxu0 %v280
    %1100 = vmatprep.subr.mxu0 0.0
    %1101 = vmatpush2.msra.mxu0 %v279
    %1102 = vmatprep.subr.mxu0 0.0
    %1103 = vmatpush2.msra.mxu0 %v278
    %1104 = vmatprep.subr.mxu0 0.0
    %1105 = vmatpush2.msra.mxu0 %v277
    %1106 = vmatprep.subr.mxu0 0.0
    %1107 = vmatpush2.msra.mxu0 %v276
    %1108 = vmatprep.subr.mxu0 0.0
    %1109 = vmatpush2.msra.mxu0 %v275
    %1110 = vmatprep.subr.mxu0 0.0
    %1111 = vmatpush2.msra.mxu0 %v274
    %1112 = vmatprep.subr.mxu0 0.0
    %1113 = vmatpush2.msra.mxu0 %v273
    %1114 = vmatprep.subr.mxu0 0.0
    %1115 = vmatpush2.msra.mxu0 %v272
    %1116 = vmatprep.subr.mxu0 0.0
    %1117 = vmatpush2.msra.mxu0 %v271
    %1118 = vmatprep.subr.mxu0 0.0
    %1119 = vmatpush2.msra.mxu0 %v270
    %1120 = vmatprep.subr.mxu0 0.0
    %1121 = vmatpush2.msra.mxu0 %v269
    %1122 = vmatprep.subr.mxu0 0.0
    %1123 = vmatpush2.msra.mxu0 %v268
    %1124 = vmatprep.mubr.f32.mxu0 %v501
    %1125 = vmatmul.mubr.f32.gmra.mxu0 %v499
    %v1126 = vpop.f32.mrf.mxu0
    %v1127 = vadd.f32 %v1057, %v1126
    %v1128 = vpop.f32.mrf.mxu0
    %1129 = vdwg.mxu0
    %1130 = vmatprep.subr.mxu0 0.0
    %1131 = vmatpush1.msra.mxu0 %v299
    %1132 = vmatprep.subr.mxu0 0.0
    %1133 = vmatpush1.msra.mxu0 %v298
    %1134 = vmatprep.subr.mxu0 0.0
    %1135 = vmatpush1.msra.mxu0 %v297
    %1136 = vmatprep.subr.mxu0 0.0
    %1137 = vmatpush1.msra.mxu0 %v296
    %1138 = vmatprep.subr.mxu0 0.0
    %1139 = vmatpush1.msra.mxu0 %v295
    %1140 = vmatprep.subr.mxu0 0.0
    %1141 = vmatpush1.msra.mxu0 %v294
    %1142 = vmatprep.subr.mxu0 0.0
    %1143 = vmatpush1.msra.mxu0 %v293
    %1144 = vmatprep.subr.mxu0 0.0
    %1145 = vmatpush1.msra.mxu0 %v292
    %1146 = vmatprep.subr.mxu0 0.0
    %1147 = vmatpush1.msra.mxu0 %v291
    %1148 = vmatprep.subr.mxu0 0.0
    %1149 = vmatpush1.msra.mxu0 %v290
    %1150 = vmatprep.subr.mxu0 0.0
    %1151 = vmatpush1.msra.mxu0 %v289
    %1152 = vmatprep.subr.mxu0 0.0
    %1153 = vmatpush1.msra.mxu0 %v288
    %1154 = vmatprep.subr.mxu0 0.0
    %1155 = vmatpush1.msra.mxu0 %v287
    %1156 = vmatprep.subr.mxu0 0.0
    %1157 = vmatpush1.msra.mxu0 %v286
    %1158 = vmatprep.subr.mxu0 0.0
    %1159 = vmatpush1.msra.mxu0 %v285
    %1160 = vmatprep.subr.mxu0 0.0
    %1161 = vmatpush1.msra.mxu0 %v284
    %1162 = vmatprep.subr.mxu0 0.0
    %1163 = vmatpush2.msra.mxu0 %v315
    %1164 = vmatprep.subr.mxu0 0.0
    %1165 = vmatpush2.msra.mxu0 %v314
    %1166 = vmatprep.subr.mxu0 0.0
    %1167 = vmatpush2.msra.mxu0 %v313
    %1168 = vmatprep.subr.mxu0 0.0
    %1169 = vmatpush2.msra.mxu0 %v312
    %1170 = vmatprep.subr.mxu0 0.0
    %1171 = vmatpush2.msra.mxu0 %v311
    %1172 = vmatprep.subr.mxu0 0.0
    %1173 = vmatpush2.msra.mxu0 %v310
    %1174 = vmatprep.subr.mxu0 0.0
    %1175 = vmatpush2.msra.mxu0 %v309
    %1176 = vmatprep.subr.mxu0 0.0
    %1177 = vmatpush2.msra.mxu0 %v308
    %1178 = vmatprep.subr.mxu0 0.0
    %1179 = vmatpush2.msra.mxu0 %v307
    %1180 = vmatprep.subr.mxu0 0.0
    %1181 = vmatpush2.msra.mxu0 %v306
    %1182 = vmatprep.subr.mxu0 0.0
    %1183 = vmatpush2.msra.mxu0 %v305
    %1184 = vmatprep.subr.mxu0 0.0
    %1185 = vmatpush2.msra.mxu0 %v304
    %1186 = vmatprep.subr.mxu0 0.0
    %1187 = vmatpush2.msra.mxu0 %v303
    %1188 = vmatprep.subr.mxu0 0.0
    %1189 = vmatpush2.msra.mxu0 %v302
    %1190 = vmatprep.subr.mxu0 0.0
    %1191 = vmatpush2.msra.mxu0 %v301
    %1192 = vmatprep.subr.mxu0 0.0
    %1193 = vmatpush2.msra.mxu0 %v300
    %1194 = vmatprep.mubr.f32.mxu0 %v517
    %1195 = vmatmul.mubr.f32.gmra.mxu0 %v509
    %v1196 = vpop.f32.mrf.mxu0
    %v1197 = vadd.f32 %v1127, %v1196
    %v1198 = vpop.f32.mrf.mxu0
    %1199 = vdwg.mxu0
    %1200 = vmatprep.subr.mxu0 0.0
    %1201 = vmatpush1.msra.mxu0 %v331
    %1202 = vmatprep.subr.mxu0 0.0
    %1203 = vmatpush1.msra.mxu0 %v330
    %1204 = vmatprep.subr.mxu0 0.0
    %1205 = vmatpush1.msra.mxu0 %v329
    %1206 = vmatprep.subr.mxu0 0.0
    %1207 = vmatpush1.msra.mxu0 %v328
    %1208 = vmatprep.subr.mxu0 0.0
    %1209 = vmatpush1.msra.mxu0 %v327
    %1210 = vmatprep.subr.mxu0 0.0
    %1211 = vmatpush1.msra.mxu0 %v326
    %1212 = vmatprep.subr.mxu0 0.0
    %1213 = vmatpush1.msra.mxu0 %v325
    %1214 = vmatprep.subr.mxu0 0.0
    %1215 = vmatpush1.msra.mxu0 %v324
    %1216 = vmatprep.subr.mxu0 0.0
    %1217 = vmatpush1.msra.mxu0 %v323
    %1218 = vmatprep.subr.mxu0 0.0
    %1219 = vmatpush1.msra.mxu0 %v322
    %1220 = vmatprep.subr.mxu0 0.0
    %1221 = vmatpush1.msra.mxu0 %v321
    %1222 = vmatprep.subr.mxu0 0.0
    %1223 = vmatpush1.msra.mxu0 %v320
    %1224 = vmatprep.subr.mxu0 0.0
    %1225 = vmatpush1.msra.mxu0 %v319
    %1226 = vmatprep.subr.mxu0 0.0
    %1227 = vmatpush1.msra.mxu0 %v318
    %1228 = vmatprep.subr.mxu0 0.0
    %1229 = vmatpush1.msra.mxu0 %v317
    %1230 = vmatprep.subr.mxu0 0.0
    %1231 = vmatpush1.msra.mxu0 %v316
    %1232 = vmatprep.subr.mxu0 0.0
    %1233 = vmatpush2.msra.mxu0 %v347
    %1234 = vmatprep.subr.mxu0 0.0
    %1235 = vmatpush2.msra.mxu0 %v346
    %1236 = vmatprep.subr.mxu0 0.0
    %1237 = vmatpush2.msra.mxu0 %v345
    %1238 = vmatprep.subr.mxu0 0.0
    %1239 = vmatpush2.msra.mxu0 %v344
    %1240 = vmatprep.subr.mxu0 0.0
    %1241 = vmatpush2.msra.mxu0 %v343
    %1242 = vmatprep.subr.mxu0 0.0
    %1243 = vmatpush2.msra.mxu0 %v342
    %1244 = vmatprep.subr.mxu0 0.0
    %1245 = vmatpush2.msra.mxu0 %v341
    %1246 = vmatprep.subr.mxu0 0.0
    %1247 = vmatpush2.msra.mxu0 %v340
    %1248 = vmatprep.subr.mxu0 0.0
    %1249 = vmatpush2.msra.mxu0 %v339
    %1250 = vmatprep.subr.mxu0 0.0
    %1251 = vmatpush2.msra.mxu0 %v338
    %1252 = vmatprep.subr.mxu0 0.0
    %1253 = vmatpush2.msra.mxu0 %v337
    %1254 = vmatprep.subr.mxu0 0.0
    %1255 = vmatpush2.msra.mxu0 %v336
    %1256 = vmatprep.subr.mxu0 0.0
    %1257 = vmatpush2.msra.mxu0 %v335
    %1258 = vmatprep.subr.mxu0 0.0
    %1259 = vmatpush2.msra.mxu0 %v334
    %1260 = vmatprep.subr.mxu0 0.0
    %1261 = vmatpush2.msra.mxu0 %v333
    %1262 = vmatprep.subr.mxu0 0.0
    %1263 = vmatpush2.msra.mxu0 %v332
    %1264 = vmatprep.mubr.f32.mxu0 %v518
    %1265 = vmatmul.mubr.f32.gmra.mxu0 %v516
    %v1266 = vpop.f32.mrf.mxu0
    %v1267 = vadd.f32 %v1197, %v1266
    %v1268 = vpop.f32.mrf.mxu0
    %1269 = vdwg.mxu0
    %1270 = vmatprep.subr.mxu0 0.0
    %1271 = vmatpush1.msra.mxu0 %v363
    %1272 = vmatprep.subr.mxu0 0.0
    %1273 = vmatpush1.msra.mxu0 %v362
    %1274 = vmatprep.subr.mxu0 0.0
    %1275 = vmatpush1.msra.mxu0 %v361
    %1276 = vmatprep.subr.mxu0 0.0
    %1277 = vmatpush1.msra.mxu0 %v360
    %1278 = vmatprep.subr.mxu0 0.0
    %1279 = vmatpush1.msra.mxu0 %v359
    %1280 = vmatprep.subr.mxu0 0.0
    %1281 = vmatpush1.msra.mxu0 %v358
    %1282 = vmatprep.subr.mxu0 0.0
    %1283 = vmatpush1.msra.mxu0 %v357
    %1284 = vmatprep.subr.mxu0 0.0
    %1285 = vmatpush1.msra.mxu0 %v356
    %1286 = vmatprep.subr.mxu0 0.0
    %1287 = vmatpush1.msra.mxu0 %v355
    %1288 = vmatprep.subr.mxu0 0.0
    %1289 = vmatpush1.msra.mxu0 %v354
    %1290 = vmatprep.subr.mxu0 0.0
    %1291 = vmatpush1.msra.mxu0 %v353
    %1292 = vmatprep.subr.mxu0 0.0
    %1293 = vmatpush1.msra.mxu0 %v352
    %1294 = vmatprep.subr.mxu0 0.0
    %1295 = vmatpush1.msra.mxu0 %v351
    %1296 = vmatprep.subr.mxu0 0.0
    %1297 = vmatpush1.msra.mxu0 %v350
    %1298 = vmatprep.subr.mxu0 0.0
    %1299 = vmatpush1.msra.mxu0 %v349
    %1300 = vmatprep.subr.mxu0 0.0
    %1301 = vmatpush1.msra.mxu0 %v348
    %1302 = vmatprep.subr.mxu0 0.0
    %1303 = vmatpush2.msra.mxu0 %v379
    %1304 = vmatprep.subr.mxu0 0.0
    %1305 = vmatpush2.msra.mxu0 %v378
    %1306 = vmatprep.subr.mxu0 0.0
    %1307 = vmatpush2.msra.mxu0 %v377
    %1308 = vmatprep.subr.mxu0 0.0
    %1309 = vmatpush2.msra.mxu0 %v376
    %1310 = vmatprep.subr.mxu0 0.0
    %1311 = vmatpush2.msra.mxu0 %v375
    %1312 = vmatprep.subr.mxu0 0.0
    %1313 = vmatpush2.msra.mxu0 %v374
    %1314 = vmatprep.subr.mxu0 0.0
    %1315 = vmatpush2.msra.mxu0 %v373
    %1316 = vmatprep.subr.mxu0 0.0
    %1317 = vmatpush2.msra.mxu0 %v372
    %1318 = vmatprep.subr.mxu0 0.0
    %1319 = vmatpush2.msra.mxu0 %v371
    %1320 = vmatprep.subr.mxu0 0.0
    %1321 = vmatpush2.msra.mxu0 %v370
    %1322 = vmatprep.subr.mxu0 0.0
    %1323 = vmatpush2.msra.mxu0 %v369
    %1324 = vmatprep.subr.mxu0 0.0
    %1325 = vmatpush2.msra.mxu0 %v368
    %1326 = vmatprep.subr.mxu0 0.0
    %1327 = vmatpush2.msra.mxu0 %v367
    %1328 = vmatprep.subr.mxu0 0.0
    %1329 = vmatpush2.msra.mxu0 %v366
    %1330 = vmatprep.subr.mxu0 0.0
    %1331 = vmatpush2.msra.mxu0 %v365
    %1332 = vmatprep.subr.mxu0 0.0
    %1333 = vmatpush2.msra.mxu0 %v364
    %1334 = vmatprep.mubr.f32.mxu0 %v534
    %1335 = vmatmul.mubr.f32.gmra.mxu0 %v526
    %v1336 = vpop.f32.mrf.mxu0
    %v1337 = vadd.f32 %v1267, %v1336
    %v1338 = vpop.f32.mrf.mxu0
    %1339 = vdwg.mxu0
    %1340 = vmatprep.subr.mxu0 0.0
    %1341 = vmatpush1.msra.mxu0 %v395
    %1342 = vmatprep.subr.mxu0 0.0
    %1343 = vmatpush1.msra.mxu0 %v394
    %1344 = vmatprep.subr.mxu0 0.0
    %1345 = vmatpush1.msra.mxu0 %v393
    %1346 = vmatprep.subr.mxu0 0.0
    %1347 = vmatpush1.msra.mxu0 %v392
    %1348 = vmatprep.subr.mxu0 0.0
    %1349 = vmatpush1.msra.mxu0 %v391
    %1350 = vmatprep.subr.mxu0 0.0
    %1351 = vmatpush1.msra.mxu0 %v390
    %1352 = vmatprep.subr.mxu0 0.0
    %1353 = vmatpush1.msra.mxu0 %v389
    %1354 = vmatprep.subr.mxu0 0.0
    %1355 = vmatpush1.msra.mxu0 %v388
    %1356 = vmatprep.subr.mxu0 0.0
    %1357 = vmatpush1.msra.mxu0 %v387
    %1358 = vmatprep.subr.mxu0 0.0
    %1359 = vmatpush1.msra.mxu0 %v386
    %1360 = vmatprep.subr.mxu0 0.0
    %1361 = vmatpush1.msra.mxu0 %v385
    %1362 = vmatprep.subr.mxu0 0.0
    %1363 = vmatpush1.msra.mxu0 %v384
    %1364 = vmatprep.subr.mxu0 0.0
    %1365 = vmatpush1.msra.mxu0 %v383
    %1366 = vmatprep.subr.mxu0 0.0
    %1367 = vmatpush1.msra.mxu0 %v382
    %1368 = vmatprep.subr.mxu0 0.0
    %1369 = vmatpush1.msra.mxu0 %v381
    %1370 = vmatprep.subr.mxu0 0.0
    %1371 = vmatpush1.msra.mxu0 %v380
    %1372 = vmatprep.subr.mxu0 0.0
    %1373 = vmatpush2.msra.mxu0 %v411
    %1374 = vmatprep.subr.mxu0 0.0
    %1375 = vmatpush2.msra.mxu0 %v410
    %1376 = vmatprep.subr.mxu0 0.0
    %1377 = vmatpush2.msra.mxu0 %v409
    %1378 = vmatprep.subr.mxu0 0.0
    %1379 = vmatpush2.msra.mxu0 %v408
    %1380 = vmatprep.subr.mxu0 0.0
    %1381 = vmatpush2.msra.mxu0 %v407
    %1382 = vmatprep.subr.mxu0 0.0
    %1383 = vmatpush2.msra.mxu0 %v406
    %1384 = vmatprep.subr.mxu0 0.0
    %1385 = vmatpush2.msra.mxu0 %v405
    %1386 = vmatprep.subr.mxu0 0.0
    %1387 = vmatpush2.msra.mxu0 %v404
    %1388 = vmatprep.subr.mxu0 0.0
    %1389 = vmatpush2.msra.mxu0 %v403
    %1390 = vmatprep.subr.mxu0 0.0
    %1391 = vmatpush2.msra.mxu0 %v402
    %1392 = vmatprep.subr.mxu0 0.0
    %1393 = vmatpush2.msra.mxu0 %v401
    %1394 = vmatprep.subr.mxu0 0.0
    %1395 = vmatpush2.msra.mxu0 %v400
    %1396 = vmatprep.subr.mxu0 0.0
    %1397 = vmatpush2.msra.mxu0 %v399
    %1398 = vmatprep.subr.mxu0 0.0
    %1399 = vmatpush2.msra.mxu0 %v398
    %1400 = vmatprep.subr.mxu0 0.0
    %1401 = vmatpush2.msra.mxu0 %v397
    %1402 = vmatprep.subr.mxu0 0.0
    %1403 = vmatpush2.msra.mxu0 %v396
    %1404 = vmatprep.mubr.f32.mxu0 %v535
    %1405 = vmatmul.mubr.f32.gmra.mxu0 %v533
    %v1406 = vpop.f32.mrf.mxu0
    %v1407 = vadd.f32 %v1337, %v1406
    %v1408 = vpop.f32.mrf.mxu0
    %1409 = vdwg.mxu0
    %1410 = vmatprep.subr.mxu0 0.0
    %1411 = vmatpush1.msra.mxu0 0.0
    %1412 = vmatprep.subr.mxu0 0.0
    %1413 = vmatpush1.msra.mxu0 0.0
    %1414 = vmatprep.subr.mxu0 0.0
    %1415 = vmatpush1.msra.mxu0 0.0
    %1416 = vmatprep.subr.mxu0 0.0
    %1417 = vmatpush1.msra.mxu0 0.0
    %1418 = vmatprep.subr.mxu0 0.0
    %1419 = vmatpush1.msra.mxu0 0.0
    %1420 = vmatprep.subr.mxu0 0.0
    %1421 = vmatpush1.msra.mxu0 0.0
    %1422 = vmatprep.subr.mxu0 0.0
    %1423 = vmatpush1.msra.mxu0 0.0
    %1424 = vmatprep.subr.mxu0 0.0
    %1425 = vmatpush1.msra.mxu0 0.0
    %1426 = vmatprep.subr.mxu0 0.0
    %1427 = vmatpush1.msra.mxu0 %v419
    %1428 = vmatprep.subr.mxu0 0.0
    %1429 = vmatpush1.msra.mxu0 %v418
    %1430 = vmatprep.subr.mxu0 0.0
    %1431 = vmatpush1.msra.mxu0 %v417
    %1432 = vmatprep.subr.mxu0 0.0
    %1433 = vmatpush1.msra.mxu0 %v416
    %1434 = vmatprep.subr.mxu0 0.0
    %1435 = vmatpush1.msra.mxu0 %v415
    %1436 = vmatprep.subr.mxu0 0.0
    %1437 = vmatpush1.msra.mxu0 %v414
    %1438 = vmatprep.subr.mxu0 0.0
    %1439 = vmatpush1.msra.mxu0 %v413
    %1440 = vmatprep.subr.mxu0 0.0
    %1441 = vmatpush1.msra.mxu0 %v412
    %1442 = vmatprep.subr.mxu0 0.0
    %1443 = vmatpush2.msra.mxu0 0.0
    %1444 = vmatprep.subr.mxu0 0.0
    %1445 = vmatpush2.msra.mxu0 0.0
    %1446 = vmatprep.subr.mxu0 0.0
    %1447 = vmatpush2.msra.mxu0 0.0
    %1448 = vmatprep.subr.mxu0 0.0
    %1449 = vmatpush2.msra.mxu0 0.0
    %1450 = vmatprep.subr.mxu0 0.0
    %1451 = vmatpush2.msra.mxu0 0.0
    %1452 = vmatprep.subr.mxu0 0.0
    %1453 = vmatpush2.msra.mxu0 0.0
    %1454 = vmatprep.subr.mxu0 0.0
    %1455 = vmatpush2.msra.mxu0 0.0
    %1456 = vmatprep.subr.mxu0 0.0
    %1457 = vmatpush2.msra.mxu0 0.0
    %1458 = vmatprep.subr.mxu0 0.0
    %1459 = vmatpush2.msra.mxu0 0.0
    %1460 = vmatprep.subr.mxu0 0.0
    %1461 = vmatpush2.msra.mxu0 0.0
    %1462 = vmatprep.subr.mxu0 0.0
    %1463 = vmatpush2.msra.mxu0 0.0
    %1464 = vmatprep.subr.mxu0 0.0
    %1465 = vmatpush2.msra.mxu0 0.0
    %1466 = vmatprep.subr.mxu0 0.0
    %1467 = vmatpush2.msra.mxu0 0.0
    %1468 = vmatprep.subr.mxu0 0.0
    %1469 = vmatpush2.msra.mxu0 0.0
    %1470 = vmatprep.subr.mxu0 0.0
    %1471 = vmatpush2.msra.mxu0 0.0
    %1472 = vmatprep.subr.mxu0 0.0
    %1473 = vmatpush2.msra.mxu0 0.0
    %1474 = vmatprep.mubr.f32.mxu0 0.0
    %1475 = vmatmul.mubr.f32.gmra.mxu0 %v568
    %v1476 = vpop.f32.mrf.mxu0
    %v1477 = vadd.f32 %v1407, %v1476
    %v1478 = vpop.f32.mrf.mxu0
    %1479 = vdwg.mxu0
    %v1480 = vmax.f32 %v1477, 0.0
    %v1481 = vld [vmem:[%s3] sm:$0xff]
    %v1482 = vld [vmem:[%s3 + $0x8] sm:$0xff]
    %v1483 = vld [vmem:[%s3 + $0x10] sm:$0xff]
    %v1484 = vld [vmem:[%s3 + $0x18] sm:$0xff]
    %v1485 = vld [vmem:[%s3 + $0x20] sm:$0xff]
    %v1486 = vld [vmem:[%s3 + $0x28] sm:$0xff]
    %v1487 = vld [vmem:[%s3 + $0x30] sm:$0xff]
    %v1488 = vld [vmem:[%s3 + $0x38] sm:$0xff]
    %v1489 = vld [vmem:[%s3 + $0x40] sm:$0xff]
    %v1490 = vld [vmem:[%s3 + $0x48] sm:$0xff]
    %v1491 = vld [vmem:[%s3 + $0x50] sm:$0xff]
    %v1492 = vld [vmem:[%s3 + $0x58] sm:$0xff]
    %v1493 = vld [vmem:[%s3 + $0x60] sm:$0xff]
    %v1494 = vld [vmem:[%s3 + $0x68] sm:$0xff]
    %v1495 = vld [vmem:[%s3 + $0x70] sm:$0xff]
    %v1496 = vld [vmem:[%s3 + $0x78] sm:$0xff]
    %v1497 = vld [vmem:[%s4] sm:$0x1]
    %v1499 = vlaneseq
    %v1500 = vshrl.u32 %v1499, 7
    %v1501 = vsub.s32 0, %v1500
    %v1502 = vrot.slane %v1497, %v1501
    %1504 = vmatprep.subr.mxu0 0.0
    %1505 = vmatpush1.msra.mxu0 %v1496
    %1506 = vmatprep.subr.mxu0 0.0
    %1507 = vmatpush1.msra.mxu0 %v1495
    %1508 = vmatprep.subr.mxu0 0.0
    %1509 = vmatpush1.msra.mxu0 %v1494
    %1510 = vmatprep.subr.mxu0 0.0
    %1511 = vmatpush1.msra.mxu0 %v1493
    %1512 = vmatprep.subr.mxu0 0.0
    %1513 = vmatpush1.msra.mxu0 %v1492
    %1514 = vmatprep.subr.mxu0 0.0
    %1515 = vmatpush1.msra.mxu0 %v1491
    %1516 = vmatprep.subr.mxu0 0.0
    %1517 = vmatpush1.msra.mxu0 %v1490
    %1518 = vmatprep.subr.mxu0 0.0
    %1519 = vmatpush1.msra.mxu0 %v1489
    %1520 = vmatprep.subr.mxu0 0.0
    %1521 = vmatpush1.msra.mxu0 %v1488
    %1522 = vmatprep.subr.mxu0 0.0
    %1523 = vmatpush1.msra.mxu0 %v1487
    %1524 = vmatprep.subr.mxu0 0.0
    %1525 = vmatpush1.msra.mxu0 %v1486
    %1526 = vmatprep.subr.mxu0 0.0
    %1527 = vmatpush1.msra.mxu0 %v1485
    %1528 = vmatprep.subr.mxu0 0.0
    %1529 = vmatpush1.msra.mxu0 %v1484
    %1530 = vmatprep.subr.mxu0 0.0
    %1531 = vmatpush1.msra.mxu0 %v1483
    %1532 = vmatprep.subr.mxu0 0.0
    %1533 = vmatpush1.msra.mxu0 %v1482
    %1534 = vmatprep.subr.mxu0 0.0
    %1535 = vmatpush1.msra.mxu0 %v1481
    %1536 = vmatprep.subr.mxu0 0.0
    %1537 = vmatpush2.msra.mxu0 0.0
    %1538 = vmatprep.subr.mxu0 0.0
    %1539 = vmatpush2.msra.mxu0 0.0
    %1540 = vmatprep.subr.mxu0 0.0
    %1541 = vmatpush2.msra.mxu0 0.0
    %1542 = vmatprep.subr.mxu0 0.0
    %1543 = vmatpush2.msra.mxu0 0.0
    %1544 = vmatprep.subr.mxu0 0.0
    %1545 = vmatpush2.msra.mxu0 0.0
    %1546 = vmatprep.subr.mxu0 0.0
    %1547 = vmatpush2.msra.mxu0 0.0
    %1548 = vmatprep.subr.mxu0 0.0
    %1549 = vmatpush2.msra.mxu0 0.0
    %1550 = vmatprep.subr.mxu0 0.0
    %1551 = vmatpush2.msra.mxu0 0.0
    %1552 = vmatprep.subr.mxu0 0.0
    %1553 = vmatpush2.msra.mxu0 0.0
    %1554 = vmatprep.subr.mxu0 0.0
    %1555 = vmatpush2.msra.mxu0 0.0
    %1556 = vmatprep.subr.mxu0 0.0
    %1557 = vmatpush2.msra.mxu0 0.0
    %1558 = vmatprep.subr.mxu0 0.0
    %1559 = vmatpush2.msra.mxu0 0.0
    %1560 = vmatprep.subr.mxu0 0.0
    %1561 = vmatpush2.msra.mxu0 0.0
    %1562 = vmatprep.subr.mxu0 0.0
    %1563 = vmatpush2.msra.mxu0 0.0
    %1564 = vmatprep.subr.mxu0 0.0
    %1565 = vmatpush2.msra.mxu0 0.0
    %1566 = vmatprep.subr.mxu0 0.0
    %1567 = vmatpush2.msra.mxu0 0.0
    %1568 = vmatprep.mubr.f32.mxu0 0.0
    %1569 = vmatmul.mubr.f32.gmra.mxu0 %v1480
    %v1570 = vpop.f32.mrf.mxu0
    %v1571 = vadd.f32 %v1502, %v1570
    %v1572 = vpop.f32.mrf.mxu0
    %1573 = vdwg.mxu0
    %1574 = vst [vmem:[#allocation2] sm:$0x3] %v1571
    // Predicated region
    $region22: #{mnist_classifier_forward.5} parent=1 // pred_check
      _
    $region23: #{mnist_classifier_forward.5} parent=1 // pred_check_branch
      %1576 = sbr.rel (0) target = $region25
    $region24: #{mnist_classifier_forward.5} parent=1 // pred_region
      %s1578 = ssub.s32 32, 32
      %1579 = vsyncadd [#allocation3], %s1578
      %s1581 = sshll.u32 [#allocation2], 4
      %s1582 = int_to_ptr.vmem [resolvable:$true] %s1581
      %1584 = dma.vmem_to_hbm [thread:$0]  %s1582, 32, %s5, [#allocation3]
    $region25: #{mnist_classifier_forward.5} parent=1 // pred_fallthru
      _
    // Predicated region
    $region26: #{mnist_classifier_forward.5} parent=1 // pred_check
      _
    $region27: #{mnist_classifier_forward.5} parent=1 // pred_check_branch
      %1586 = sbr.rel (0) target = $region29
    $region28: #{mnist_classifier_forward.5} parent=1 // pred_region
      %1587 = dma.done [#allocation3], 32
    $region29: #{mnist_classifier_forward.5} parent=1 // pred_fallthru
      _
    %1588 = vsyncpa [#allocation3], 1

</llo_original>
